<compile_context>
chip_gen: v6e
topology: v6e:2x2x1
jax: 0.10.0
libtpu: 0.0.40
codegen_flags: <defaults>
</compile_context>

<pallas_src>
import functools
import math

import jax
import jax.numpy as jnp
import numpy as np
from jax.experimental import pallas as pl
from jax.experimental.pallas import tpu as pltpu


# ---------------------------------------------------------------------------
# Pallas kernel: fused  out = relu( conv(x, W) * scale + bias )
# conv is computed as KH*KW accumulated (th*Wo, Cin) @ (Cin, Cout_p) dots.
# ---------------------------------------------------------------------------
def _make_conv_bn_relu_kernel(kh, kw, stride, dilation, th, wo):
    def kernel(x_ref, w_ref, s_ref, b_ref, o_ref):
        # x_ref: (Hp, Wp, Cin)        bf16 -- whole padded image (one batch elem)
        # w_ref: (KH*KW, Cin, Cout_p) bf16 -- per-tap weight matrices
        # s_ref: (1, Cout_p)          f32  -- BN scale  gamma / sqrt(var + eps)
        # b_ref: (1, Cout_p)          f32  -- BN bias   beta - mean * scale
        # o_ref: (th*Wo, Cout_p)      f32  -- lane-dense output tile
        r = pl.program_id(1)
        cin = x_ref.shape[-1]
        cout_p = o_ref.shape[-1]
        row_base = pl.multiple_of(r * (th * stride), th * stride)

        acc = jnp.zeros((th * wo, cout_p), jnp.float32)
        for i in range(kh):
            for j in range(kw):
                r0 = i * dilation
                c0 = j * dilation
                if stride == 1:
                    rows = pl.ds(row_base + r0, th)
                    cols = pl.ds(c0, wo)
                else:
                    rows = pl.ds(row_base + r0, th, stride)
                    cols = pl.ds(c0, wo, stride)
                tap = x_ref[rows, cols, :]                      # (th, wo, cin) bf16
                acc = acc + jnp.dot(tap.reshape(th * wo, cin),
                                    w_ref[i * kw + j],
                                    preferred_element_type=jnp.float32)

        y = acc * s_ref[...] + b_ref[...]
        o_ref[...] = jnp.maximum(y, 0.0).astype(o_ref.dtype)

    return kernel


@functools.partial(jax.jit, static_argnames=("stride", "padding", "dilation"))
def basic_conv2d(x_nchw, weight_oihw, gamma, beta, running_mean, running_var,
                 *, stride=1, padding=0, dilation=1, eps=1e-5):
    """Forward of BasicConv2d.  x: (N, Cin, H, W), weight: (Cout, Cin, KH, KW)."""
    n, cin, h, w = x_nchw.shape
    cout, _, kh, kw = weight_oihw.shape
    eff_kh = dilation * (kh - 1) + 1
    eff_kw = dilation * (kw - 1) + 1
    ho = (h + 2 * padding - eff_kh) // stride + 1
    wo = (w + 2 * padding - eff_kw) // stride + 1

    # Lane-dense output channel dimension.
    cout_p = ((cout + 127) // 128) * 128

    # Row tile: as many output rows per grid step as a modest VMEM budget allows
    # (fat tiles amortize the ~0.35us per-grid-step overhead).
    bytes_per_out_row = wo * cout_p * 4                 # f32 output block row
    th = max(1, min(ho, (2 * 1024 * 1024) // max(1, bytes_per_out_row)))
    if th < ho:
        g = 8 // math.gcd(wo, 8)                        # keep th*wo a multiple of 8
        th = max(g, (th // g) * g)
    n_row_tiles = pl.cdiv(ho, th)

    # ---- glue: layout, spatial padding, BN folding (no patch matrix!) ----
    x_nhwc = jnp.transpose(x_nchw, (0, 2, 3, 1))
    hp_needed = (n_row_tiles * th - 1) * stride + eff_kh  # covers the partial last tile
    pad_bottom = padding + max(0, hp_needed - (h + 2 * padding))
    xp = jnp.pad(x_nhwc, ((0, 0), (padding, pad_bottom),
                          (padding, padding), (0, 0))).astype(jnp.bfloat16)
    hp, wp = xp.shape[1], xp.shape[2]

    # weight (Cout, Cin, KH, KW) -> (KH*KW, Cin, Cout_p) bf16
    w_taps = jnp.transpose(weight_oihw, (2, 3, 1, 0)).reshape(kh * kw, cin, cout)
    w_taps = jnp.pad(w_taps, ((0, 0), (0, 0), (0, cout_p - cout))).astype(jnp.bfloat16)

    scale = (gamma / jnp.sqrt(running_var + eps)).astype(jnp.float32)
    bias = beta.astype(jnp.float32) - running_mean.astype(jnp.float32) * scale
    scale = jnp.pad(scale, (0, cout_p - cout)).reshape(1, cout_p)
    bias = jnp.pad(bias, (0, cout_p - cout)).reshape(1, cout_p)

    kernel = _make_conv_bn_relu_kernel(kh, kw, stride, dilation, th, wo)

    out = pl.pallas_call(
        kernel,
        out_shape=jax.ShapeDtypeStruct((n, ho * wo, cout_p), jnp.float32),
        grid_spec=pltpu.PrefetchScalarGridSpec(
            num_scalar_prefetch=0,
            grid=(n, n_row_tiles),
            in_specs=[
                # whole padded image, resident across the row-tile axis
                pl.BlockSpec((None, hp, wp, cin), lambda b, r: (b, 0, 0, 0)),
                pl.BlockSpec((kh * kw, cin, cout_p), lambda b, r: (0, 0, 0)),
                pl.BlockSpec((1, cout_p), lambda b, r: (0, 0)),
                pl.BlockSpec((1, cout_p), lambda b, r: (0, 0)),
            ],
            out_specs=pl.BlockSpec((None, th * wo, cout_p), lambda b, r: (b, r, 0)),
        ),
        compiler_params=pltpu.CompilerParams(
            dimension_semantics=("parallel", "parallel"),
            vmem_limit_bytes=48 * 1024 * 1024,
        ),
    )(xp, w_taps, scale, bias)

    out = out[:, :, :cout].reshape(n, ho, wo, cout)
    return jnp.transpose(out, (0, 3, 1, 2))   # back to NCHW (PyTorch-facing)


# ---------------------------------------------------------------------------
# Reference (pure JAX/XLA) for a sanity check
# ---------------------------------------------------------------------------
def _reference(x, w, gamma, beta, mean, var, *, stride, padding, dilation, eps=1e-5):
    y = jax.lax.conv_general_dilated(
        x, w, window_strides=(stride, stride),
        padding=[(padding, padding), (padding, padding)],
        rhs_dilation=(dilation, dilation),
        dimension_numbers=("NCHW", "OIHW", "NCHW"))
    s = (gamma / jnp.sqrt(var + eps)).reshape(1, -1, 1, 1)
    b = (beta - mean * gamma / jnp.sqrt(var + eps)).reshape(1, -1, 1, 1)
    return jnp.maximum(y * s + b, 0.0)


if __name__ == "__main__":
    # BasicConv2d(in_planes=4, out_planes=8, kernel_size=3, padding=1)
    N, CIN, H, W = 2, 4, 16, 16
    COUT, KH, KW = 8, 3, 3
    STRIDE, PAD, DIL = 1, 1, 1

    key = jax.random.PRNGKey(0)
    kx, kw_, kg, kb, km, kv = jax.random.split(key, 6)
    x = jax.random.normal(kx, (N, CIN, H, W), dtype=jnp.float32)
    weight = jax.random.normal(kw_, (COUT, CIN, KH, KW), dtype=jnp.float32) * 0.1
    gamma = jax.random.uniform(kg, (COUT,), minval=0.5, maxval=1.5)
    beta = jax.random.normal(kb, (COUT,)) * 0.1
    running_mean = jax.random.normal(km, (COUT,)) * 0.1
    running_var = jax.random.uniform(kv, (COUT,), minval=0.5, maxval=1.5)

    out = basic_conv2d(x, weight, gamma, beta, running_mean, running_var,
                       stride=STRIDE, padding=PAD, dilation=DIL)
    out = jax.block_until_ready(out)

    # Reference with the same bf16 rounding of x/W (f32 accumulation), so the
    # check tightly validates the kernel's indexing / BN / ReLU math.
    x_q = x.astype(jnp.bfloat16).astype(jnp.float32)
    w_q = weight.astype(jnp.bfloat16).astype(jnp.float32)
    ref = _reference(x_q, w_q, gamma, beta, running_mean, running_var,
                     stride=STRIDE, padding=PAD, dilation=DIL)
    np.testing.assert_allclose(np.asarray(out), np.asarray(ref), rtol=5e-3, atol=5e-3)

    print("KERNEL_OK")
</pallas_src>

<mosaic_0001>
module attributes {stable_mosaic.version = 11 : i64} {
  func.func @kernel(%arg0: i32, %arg1: i32, %arg2: memref<1x18x18x4xbf16, #tpu.memory_space<vmem>>, %arg3: memref<9x4x128xbf16, #tpu.memory_space<vmem>>, %arg4: memref<1x128xf32, #tpu.memory_space<vmem>>, %arg5: memref<1x128xf32, #tpu.memory_space<vmem>>, %arg6: memref<1x256x128xf32, #tpu.memory_space<vmem>>) attributes {dimension_semantics = [#tpu.dimension_semantics<parallel>, #tpu.dimension_semantics<parallel>], iteration_bounds = array<i64: 2, 1>, scalar_prefetch = 0 : i64, scratch_operands = 0 : i64, tpu.core_type = #tpu.core_type<tc>, window_params = [{transform_indices = @transform_0, window_bounds = array<i64: 1, 18, 18, 4>}, {pipeline_mode = #tpu.pipeline_mode<synchronous>, transform_indices = @transform_1, window_bounds = array<i64: 9, 4, 128>}, {pipeline_mode = #tpu.pipeline_mode<synchronous>, transform_indices = @transform_2, window_bounds = array<i64: 1, 128>}, {pipeline_mode = #tpu.pipeline_mode<synchronous>, transform_indices = @transform_3, window_bounds = array<i64: 1, 128>}, {transform_indices = @transform_4, window_bounds = array<i64: 1, 256, 128>}]} {
    %c16_i32 = arith.constant 16 : i32
    %0 = arith.muli %arg1, %c16_i32 : i32
    %1 = tpu.assume_multiple %0, 16 : i32
    %cst = arith.constant 0.000000e+00 : f32
    %2 = vector.broadcast %cst : f32 to vector<256x128xf32>
    %c0_i32 = arith.constant 0 : i32
    %3 = arith.addi %1, %c0_i32 : i32
    %c0 = arith.constant 0 : index
    %4 = arith.index_cast %3 : i32 to index
    %c0_0 = arith.constant 0 : index
    %c0_1 = arith.constant 0 : index
    %5 = vector.load %arg2[%c0, %4, %c0_0, %c0_1] : memref<1x18x18x4xbf16, #tpu.memory_space<vmem>>, vector<1x16x16x4xbf16>
    %6 = vector.shape_cast %5 : vector<1x16x16x4xbf16> to vector<16x16x4xbf16>
    %7 = vector.shape_cast %6 : vector<16x16x4xbf16> to vector<256x4xbf16>
    %c0_2 = arith.constant 0 : index
    %c0_3 = arith.constant 0 : index
    %c0_4 = arith.constant 0 : index
    %8 = vector.load %arg3[%c0_2, %c0_3, %c0_4] : memref<9x4x128xbf16, #tpu.memory_space<vmem>>, vector<1x4x128xbf16>
    %9 = vector.shape_cast %8 : vector<1x4x128xbf16> to vector<4x128xbf16>
    %cst_5 = arith.constant dense<0.000000e+00> : vector<256x128xf32>
    %10 = tpu.matmul %7, %9, %cst_5 {dimension_numbers = #tpu.dot_dimension_numbers<[1], [0], [0], [1], [0, 0, 1, 1], [], []>} : vector<256x4xbf16>, vector<4x128xbf16>, vector<256x128xf32> -> vector<256x128xf32>
    %11 = arith.addf %2, %10 : vector<256x128xf32>
    %c0_i32_6 = arith.constant 0 : i32
    %12 = arith.addi %1, %c0_i32_6 : i32
    %c0_7 = arith.constant 0 : index
    %13 = arith.index_cast %12 : i32 to index
    %c1 = arith.constant 1 : index
    %c0_8 = arith.constant 0 : index
    %14 = vector.load %arg2[%c0_7, %13, %c1, %c0_8] : memref<1x18x18x4xbf16, #tpu.memory_space<vmem>>, vector<1x16x16x4xbf16>
    %15 = vector.shape_cast %14 : vector<1x16x16x4xbf16> to vector<16x16x4xbf16>
    %16 = vector.shape_cast %15 : vector<16x16x4xbf16> to vector<256x4xbf16>
    %c1_9 = arith.constant 1 : index
    %c0_10 = arith.constant 0 : index
    %c0_11 = arith.constant 0 : index
    %17 = vector.load %arg3[%c1_9, %c0_10, %c0_11] : memref<9x4x128xbf16, #tpu.memory_space<vmem>>, vector<1x4x128xbf16>
    %18 = vector.shape_cast %17 : vector<1x4x128xbf16> to vector<4x128xbf16>
    %cst_12 = arith.constant dense<0.000000e+00> : vector<256x128xf32>
    %19 = tpu.matmul %16, %18, %cst_12 {dimension_numbers = #tpu.dot_dimension_numbers<[1], [0], [0], [1], [0, 0, 1, 1], [], []>} : vector<256x4xbf16>, vector<4x128xbf16>, vector<256x128xf32> -> vector<256x128xf32>
    %20 = arith.addf %11, %19 : vector<256x128xf32>
    %c0_i32_13 = arith.constant 0 : i32
    %21 = arith.addi %1, %c0_i32_13 : i32
    %c0_14 = arith.constant 0 : index
    %22 = arith.index_cast %21 : i32 to index
    %c2 = arith.constant 2 : index
    %c0_15 = arith.constant 0 : index
    %23 = vector.load %arg2[%c0_14, %22, %c2, %c0_15] : memref<1x18x18x4xbf16, #tpu.memory_space<vmem>>, vector<1x16x16x4xbf16>
    %24 = vector.shape_cast %23 : vector<1x16x16x4xbf16> to vector<16x16x4xbf16>
    %25 = vector.shape_cast %24 : vector<16x16x4xbf16> to vector<256x4xbf16>
    %c2_16 = arith.constant 2 : index
    %c0_17 = arith.constant 0 : index
    %c0_18 = arith.constant 0 : index
    %26 = vector.load %arg3[%c2_16, %c0_17, %c0_18] : memref<9x4x128xbf16, #tpu.memory_space<vmem>>, vector<1x4x128xbf16>
    %27 = vector.shape_cast %26 : vector<1x4x128xbf16> to vector<4x128xbf16>
    %cst_19 = arith.constant dense<0.000000e+00> : vector<256x128xf32>
    %28 = tpu.matmul %25, %27, %cst_19 {dimension_numbers = #tpu.dot_dimension_numbers<[1], [0], [0], [1], [0, 0, 1, 1], [], []>} : vector<256x4xbf16>, vector<4x128xbf16>, vector<256x128xf32> -> vector<256x128xf32>
    %29 = arith.addf %20, %28 : vector<256x128xf32>
    %c1_i32 = arith.constant 1 : i32
    %30 = arith.addi %1, %c1_i32 : i32
    %c0_20 = arith.constant 0 : index
    %31 = arith.index_cast %30 : i32 to index
    %c0_21 = arith.constant 0 : index
    %c0_22 = arith.constant 0 : index
    %32 = vector.load %arg2[%c0_20, %31, %c0_21, %c0_22] : memref<1x18x18x4xbf16, #tpu.memory_space<vmem>>, vector<1x16x16x4xbf16>
    %33 = vector.shape_cast %32 : vector<1x16x16x4xbf16> to vector<16x16x4xbf16>
    %34 = vector.shape_cast %33 : vector<16x16x4xbf16> to vector<256x4xbf16>
    %c3 = arith.constant 3 : index
    %c0_23 = arith.constant 0 : index
    %c0_24 = arith.constant 0 : index
    %35 = vector.load %arg3[%c3, %c0_23, %c0_24] : memref<9x4x128xbf16, #tpu.memory_space<vmem>>, vector<1x4x128xbf16>
    %36 = vector.shape_cast %35 : vector<1x4x128xbf16> to vector<4x128xbf16>
    %cst_25 = arith.constant dense<0.000000e+00> : vector<256x128xf32>
    %37 = tpu.matmul %34, %36, %cst_25 {dimension_numbers = #tpu.dot_dimension_numbers<[1], [0], [0], [1], [0, 0, 1, 1], [], []>} : vector<256x4xbf16>, vector<4x128xbf16>, vector<256x128xf32> -> vector<256x128xf32>
    %38 = arith.addf %29, %37 : vector<256x128xf32>
    %c1_i32_26 = arith.constant 1 : i32
    %39 = arith.addi %1, %c1_i32_26 : i32
    %c0_27 = arith.constant 0 : index
    %40 = arith.index_cast %39 : i32 to index
    %c1_28 = arith.constant 1 : index
    %c0_29 = arith.constant 0 : index
    %41 = vector.load %arg2[%c0_27, %40, %c1_28, %c0_29] : memref<1x18x18x4xbf16, #tpu.memory_space<vmem>>, vector<1x16x16x4xbf16>
    %42 = vector.shape_cast %41 : vector<1x16x16x4xbf16> to vector<16x16x4xbf16>
    %43 = vector.shape_cast %42 : vector<16x16x4xbf16> to vector<256x4xbf16>
    %c4 = arith.constant 4 : index
    %c0_30 = arith.constant 0 : index
    %c0_31 = arith.constant 0 : index
    %44 = vector.load %arg3[%c4, %c0_30, %c0_31] : memref<9x4x128xbf16, #tpu.memory_space<vmem>>, vector<1x4x128xbf16>
    %45 = vector.shape_cast %44 : vector<1x4x128xbf16> to vector<4x128xbf16>
    %cst_32 = arith.constant dense<0.000000e+00> : vector<256x128xf32>
    %46 = tpu.matmul %43, %45, %cst_32 {dimension_numbers = #tpu.dot_dimension_numbers<[1], [0], [0], [1], [0, 0, 1, 1], [], []>} : vector<256x4xbf16>, vector<4x128xbf16>, vector<256x128xf32> -> vector<256x128xf32>
    %47 = arith.addf %38, %46 : vector<256x128xf32>
    %c1_i32_33 = arith.constant 1 : i32
    %48 = arith.addi %1, %c1_i32_33 : i32
    %c0_34 = arith.constant 0 : index
    %49 = arith.index_cast %48 : i32 to index
    %c2_35 = arith.constant 2 : index
    %c0_36 = arith.constant 0 : index
    %50 = vector.load %arg2[%c0_34, %49, %c2_35, %c0_36] : memref<1x18x18x4xbf16, #tpu.memory_space<vmem>>, vector<1x16x16x4xbf16>
    %51 = vector.shape_cast %50 : vector<1x16x16x4xbf16> to vector<16x16x4xbf16>
    %52 = vector.shape_cast %51 : vector<16x16x4xbf16> to vector<256x4xbf16>
    %c5 = arith.constant 5 : index
    %c0_37 = arith.constant 0 : index
    %c0_38 = arith.constant 0 : index
    %53 = vector.load %arg3[%c5, %c0_37, %c0_38] : memref<9x4x128xbf16, #tpu.memory_space<vmem>>, vector<1x4x128xbf16>
    %54 = vector.shape_cast %53 : vector<1x4x128xbf16> to vector<4x128xbf16>
    %cst_39 = arith.constant dense<0.000000e+00> : vector<256x128xf32>
    %55 = tpu.matmul %52, %54, %cst_39 {dimension_numbers = #tpu.dot_dimension_numbers<[1], [0], [0], [1], [0, 0, 1, 1], [], []>} : vector<256x4xbf16>, vector<4x128xbf16>, vector<256x128xf32> -> vector<256x128xf32>
    %56 = arith.addf %47, %55 : vector<256x128xf32>
    %c2_i32 = arith.constant 2 : i32
    %57 = arith.addi %1, %c2_i32 : i32
    %c0_40 = arith.constant 0 : index
    %58 = arith.index_cast %57 : i32 to index
    %c0_41 = arith.constant 0 : index
    %c0_42 = arith.constant 0 : index
    %59 = vector.load %arg2[%c0_40, %58, %c0_41, %c0_42] : memref<1x18x18x4xbf16, #tpu.memory_space<vmem>>, vector<1x16x16x4xbf16>
    %60 = vector.shape_cast %59 : vector<1x16x16x4xbf16> to vector<16x16x4xbf16>
    %61 = vector.shape_cast %60 : vector<16x16x4xbf16> to vector<256x4xbf16>
    %c6 = arith.constant 6 : index
    %c0_43 = arith.constant 0 : index
    %c0_44 = arith.constant 0 : index
    %62 = vector.load %arg3[%c6, %c0_43, %c0_44] : memref<9x4x128xbf16, #tpu.memory_space<vmem>>, vector<1x4x128xbf16>
    %63 = vector.shape_cast %62 : vector<1x4x128xbf16> to vector<4x128xbf16>
    %cst_45 = arith.constant dense<0.000000e+00> : vector<256x128xf32>
    %64 = tpu.matmul %61, %63, %cst_45 {dimension_numbers = #tpu.dot_dimension_numbers<[1], [0], [0], [1], [0, 0, 1, 1], [], []>} : vector<256x4xbf16>, vector<4x128xbf16>, vector<256x128xf32> -> vector<256x128xf32>
    %65 = arith.addf %56, %64 : vector<256x128xf32>
    %c2_i32_46 = arith.constant 2 : i32
    %66 = arith.addi %1, %c2_i32_46 : i32
    %c0_47 = arith.constant 0 : index
    %67 = arith.index_cast %66 : i32 to index
    %c1_48 = arith.constant 1 : index
    %c0_49 = arith.constant 0 : index
    %68 = vector.load %arg2[%c0_47, %67, %c1_48, %c0_49] : memref<1x18x18x4xbf16, #tpu.memory_space<vmem>>, vector<1x16x16x4xbf16>
    %69 = vector.shape_cast %68 : vector<1x16x16x4xbf16> to vector<16x16x4xbf16>
    %70 = vector.shape_cast %69 : vector<16x16x4xbf16> to vector<256x4xbf16>
    %c7 = arith.constant 7 : index
    %c0_50 = arith.constant 0 : index
    %c0_51 = arith.constant 0 : index
    %71 = vector.load %arg3[%c7, %c0_50, %c0_51] : memref<9x4x128xbf16, #tpu.memory_space<vmem>>, vector<1x4x128xbf16>
    %72 = vector.shape_cast %71 : vector<1x4x128xbf16> to vector<4x128xbf16>
    %cst_52 = arith.constant dense<0.000000e+00> : vector<256x128xf32>
    %73 = tpu.matmul %70, %72, %cst_52 {dimension_numbers = #tpu.dot_dimension_numbers<[1], [0], [0], [1], [0, 0, 1, 1], [], []>} : vector<256x4xbf16>, vector<4x128xbf16>, vector<256x128xf32> -> vector<256x128xf32>
    %74 = arith.addf %65, %73 : vector<256x128xf32>
    %c2_i32_53 = arith.constant 2 : i32
    %75 = arith.addi %1, %c2_i32_53 : i32
    %c0_54 = arith.constant 0 : index
    %76 = arith.index_cast %75 : i32 to index
    %c2_55 = arith.constant 2 : index
    %c0_56 = arith.constant 0 : index
    %77 = vector.load %arg2[%c0_54, %76, %c2_55, %c0_56] : memref<1x18x18x4xbf16, #tpu.memory_space<vmem>>, vector<1x16x16x4xbf16>
    %78 = vector.shape_cast %77 : vector<1x16x16x4xbf16> to vector<16x16x4xbf16>
    %79 = vector.shape_cast %78 : vector<16x16x4xbf16> to vector<256x4xbf16>
    %c8 = arith.constant 8 : index
    %c0_57 = arith.constant 0 : index
    %c0_58 = arith.constant 0 : index
    %80 = vector.load %arg3[%c8, %c0_57, %c0_58] : memref<9x4x128xbf16, #tpu.memory_space<vmem>>, vector<1x4x128xbf16>
    %81 = vector.shape_cast %80 : vector<1x4x128xbf16> to vector<4x128xbf16>
    %cst_59 = arith.constant dense<0.000000e+00> : vector<256x128xf32>
    %82 = tpu.matmul %79, %81, %cst_59 {dimension_numbers = #tpu.dot_dimension_numbers<[1], [0], [0], [1], [0, 0, 1, 1], [], []>} : vector<256x4xbf16>, vector<4x128xbf16>, vector<256x128xf32> -> vector<256x128xf32>
    %83 = arith.addf %74, %82 : vector<256x128xf32>
    %c0_60 = arith.constant 0 : index
    %c0_61 = arith.constant 0 : index
    %84 = vector.load %arg4[%c0_60, %c0_61] : memref<1x128xf32, #tpu.memory_space<vmem>>, vector<1x128xf32>
    %85 = vector.broadcast %84 : vector<1x128xf32> to vector<256x128xf32>
    %86 = arith.mulf %83, %85 : vector<256x128xf32>
    %c0_62 = arith.constant 0 : index
    %c0_63 = arith.constant 0 : index
    %87 = vector.load %arg5[%c0_62, %c0_63] : memref<1x128xf32, #tpu.memory_space<vmem>>, vector<1x128xf32>
    %88 = vector.broadcast %87 : vector<1x128xf32> to vector<256x128xf32>
    %89 = arith.addf %86, %88 : vector<256x128xf32>
    %cst_64 = arith.constant 0.000000e+00 : f32
    %90 = vector.broadcast %cst_64 : f32 to vector<256x128xf32>
    %91 = arith.maximumf %89, %90 : vector<256x128xf32>
    %c0_65 = arith.constant 0 : index
    %c0_66 = arith.constant 0 : index
    %c0_67 = arith.constant 0 : index
    %92 = vector.load %arg6[%c0_65, %c0_66, %c0_67] : memref<1x256x128xf32, #tpu.memory_space<vmem>>, vector<1x256x128xf32>
    %93 = vector.shape_cast %92 : vector<1x256x128xf32> to vector<256x128xf32>
    %94 = vector.shape_cast %91 : vector<256x128xf32> to vector<1x256x128xf32>
    tpu.vector_store %arg6[%c0_65, %c0_66, %c0_67], %94 {strides = array<i32>} : memref<1x256x128xf32, #tpu.memory_space<vmem>>, vector<1x256x128xf32>,
    return
  }
  func.func @transform_0(%arg0: i32, %arg1: i32) -> (i32, i32, i32, i32) {
    %c0_i32 = arith.constant 0 : i32
    %c0_i32_0 = arith.constant 0 : i32
    %c0_i32_1 = arith.constant 0 : i32
    %c0_i32_2 = arith.constant 0 : i32
    return %arg0, %c0_i32, %c0_i32_0, %c0_i32_1 : i32, i32, i32, i32
  }
  func.func @transform_1(%arg0: i32, %arg1: i32) -> (i32, i32, i32) {
    %c0_i32 = arith.constant 0 : i32
    %c0_i32_0 = arith.constant 0 : i32
    %c0_i32_1 = arith.constant 0 : i32
    %c0_i32_2 = arith.constant 0 : i32
    return %c0_i32, %c0_i32_0, %c0_i32_1 : i32, i32, i32
  }
  func.func @transform_2(%arg0: i32, %arg1: i32) -> (i32, i32) {
    %c0_i32 = arith.constant 0 : i32
    %c0_i32_0 = arith.constant 0 : i32
    %c0_i32_1 = arith.constant 0 : i32
    return %c0_i32, %c0_i32_0 : i32, i32
  }
  func.func @transform_3(%arg0: i32, %arg1: i32) -> (i32, i32) {
    %c0_i32 = arith.constant 0 : i32
    %c0_i32_0 = arith.constant 0 : i32
    %c0_i32_1 = arith.constant 0 : i32
    return %c0_i32, %c0_i32_0 : i32, i32
  }
  func.func @transform_4(%arg0: i32, %arg1: i32) -> (i32, i32, i32) {
    %c0_i32 = arith.constant 0 : i32
    %c0_i32_0 = arith.constant 0 : i32
    return %arg0, %arg1, %c0_i32 : i32, i32, i32
  }
}

</mosaic_0001>

<llo_original>
// kernel: basic_conv2d.1
$region0: #{basic_conv2d.1}
  #allocation0 [shape = 'u32[]', space=smem, size = 0x4, offset = 0x4, fixed_abs, tag = 'smem constant byte address 0x4 - core index']
  #allocation1 [shape = 'u32[144,128]{1,0:T(1,128)}', space=vmem, size = 0x12000, scoped, tag = 'internal scratch']
  %s0 = inlined_call_operand.vmem [shape: bf16[2,18,18,4], index: 0, kind: input, shape index: {}]
  %s1 = inlined_call_operand.vmem [shape: bf16[9,4,128], index: 1, kind: input, shape index: {}]
  %s2 = inlined_call_operand.vmem [shape: f32[1,128], index: 2, kind: input, shape index: {}]
  %s3 = inlined_call_operand.vmem [shape: f32[1,128], index: 3, kind: input, shape index: {}]
  %s4 = inlined_call_operand.vmem [shape: f32[2,256,128], index: 4, kind: output, shape index: {}]
  %s5 = sld [smem:[#allocation0]]
  $region49: #{basic_conv2d.1} parent=0
    _
  %s7 = ssub.s32 1, %s5
  %s8 = scalar_select 0, %s7, %s5
  loop: start=0, step=1, limit=4
  $region2: #{basic_conv2d.1} parent=0 // loop_pre_header
    _
  $region3: #{basic_conv2d.1} parent=0 // loop_header
    %s10 = sphi 0, %s14
    %p11 = scmp.ge.s32.totalorder %s10, 4
    %s17 = sphi 0, %s29
    %s18 = sphi 0, %s25
    %s19 = sphi 0, %s17
    %s20 = sphi 0, %s18
    %s21 = sphi 0, %s19
    %s22 = sphi 0, %s20
    %s32 = sphi 0, %s34
    %s35 = sphi 0, %s32
    %s36 = sphi 0, %s35
    %s52 = sphi 0, %s36
    %s56 = sphi 0, %s56
    %s58 = sphi 0, %s56
    %s59 = sphi 0, %s58
    %s73 = sphi 0, %s59
    %s77 = sphi 0, %s77
    %s79 = sphi 0, %s77
    %s80 = sphi 0, %s79
    %s94 = sphi 0, %s80
    %s98 = sphi 0, %s98
    %s100 = sphi 0, %s98
    %s101 = sphi 0, %s100
    %s115 = sphi 0, %s101
    %s123 = sphi 0, %s125
    %s126 = sphi 0, %s123
    %s127 = sphi 0, %s126
    %s143 = sphi 0, %s127
  $region4: #{basic_conv2d.1} parent=0 // loop_header_branch
    %13 = sbr.rel (%p11) target = $region8
  $region5: #{basic_conv2d.1} parent=0 // loop_body
    %s15 = ssub.s32 %s10, 1
    %s16 = ssub.s32 %s10, 2
    %s23 = sadd.s32 1, %s18
    %p24 = scmp.ge.s32.totalorder %s23, 1
    %s25 = scalar_select %p24, 0, %s23
    %s26 = sadd.s32 1, %s17
    %s27 = scalar_select %p24, %s26, %s17
    %p28 = scmp.ge.s32.totalorder %s27, 2
    %s29 = scalar_select %p28, 0, %s27
    %s30 = ssub.s32 %s17, %s29
    %p31 = scmp.eq.s32.totalorder %s30, 0
    %s33 = sadd.s32 %s32, 1
    %s34 = scalar_select %p31, %s32, %s33
    %p37 = pneg %p31
    %p38 = scmp.eq.s32.totalorder %s10, 1
    %p39 = por %p37, %p38
    %p40 = scmp.ne.s32.totalorder %s32, %s35
    %p41 = scmp.eq.s32.totalorder %s10, 0
    %p42 = por %p40, %p41
    %p43 = scmp.ne.s32.totalorder %s32, %s35
    %p44 = scmp.eq.s32.totalorder %s15, 1
    %p45 = por %p43, %p44
    %p46 = scmp.ne.s32.totalorder %s35, %s36
    %p47 = scmp.eq.s32.totalorder %s15, 0
    %p48 = por %p46, %p47
    %p49 = scmp.ne.s32.totalorder %s35, %s36
    %p50 = scmp.eq.s32.totalorder %s16, 1
    %p51 = por %p49, %p50
    %p53 = scmp.ne.s32.totalorder %s36, %s52
    %p54 = scmp.eq.s32.totalorder %s16, 0
    %p55 = por %p53, %p54
    %s57 = sadd.s32 %s56, 1
    %p60 = scmp.eq.s32.totalorder %s10, 1
    %p61 = scmp.ne.s32.totalorder %s56, %s58
    %p62 = scmp.eq.s32.totalorder %s10, 0
    %p63 = por %p61, %p62
    %p64 = scmp.ne.s32.totalorder %s56, %s58
    %p65 = scmp.eq.s32.totalorder %s15, 1
    %p66 = por %p64, %p65
    %p67 = scmp.ne.s32.totalorder %s58, %s59
    %p68 = scmp.eq.s32.totalorder %s15, 0
    %p69 = por %p67, %p68
    %p70 = scmp.ne.s32.totalorder %s58, %s59
    %p71 = scmp.eq.s32.totalorder %s16, 1
    %p72 = por %p70, %p71
    %p74 = scmp.ne.s32.totalorder %s59, %s73
    %p75 = scmp.eq.s32.totalorder %s16, 0
    %p76 = por %p74, %p75
    %s78 = sadd.s32 %s77, 1
    %p81 = scmp.eq.s32.totalorder %s10, 1
    %p82 = scmp.ne.s32.totalorder %s77, %s79
    %p83 = scmp.eq.s32.totalorder %s10, 0
    %p84 = por %p82, %p83
    %p85 = scmp.ne.s32.totalorder %s77, %s79
    %p86 = scmp.eq.s32.totalorder %s15, 1
    %p87 = por %p85, %p86
    %p88 = scmp.ne.s32.totalorder %s79, %s80
    %p89 = scmp.eq.s32.totalorder %s15, 0
    %p90 = por %p88, %p89
    %p91 = scmp.ne.s32.totalorder %s79, %s80
    %p92 = scmp.eq.s32.totalorder %s16, 1
    %p93 = por %p91, %p92
    %p95 = scmp.ne.s32.totalorder %s80, %s94
    %p96 = scmp.eq.s32.totalorder %s16, 0
    %p97 = por %p95, %p96
    %s99 = sadd.s32 %s98, 1
    %p102 = scmp.eq.s32.totalorder %s10, 1
    %p103 = scmp.ne.s32.totalorder %s98, %s100
    %p104 = scmp.eq.s32.totalorder %s10, 0
    %p105 = por %p103, %p104
    %p106 = scmp.ne.s32.totalorder %s98, %s100
    %p107 = scmp.eq.s32.totalorder %s15, 1
    %p108 = por %p106, %p107
    %p109 = scmp.ne.s32.totalorder %s100, %s101
    %p110 = scmp.eq.s32.totalorder %s15, 0
    %p111 = por %p109, %p110
    %p112 = scmp.ne.s32.totalorder %s100, %s101
    %p113 = scmp.eq.s32.totalorder %s16, 1
    %p114 = por %p112, %p113
    %p116 = scmp.ne.s32.totalorder %s101, %s115
    %p117 = scmp.eq.s32.totalorder %s16, 0
    %p118 = por %p116, %p117
    %s119 = ssub.s32 %s17, %s29
    %s120 = ssub.s32 %s18, %s25
    %s121 = sor.u32 %s119, %s120
    %p122 = scmp.eq.s32.totalorder %s121, 0
    %s124 = sadd.s32 %s123, 1
    %s125 = scalar_select %p122, %s123, %s124
    %p128 = pneg %p122
    %p129 = scmp.eq.s32.totalorder %s10, 1
    %p130 = por %p128, %p129
    %p131 = scmp.ne.s32.totalorder %s123, %s126
    %p132 = scmp.eq.s32.totalorder %s10, 0
    %p133 = por %p131, %p132
    %p134 = scmp.ne.s32.totalorder %s123, %s126
    %p135 = scmp.eq.s32.totalorder %s15, 1
    %p136 = por %p134, %p135
    %p137 = scmp.ne.s32.totalorder %s126, %s127
    %p138 = scmp.eq.s32.totalorder %s15, 0
    %p139 = por %p137, %p138
    %p140 = scmp.ne.s32.totalorder %s126, %s127
    %p141 = scmp.eq.s32.totalorder %s16, 1
    %p142 = por %p140, %p141
    %p144 = scmp.ne.s32.totalorder %s127, %s143
    %p145 = scmp.eq.s32.totalorder %s16, 0
    %p146 = por %p144, %p145
    %p147 = scmp.le.s32.totalorder 1, %s10
    %p148 = scmp.lt.s32.totalorder %s10, 3
    %p149 = pnand %p147, %p148
    %p150 = pneg %p149
    // Predicated region
    $region9: #{basic_conv2d.1} parent=5 // pred_check
      _
    $region10: #{basic_conv2d.1} parent=5 // pred_check_branch
      %152 = sbr.rel (%p149) target = $region12
    $region11: #{basic_conv2d.1} parent=5 // pred_region
      %s153 = ssub.s32 %s10, 1
      // Predicated region
      $region13: #{basic_conv2d.1} parent=11 // pred_check
        %p154 = pneg %p69
      $region14: #{basic_conv2d.1} parent=11 // pred_check_branch
        %156 = sbr.rel (%p154) target = $region16
      $region15: #{basic_conv2d.1} parent=11 // pred_region
        _
      $region16: #{basic_conv2d.1} parent=11 // pred_fallthru
        _
      // Predicated region
      $region17: #{basic_conv2d.1} parent=11 // pred_check
        %p157 = pneg %p90
      $region18: #{basic_conv2d.1} parent=11 // pred_check_branch
        %159 = sbr.rel (%p157) target = $region20
      $region19: #{basic_conv2d.1} parent=11 // pred_region
        _
      $region20: #{basic_conv2d.1} parent=11 // pred_fallthru
        _
      // Predicated region
      $region21: #{basic_conv2d.1} parent=11 // pred_check
        %p160 = pneg %p111
      $region22: #{basic_conv2d.1} parent=11 // pred_check_branch
        %162 = sbr.rel (%p160) target = $region24
      $region23: #{basic_conv2d.1} parent=11 // pred_region
        _
      $region24: #{basic_conv2d.1} parent=11 // pred_fallthru
        _
    $region12: #{basic_conv2d.1} parent=5 // pred_fallthru
      _
    %p163 = scmp.lt.s32.totalorder %s10, 2
    // Predicated region
    $region25: #{basic_conv2d.1} parent=5 // pred_check
      %p164 = pneg %p163
    $region26: #{basic_conv2d.1} parent=5 // pred_check_branch
      %166 = sbr.rel (%p164) target = $region28
    $region27: #{basic_conv2d.1} parent=5 // pred_region
      // Predicated region
      $region29: #{basic_conv2d.1} parent=27 // pred_check
        %p167 = pneg %p42
      $region30: #{basic_conv2d.1} parent=27 // pred_check_branch
        %169 = sbr.rel (%p167) target = $region32
      $region31: #{basic_conv2d.1} parent=27 // pred_region
        %p170 = scmp.lt.s32.totalorder %s17, 1
        %s171 = scalar_select %p170, %s17, 1
        %s172 = smul.addr %s171, 54
        %s173 = smul.addr %s172, 4
        %s174 = scalar_lea.vmem %s0, %s173
      $region32: #{basic_conv2d.1} parent=27 // pred_fallthru
        _
    $region28: #{basic_conv2d.1} parent=5 // pred_fallthru
      _
    %p175 = scmp.le.s32.totalorder 1, %s10
    %p176 = scmp.lt.s32.totalorder %s10, 3
    %p177 = pnand %p175, %p176
    %p178 = pneg %p177
    // Predicated region
    $region33: #{basic_conv2d.1} parent=5 // pred_check
      _
    $region34: #{basic_conv2d.1} parent=5 // pred_check_branch
      %180 = sbr.rel (%p177) target = $region36
    $region35: #{basic_conv2d.1} parent=5 // pred_region
      %s181 = ssub.s32 %s10, 1
      %p182 = scmp.lt.s32.totalorder %s19, 1
      %s183 = scalar_select %p182, %s19, 1
      %s184 = smul.addr %s183, 54
      %s185 = smul.addr %s184, 4
      %s186 = scalar_lea.vmem %s0, %s185
      %p187 = pneg %p48
      %p188 = pneg %p45
      %p189 = pneg %p69
      %p190 = pneg %p66
      %p191 = pneg %p90
      %p192 = pneg %p87
      %p193 = pneg %p111
      %p194 = pneg %p108
      %p195 = pneg %p139
      %p196 = pneg %p136
      %s197 = smul.u32 32, %s20
      %p198 = scmp.lt.s32.totalorder %s19, 1
      %s199 = scalar_select %p198, %s19, 1
      %p200 = scmp.lt.s32.totalorder %s197, 31
      %s201 = scalar_select %p200, %s197, 31
      %s202 = smul.addr %s199, 32
      %s203 = sadd.s32 %s201, %s202
      %s204 = smul.addr %s203, 8
      %s205 = scalar_lea.vmem %s4, %s204
      %p206 = scmp.lt.s32.totalorder %s19, 1
      %s207 = scalar_select %p206, %s19, 1
      %s208 = smul.addr %s207, 54
      %s209 = smul.addr %s208, 4
      %s210 = scalar_lea.vmem %s0, %s209
      %s211 = smul.u32 32, %s20
      %p212 = scmp.lt.s32.totalorder %s19, 1
      %s213 = scalar_select %p212, %s19, 1
      %p214 = scmp.lt.s32.totalorder %s211, 31
      %s215 = scalar_select %p214, %s211, 31
      %s216 = smul.addr %s213, 32
      %s217 = sadd.s32 %s215, %s216
      %s218 = smul.addr %s217, 8
      %s219 = scalar_lea.vmem %s4, %s218
      %s220 = smul.u32 32, %s20
      %s222 = smul.u32 %s20, 16
      %s223 = smul.u32 %s222, 3
      %s224 = smul.addr %s223, 4
      %s225 = scalar_lea.vmem %s210, %s224
      %v226 = vld [vmem:[%s225] sm:$0xf]
      %v227 = vld [vmem:[%s225 + $0x4] sm:$0xf]
      %v228 = vld [vmem:[%s225 + $0xc] sm:$0xf]
      %v229 = vld [vmem:[%s225 + $0x10] sm:$0xf]
      %v230 = vld [vmem:[%s225 + $0x18] sm:$0xf]
      %v231 = vld [vmem:[%s225 + $0x1c] sm:$0xf]
      %v232 = vld [vmem:[%s225 + $0x24] sm:$0xf]
      %v233 = vld [vmem:[%s225 + $0x28] sm:$0xf]
      %v234 = vld [vmem:[%s225 + $0x30] sm:$0xf]
      %v235 = vld [vmem:[%s225 + $0x34] sm:$0xf]
      %v236 = vld [vmem:[%s225 + $0x3c] sm:$0xf]
      %v237 = vld [vmem:[%s225 + $0x40] sm:$0xf]
      %v238 = vld [vmem:[%s225 + $0x48] sm:$0xf]
      %v239 = vld [vmem:[%s225 + $0x4c] sm:$0xf]
      %v240 = vld [vmem:[%s225 + $0x54] sm:$0xf]
      %v241 = vld [vmem:[%s225 + $0x58] sm:$0xf]
      %v242 = vld [vmem:[%s225 + $0x60] sm:$0xf]
      %v243 = vld [vmem:[%s225 + $0x64] sm:$0xf]
      %v244 = vld [vmem:[%s225 + $0x6c] sm:$0xf]
      %v245 = vld [vmem:[%s225 + $0x70] sm:$0xf]
      %v246 = vld [vmem:[%s225 + $0x78] sm:$0xf]
      %v247 = vld [vmem:[%s225 + $0x7c] sm:$0xf]
      %v248 = vld [vmem:[%s225 + $0x84] sm:$0xf]
      %v249 = vld [vmem:[%s225 + $0x88] sm:$0xf]
      %v250 = vld [vmem:[%s225 + $0x90] sm:$0xf]
      %v251 = vld [vmem:[%s225 + $0x94] sm:$0xf]
      %v252 = vld [vmem:[%s225 + $0x9c] sm:$0xf]
      %v253 = vld [vmem:[%s225 + $0xa0] sm:$0xf]
      %v254 = vld [vmem:[%s225 + $0xa8] sm:$0xf]
      %v255 = vld [vmem:[%s225 + $0xac] sm:$0xf]
      %v256 = vld [vmem:[%s225 + $0xb4] sm:$0xf]
      %v257 = vld [vmem:[%s225 + $0xb8] sm:$0xf]
      %v258 = vld [vmem:[%s1] sm:$0x3]
      %v259 = vld [vmem:[%s225 + $0x8] sm:$0x1]
      %v260 = vld [vmem:[%s225 + $0x14] sm:$0x1]
      %v261 = vld [vmem:[%s225 + $0x20] sm:$0x1]
      %v262 = vld [vmem:[%s225 + $0x2c] sm:$0x1]
      %v263 = vld [vmem:[%s225 + $0x38] sm:$0x1]
      %v264 = vld [vmem:[%s225 + $0x44] sm:$0x1]
      %v265 = vld [vmem:[%s225 + $0x50] sm:$0x1]
      %v266 = vld [vmem:[%s225 + $0x5c] sm:$0x1]
      %v267 = vld [vmem:[%s225 + $0x68] sm:$0x1]
      %v268 = vld [vmem:[%s225 + $0x74] sm:$0x1]
      %v269 = vld [vmem:[%s225 + $0x80] sm:$0x1]
      %v270 = vld [vmem:[%s225 + $0x8c] sm:$0x1]
      %v271 = vld [vmem:[%s225 + $0x98] sm:$0x1]
      %v272 = vld [vmem:[%s225 + $0xa4] sm:$0x1]
      %v273 = vld [vmem:[%s225 + $0xb0] sm:$0x1]
      %v274 = vld [vmem:[%s225 + $0xbc] sm:$0x1]
      %vm275 = vsmask.f32 3328
      %vm276 = vsmask.f32 7440
      %vm277 = vmor %vm275, %vm276
      %v279 = vshrl.u32 %v226, 16
      %v281 = vrot.slane %v279, 4
      %v282 = vshll.u32 %v226, 16
      %v284 = vrot.slane %v282, 5
      %v285 = vor.u32 %v281, %v284
      %v286 = vrot.slane %v285, 4
      %v288 = vshll.u32 %v227, 16
      %v290 = vrot.slane %v288, 5
      %v291 = vsel %vm277, %v286, %v290
      %v292 = vshrl.u32 %v227, 16
      %v294 = vrot.slane %v292, 4
      %v295 = vor.u32 %v294, %v290
      %v296 = vrot.slane %v295, 4
      %v298 = vshll.u32 %v259, 16
      %v300 = vrot.slane %v298, 5
      %v301 = vsel %vm277, %v296, %v300
      %v303 = vshrl.u32 %v228, 16
      %v305 = vrot.slane %v303, 4
      %v306 = vshll.u32 %v228, 16
      %v308 = vrot.slane %v306, 5
      %v309 = vor.u32 %v305, %v308
      %v310 = vrot.slane %v309, 4
      %v312 = vshll.u32 %v229, 16
      %v314 = vrot.slane %v312, 5
      %v315 = vsel %vm277, %v310, %v314
      %v316 = vshrl.u32 %v229, 16
      %v318 = vrot.slane %v316, 4
      %v319 = vor.u32 %v318, %v314
      %v320 = vrot.slane %v319, 4
      %v322 = vshll.u32 %v260, 16
      %v324 = vrot.slane %v322, 5
      %v325 = vsel %vm277, %v320, %v324
      %v327 = vshrl.u32 %v230, 16
      %v329 = vrot.slane %v327, 4
      %v330 = vshll.u32 %v230, 16
      %v332 = vrot.slane %v330, 5
      %v333 = vor.u32 %v329, %v332
      %v334 = vrot.slane %v333, 4
      %v336 = vshll.u32 %v231, 16
      %v338 = vrot.slane %v336, 5
      %v339 = vsel %vm277, %v334, %v338
      %v340 = vshrl.u32 %v231, 16
      %v342 = vrot.slane %v340, 4
      %v343 = vor.u32 %v342, %v338
      %v344 = vrot.slane %v343, 4
      %v346 = vshll.u32 %v261, 16
      %v348 = vrot.slane %v346, 5
      %v349 = vsel %vm277, %v344, %v348
      %v351 = vshrl.u32 %v232, 16
      %v353 = vrot.slane %v351, 4
      %v354 = vshll.u32 %v232, 16
      %v356 = vrot.slane %v354, 5
      %v357 = vor.u32 %v353, %v356
      %v358 = vrot.slane %v357, 4
      %v360 = vshll.u32 %v233, 16
      %v362 = vrot.slane %v360, 5
      %v363 = vsel %vm277, %v358, %v362
      %v364 = vshrl.u32 %v233, 16
      %v366 = vrot.slane %v364, 4
      %v367 = vor.u32 %v366, %v362
      %v368 = vrot.slane %v367, 4
      %v370 = vshll.u32 %v262, 16
      %v372 = vrot.slane %v370, 5
      %v373 = vsel %vm277, %v368, %v372
      %v375 = vshrl.u32 %v234, 16
      %v377 = vrot.slane %v375, 4
      %v378 = vshll.u32 %v234, 16
      %v380 = vrot.slane %v378, 5
      %v381 = vor.u32 %v377, %v380
      %v382 = vrot.slane %v381, 4
      %v384 = vshll.u32 %v235, 16
      %v386 = vrot.slane %v384, 5
      %v387 = vsel %vm277, %v382, %v386
      %v388 = vshrl.u32 %v235, 16
      %v390 = vrot.slane %v388, 4
      %v391 = vor.u32 %v390, %v386
      %v392 = vrot.slane %v391, 4
      %v394 = vshll.u32 %v263, 16
      %v396 = vrot.slane %v394, 5
      %v397 = vsel %vm277, %v392, %v396
      %v399 = vshrl.u32 %v236, 16
      %v401 = vrot.slane %v399, 4
      %v402 = vshll.u32 %v236, 16
      %v404 = vrot.slane %v402, 5
      %v405 = vor.u32 %v401, %v404
      %v406 = vrot.slane %v405, 4
      %v408 = vshll.u32 %v237, 16
      %v410 = vrot.slane %v408, 5
      %v411 = vsel %vm277, %v406, %v410
      %v412 = vshrl.u32 %v237, 16
      %v414 = vrot.slane %v412, 4
      %v415 = vor.u32 %v414, %v410
      %v416 = vrot.slane %v415, 4
      %v418 = vshll.u32 %v264, 16
      %v420 = vrot.slane %v418, 5
      %v421 = vsel %vm277, %v416, %v420
      %v423 = vshrl.u32 %v238, 16
      %v425 = vrot.slane %v423, 4
      %v426 = vshll.u32 %v238, 16
      %v428 = vrot.slane %v426, 5
      %v429 = vor.u32 %v425, %v428
      %v430 = vrot.slane %v429, 4
      %v432 = vshll.u32 %v239, 16
      %v434 = vrot.slane %v432, 5
      %v435 = vsel %vm277, %v430, %v434
      %v436 = vshrl.u32 %v239, 16
      %v438 = vrot.slane %v436, 4
      %v439 = vor.u32 %v438, %v434
      %v440 = vrot.slane %v439, 4
      %v442 = vshll.u32 %v265, 16
      %v444 = vrot.slane %v442, 5
      %v445 = vsel %vm277, %v440, %v444
      %v447 = vshrl.u32 %v240, 16
      %v449 = vrot.slane %v447, 4
      %v450 = vshll.u32 %v240, 16
      %v452 = vrot.slane %v450, 5
      %v453 = vor.u32 %v449, %v452
      %v454 = vrot.slane %v453, 4
      %v456 = vshll.u32 %v241, 16
      %v458 = vrot.slane %v456, 5
      %v459 = vsel %vm277, %v454, %v458
      %v460 = vshrl.u32 %v241, 16
      %v462 = vrot.slane %v460, 4
      %v463 = vor.u32 %v462, %v458
      %v464 = vrot.slane %v463, 4
      %v466 = vshll.u32 %v266, 16
      %v468 = vrot.slane %v466, 5
      %v469 = vsel %vm277, %v464, %v468
      %v471 = vshrl.u32 %v242, 16
      %v473 = vrot.slane %v471, 4
      %v474 = vshll.u32 %v242, 16
      %v476 = vrot.slane %v474, 5
      %v477 = vor.u32 %v473, %v476
      %v478 = vrot.slane %v477, 4
      %v480 = vshll.u32 %v243, 16
      %v482 = vrot.slane %v480, 5
      %v483 = vsel %vm277, %v478, %v482
      %v484 = vshrl.u32 %v243, 16
      %v486 = vrot.slane %v484, 4
      %v487 = vor.u32 %v486, %v482
      %v488 = vrot.slane %v487, 4
      %v490 = vshll.u32 %v267, 16
      %v492 = vrot.slane %v490, 5
      %v493 = vsel %vm277, %v488, %v492
      %v495 = vshrl.u32 %v244, 16
      %v497 = vrot.slane %v495, 4
      %v498 = vshll.u32 %v244, 16
      %v500 = vrot.slane %v498, 5
      %v501 = vor.u32 %v497, %v500
      %v502 = vrot.slane %v501, 4
      %v504 = vshll.u32 %v245, 16
      %v506 = vrot.slane %v504, 5
      %v507 = vsel %vm277, %v502, %v506
      %v508 = vshrl.u32 %v245, 16
      %v510 = vrot.slane %v508, 4
      %v511 = vor.u32 %v510, %v506
      %v512 = vrot.slane %v511, 4
      %v514 = vshll.u32 %v268, 16
      %v516 = vrot.slane %v514, 5
      %v517 = vsel %vm277, %v512, %v516
      %v519 = vshrl.u32 %v246, 16
      %v521 = vrot.slane %v519, 4
      %v522 = vshll.u32 %v246, 16
      %v524 = vrot.slane %v522, 5
      %v525 = vor.u32 %v521, %v524
      %v526 = vrot.slane %v525, 4
      %v528 = vshll.u32 %v247, 16
      %v530 = vrot.slane %v528, 5
      %v531 = vsel %vm277, %v526, %v530
      %v532 = vshrl.u32 %v247, 16
      %v534 = vrot.slane %v532, 4
      %v535 = vor.u32 %v534, %v530
      %v536 = vrot.slane %v535, 4
      %v538 = vshll.u32 %v269, 16
      %v540 = vrot.slane %v538, 5
      %v541 = vsel %vm277, %v536, %v540
      %v543 = vshrl.u32 %v248, 16
      %v545 = vrot.slane %v543, 4
      %v546 = vshll.u32 %v248, 16
      %v548 = vrot.slane %v546, 5
      %v549 = vor.u32 %v545, %v548
      %v550 = vrot.slane %v549, 4
      %v552 = vshll.u32 %v249, 16
      %v554 = vrot.slane %v552, 5
      %v555 = vsel %vm277, %v550, %v554
      %v556 = vshrl.u32 %v249, 16
      %v558 = vrot.slane %v556, 4
      %v559 = vor.u32 %v558, %v554
      %v560 = vrot.slane %v559, 4
      %v562 = vshll.u32 %v270, 16
      %v564 = vrot.slane %v562, 5
      %v565 = vsel %vm277, %v560, %v564
      %v567 = vshrl.u32 %v250, 16
      %v569 = vrot.slane %v567, 4
      %v570 = vshll.u32 %v250, 16
      %v572 = vrot.slane %v570, 5
      %v573 = vor.u32 %v569, %v572
      %v574 = vrot.slane %v573, 4
      %v576 = vshll.u32 %v251, 16
      %v578 = vrot.slane %v576, 5
      %v579 = vsel %vm277, %v574, %v578
      %v580 = vshrl.u32 %v251, 16
      %v582 = vrot.slane %v580, 4
      %v583 = vor.u32 %v582, %v578
      %v584 = vrot.slane %v583, 4
      %v586 = vshll.u32 %v271, 16
      %v588 = vrot.slane %v586, 5
      %v589 = vsel %vm277, %v584, %v588
      %v591 = vshrl.u32 %v252, 16
      %v593 = vrot.slane %v591, 4
      %v594 = vshll.u32 %v252, 16
      %v596 = vrot.slane %v594, 5
      %v597 = vor.u32 %v593, %v596
      %v598 = vrot.slane %v597, 4
      %v600 = vshll.u32 %v253, 16
      %v602 = vrot.slane %v600, 5
      %v603 = vsel %vm277, %v598, %v602
      %v604 = vshrl.u32 %v253, 16
      %v606 = vrot.slane %v604, 4
      %v607 = vor.u32 %v606, %v602
      %v608 = vrot.slane %v607, 4
      %v610 = vshll.u32 %v272, 16
      %v612 = vrot.slane %v610, 5
      %v613 = vsel %vm277, %v608, %v612
      %v615 = vshrl.u32 %v254, 16
      %v617 = vrot.slane %v615, 4
      %v618 = vshll.u32 %v254, 16
      %v620 = vrot.slane %v618, 5
      %v621 = vor.u32 %v617, %v620
      %v622 = vrot.slane %v621, 4
      %v624 = vshll.u32 %v255, 16
      %v626 = vrot.slane %v624, 5
      %v627 = vsel %vm277, %v622, %v626
      %v628 = vshrl.u32 %v255, 16
      %v630 = vrot.slane %v628, 4
      %v631 = vor.u32 %v630, %v626
      %v632 = vrot.slane %v631, 4
      %v634 = vshll.u32 %v273, 16
      %v636 = vrot.slane %v634, 5
      %v637 = vsel %vm277, %v632, %v636
      %v639 = vshrl.u32 %v256, 16
      %v641 = vrot.slane %v639, 4
      %v642 = vshll.u32 %v256, 16
      %v644 = vrot.slane %v642, 5
      %v645 = vor.u32 %v641, %v644
      %v646 = vrot.slane %v645, 4
      %v648 = vshll.u32 %v257, 16
      %v650 = vrot.slane %v648, 5
      %v651 = vsel %vm277, %v646, %v650
      %v652 = vshrl.u32 %v257, 16
      %v654 = vrot.slane %v652, 4
      %v655 = vor.u32 %v654, %v650
      %v656 = vrot.slane %v655, 4
      %v658 = vshll.u32 %v274, 16
      %v660 = vrot.slane %v658, 5
      %v661 = vsel %vm277, %v656, %v660
      %s662 = scalar_lea.vmem %s1, 2
      %v663 = vld [vmem:[%s662] sm:$0x3]
      %v664 = vunpack.c.l.b16 %v291
      %v665 = vunpack.c.l.b16 %v301
      %v666 = vunpack.c.l.b16 %v315
      %v667 = vunpack.c.l.b16 %v325
      %v668 = vunpack.c.l.b16 %v339
      %v669 = vunpack.c.l.b16 %v349
      %v670 = vunpack.c.l.b16 %v363
      %v671 = vunpack.c.l.b16 %v373
      %v672 = vunpack.c.l.b16 %v387
      %v673 = vunpack.c.l.b16 %v397
      %v674 = vunpack.c.l.b16 %v411
      %v675 = vunpack.c.l.b16 %v421
      %v676 = vunpack.c.l.b16 %v435
      %v677 = vunpack.c.l.b16 %v445
      %v678 = vunpack.c.l.b16 %v459
      %v679 = vunpack.c.l.b16 %v469
      %v680 = vunpack.c.l.b16 %v483
      %v681 = vunpack.c.l.b16 %v493
      %v682 = vunpack.c.l.b16 %v507
      %v683 = vunpack.c.l.b16 %v517
      %v684 = vunpack.c.l.b16 %v531
      %v685 = vunpack.c.l.b16 %v541
      %v686 = vunpack.c.l.b16 %v555
      %v687 = vunpack.c.l.b16 %v565
      %v688 = vunpack.c.l.b16 %v579
      %v689 = vunpack.c.l.b16 %v589
      %v690 = vunpack.c.l.b16 %v603
      %v691 = vunpack.c.l.b16 %v613
      %v692 = vunpack.c.l.b16 %v627
      %v693 = vunpack.c.l.b16 %v637
      %v694 = vunpack.c.l.b16 %v651
      %v695 = vunpack.c.l.b16 %v661
      %v696 = vpack.c.b16 %v665, %v664
      %v697 = vpack.c.b16 %v667, %v666
      %v698 = vpack.c.b16 %v669, %v668
      %v699 = vpack.c.b16 %v671, %v670
      %v700 = vpack.c.b16 %v673, %v672
      %v701 = vpack.c.b16 %v675, %v674
      %v702 = vpack.c.b16 %v677, %v676
      %v703 = vpack.c.b16 %v679, %v678
      %v704 = vpack.c.b16 %v681, %v680
      %v705 = vpack.c.b16 %v683, %v682
      %v706 = vpack.c.b16 %v685, %v684
      %v707 = vpack.c.b16 %v687, %v686
      %v708 = vpack.c.b16 %v689, %v688
      %v709 = vpack.c.b16 %v691, %v690
      %v710 = vpack.c.b16 %v693, %v692
      %v711 = vpack.c.b16 %v695, %v694
      %vm712 = vcmask 31744
      %v714 = vsel %vm712, %v696, 0
      %v717 = vsel %vm712, %v697, 0
      %v720 = vsel %vm712, %v698, 0
      %v723 = vsel %vm712, %v699, 0
      %v726 = vsel %vm712, %v700, 0
      %v729 = vsel %vm712, %v701, 0
      %v732 = vsel %vm712, %v702, 0
      %v735 = vsel %vm712, %v703, 0
      %v738 = vsel %vm712, %v704, 0
      %v741 = vsel %vm712, %v705, 0
      %v744 = vsel %vm712, %v706, 0
      %v747 = vsel %vm712, %v707, 0
      %v750 = vsel %vm712, %v708, 0
      %v753 = vsel %vm712, %v709, 0
      %v756 = vsel %vm712, %v710, 0
      %v759 = vsel %vm712, %v711, 0
      %vm761 = vcmask 1041408
      %v763 = vsel %vm761, %v663, 0
      %765 = vmatprep.subr.bf16.mxu0 0
      %766 = vmatpush1.bf16.msra.mxu0 0
      %767 = vmatprep.subr.bf16.mxu0 0
      %768 = vmatpush1.bf16.msra.mxu0 0
      %769 = vmatprep.subr.bf16.mxu0 0
      %770 = vmatpush1.bf16.msra.mxu0 0
      %771 = vmatprep.subr.bf16.mxu0 0
      %772 = vmatpush1.bf16.msra.mxu0 0
      %773 = vmatprep.subr.bf16.mxu0 0
      %774 = vmatpush1.bf16.msra.mxu0 0
      %775 = vmatprep.subr.bf16.mxu0 0
      %776 = vmatpush1.bf16.msra.mxu0 0
      %777 = vmatprep.subr.bf16.mxu0 0
      %778 = vmatpush1.bf16.msra.mxu0 0
      %779 = vmatprep.subr.bf16.mxu0 0
      %780 = vmatpush1.bf16.msra.mxu0 %v763
      %781 = vmatprep.subr.bf16.mxu0 0
      %782 = vmatpush2.bf16.msra.mxu0 0
      %783 = vmatprep.subr.bf16.mxu0 0
      %784 = vmatpush2.bf16.msra.mxu0 0
      %785 = vmatprep.subr.bf16.mxu0 0
      %786 = vmatpush2.bf16.msra.mxu0 0
      %787 = vmatprep.subr.bf16.mxu0 0
      %788 = vmatpush2.bf16.msra.mxu0 0
      %789 = vmatprep.subr.bf16.mxu0 0
      %790 = vmatpush2.bf16.msra.mxu0 0
      %791 = vmatprep.subr.bf16.mxu0 0
      %792 = vmatpush2.bf16.msra.mxu0 0
      %793 = vmatprep.subr.bf16.mxu0 0
      %794 = vmatpush2.bf16.msra.mxu0 0
      %795 = vmatprep.subr.bf16.mxu0 0
      %796 = vmatpush2.bf16.msra.mxu0 0
      %797 = vmatprep.mubr.bf16.mxu0 0
      %798 = vmatmul.mubr.bf16.gmra.mxu0 %v714
      %v799 = vpop.f32.mrf.mxu0
      %v800 = vadd.f32 0.0, %v799
      %v801 = vpop.f32.mrf.mxu0
      %v802 = vpop.f32.mrf.mxu0
      %v803 = vadd.f32 0.0, %v802
      %v804 = vpop.f32.mrf.mxu0
      %805 = vmatprep.mubr.bf16.mxu0 0
      %806 = vmatmul.mubr.bf16.gmra.mxu0 %v717
      %v807 = vpop.f32.mrf.mxu0
      %v808 = vadd.f32 0.0, %v807
      %v809 = vpop.f32.mrf.mxu0
      %v810 = vpop.f32.mrf.mxu0
      %v811 = vadd.f32 0.0, %v810
      %v812 = vpop.f32.mrf.mxu0
      %813 = vmatprep.mubr.bf16.mxu0 0
      %814 = vmatmul.mubr.bf16.gmra.mxu0 %v720
      %v815 = vpop.f32.mrf.mxu0
      %v816 = vadd.f32 0.0, %v815
      %v817 = vpop.f32.mrf.mxu0
      %v818 = vpop.f32.mrf.mxu0
      %v819 = vadd.f32 0.0, %v818
      %v820 = vpop.f32.mrf.mxu0
      %821 = vmatprep.mubr.bf16.mxu0 0
      %822 = vmatmul.mubr.bf16.gmra.mxu0 %v723
      %v823 = vpop.f32.mrf.mxu0
      %v824 = vadd.f32 0.0, %v823
      %v825 = vpop.f32.mrf.mxu0
      %v826 = vpop.f32.mrf.mxu0
      %v827 = vadd.f32 0.0, %v826
      %v828 = vpop.f32.mrf.mxu0
      %829 = vmatprep.mubr.bf16.mxu0 0
      %830 = vmatmul.mubr.bf16.gmra.mxu0 %v726
      %v831 = vpop.f32.mrf.mxu0
      %v832 = vadd.f32 0.0, %v831
      %v833 = vpop.f32.mrf.mxu0
      %v834 = vpop.f32.mrf.mxu0
      %v835 = vadd.f32 0.0, %v834
      %v836 = vpop.f32.mrf.mxu0
      %837 = vmatprep.mubr.bf16.mxu0 0
      %838 = vmatmul.mubr.bf16.gmra.mxu0 %v729
      %v839 = vpop.f32.mrf.mxu0
      %v840 = vadd.f32 0.0, %v839
      %v841 = vpop.f32.mrf.mxu0
      %v842 = vpop.f32.mrf.mxu0
      %v843 = vadd.f32 0.0, %v842
      %v844 = vpop.f32.mrf.mxu0
      %845 = vmatprep.mubr.bf16.mxu0 0
      %846 = vmatmul.mubr.bf16.gmra.mxu0 %v732
      %v847 = vpop.f32.mrf.mxu0
      %v848 = vadd.f32 0.0, %v847
      %v849 = vpop.f32.mrf.mxu0
      %v850 = vpop.f32.mrf.mxu0
      %v851 = vadd.f32 0.0, %v850
      %v852 = vpop.f32.mrf.mxu0
      %853 = vmatprep.mubr.bf16.mxu0 0
      %854 = vmatmul.mubr.bf16.gmra.mxu0 %v735
      %v855 = vpop.f32.mrf.mxu0
      %v856 = vadd.f32 0.0, %v855
      %v857 = vpop.f32.mrf.mxu0
      %v858 = vpop.f32.mrf.mxu0
      %v859 = vadd.f32 0.0, %v858
      %v860 = vpop.f32.mrf.mxu0
      %861 = vmatprep.mubr.bf16.mxu0 0
      %862 = vmatmul.mubr.bf16.gmra.mxu0 %v738
      %v863 = vpop.f32.mrf.mxu0
      %v864 = vadd.f32 0.0, %v863
      %v865 = vpop.f32.mrf.mxu0
      %v866 = vpop.f32.mrf.mxu0
      %v867 = vadd.f32 0.0, %v866
      %v868 = vpop.f32.mrf.mxu0
      %869 = vmatprep.mubr.bf16.mxu0 0
      %870 = vmatmul.mubr.bf16.gmra.mxu0 %v741
      %v871 = vpop.f32.mrf.mxu0
      %v872 = vadd.f32 0.0, %v871
      %v873 = vpop.f32.mrf.mxu0
      %v874 = vpop.f32.mrf.mxu0
      %v875 = vadd.f32 0.0, %v874
      %v876 = vpop.f32.mrf.mxu0
      %877 = vmatprep.mubr.bf16.mxu0 0
      %878 = vmatmul.mubr.bf16.gmra.mxu0 %v744
      %v879 = vpop.f32.mrf.mxu0
      %v880 = vadd.f32 0.0, %v879
      %v881 = vpop.f32.mrf.mxu0
      %v882 = vpop.f32.mrf.mxu0
      %v883 = vadd.f32 0.0, %v882
      %v884 = vpop.f32.mrf.mxu0
      %885 = vmatprep.mubr.bf16.mxu0 0
      %886 = vmatmul.mubr.bf16.gmra.mxu0 %v747
      %v887 = vpop.f32.mrf.mxu0
      %v888 = vadd.f32 0.0, %v887
      %v889 = vpop.f32.mrf.mxu0
      %v890 = vpop.f32.mrf.mxu0
      %v891 = vadd.f32 0.0, %v890
      %v892 = vpop.f32.mrf.mxu0
      %893 = vmatprep.mubr.bf16.mxu0 0
      %894 = vmatmul.mubr.bf16.gmra.mxu0 %v750
      %v895 = vpop.f32.mrf.mxu0
      %v896 = vadd.f32 0.0, %v895
      %v897 = vpop.f32.mrf.mxu0
      %v898 = vpop.f32.mrf.mxu0
      %v899 = vadd.f32 0.0, %v898
      %v900 = vpop.f32.mrf.mxu0
      %901 = vmatprep.mubr.bf16.mxu0 0
      %902 = vmatmul.mubr.bf16.gmra.mxu0 %v753
      %v903 = vpop.f32.mrf.mxu0
      %v904 = vadd.f32 0.0, %v903
      %v905 = vpop.f32.mrf.mxu0
      %v906 = vpop.f32.mrf.mxu0
      %v907 = vadd.f32 0.0, %v906
      %v908 = vpop.f32.mrf.mxu0
      %909 = vmatprep.mubr.bf16.mxu0 0
      %910 = vmatmul.mubr.bf16.gmra.mxu0 %v756
      %v911 = vpop.f32.mrf.mxu0
      %v912 = vadd.f32 0.0, %v911
      %v913 = vpop.f32.mrf.mxu0
      %v914 = vpop.f32.mrf.mxu0
      %v915 = vadd.f32 0.0, %v914
      %v916 = vpop.f32.mrf.mxu0
      %917 = vmatprep.mubr.bf16.mxu0 0
      %918 = vmatmul.mubr.bf16.gmra.mxu0 %v759
      %v919 = vpop.f32.mrf.mxu0
      %v920 = vadd.f32 0.0, %v919
      %v921 = vpop.f32.mrf.mxu0
      %v922 = vpop.f32.mrf.mxu0
      %v923 = vadd.f32 0.0, %v922
      %v924 = vpop.f32.mrf.mxu0
      %925 = vdwg.mxu0
      %v958 = vunpack.c.l.b16 %v226
      %v959 = vunpack.c.l.b16 %v227
      %v960 = vunpack.c.l.b16 %v228
      %v961 = vunpack.c.l.b16 %v229
      %v962 = vunpack.c.l.b16 %v230
      %v963 = vunpack.c.l.b16 %v231
      %v964 = vunpack.c.l.b16 %v232
      %v965 = vunpack.c.l.b16 %v233
      %v966 = vunpack.c.l.b16 %v234
      %v967 = vunpack.c.l.b16 %v235
      %v968 = vunpack.c.l.b16 %v236
      %v969 = vunpack.c.l.b16 %v237
      %v970 = vunpack.c.l.b16 %v238
      %v971 = vunpack.c.l.b16 %v239
      %v972 = vunpack.c.l.b16 %v240
      %v973 = vunpack.c.l.b16 %v241
      %v974 = vunpack.c.l.b16 %v242
      %v975 = vunpack.c.l.b16 %v243
      %v976 = vunpack.c.l.b16 %v244
      %v977 = vunpack.c.l.b16 %v245
      %v978 = vunpack.c.l.b16 %v246
      %v979 = vunpack.c.l.b16 %v247
      %v980 = vunpack.c.l.b16 %v248
      %v981 = vunpack.c.l.b16 %v249
      %v982 = vunpack.c.l.b16 %v250
      %v983 = vunpack.c.l.b16 %v251
      %v984 = vunpack.c.l.b16 %v252
      %v985 = vunpack.c.l.b16 %v253
      %v986 = vunpack.c.l.b16 %v254
      %v987 = vunpack.c.l.b16 %v255
      %v988 = vunpack.c.l.b16 %v256
      %v989 = vunpack.c.l.b16 %v257
      %v990 = vpack.c.b16 %v959, %v958
      %v991 = vpack.c.b16 %v961, %v960
      %v992 = vpack.c.b16 %v963, %v962
      %v993 = vpack.c.b16 %v965, %v964
      %v994 = vpack.c.b16 %v967, %v966
      %v995 = vpack.c.b16 %v969, %v968
      %v996 = vpack.c.b16 %v971, %v970
      %v997 = vpack.c.b16 %v973, %v972
      %v998 = vpack.c.b16 %v975, %v974
      %v999 = vpack.c.b16 %v977, %v976
      %v1000 = vpack.c.b16 %v979, %v978
      %v1001 = vpack.c.b16 %v981, %v980
      %v1002 = vpack.c.b16 %v983, %v982
      %v1003 = vpack.c.b16 %v985, %v984
      %v1004 = vpack.c.b16 %v987, %v986
      %v1005 = vpack.c.b16 %v989, %v988
      %v1007 = vsel %vm712, %v990, 0
      %v1010 = vsel %vm712, %v991, 0
      %v1013 = vsel %vm712, %v992, 0
      %v1016 = vsel %vm712, %v993, 0
      %v1019 = vsel %vm712, %v994, 0
      %v1022 = vsel %vm712, %v995, 0
      %v1025 = vsel %vm712, %v996, 0
      %v1028 = vsel %vm712, %v997, 0
      %v1031 = vsel %vm712, %v998, 0
      %v1034 = vsel %vm712, %v999, 0
      %v1037 = vsel %vm712, %v1000, 0
      %v1040 = vsel %vm712, %v1001, 0
      %v1043 = vsel %vm712, %v1002, 0
      %v1046 = vsel %vm712, %v1003, 0
      %v1049 = vsel %vm712, %v1004, 0
      %v1052 = vsel %vm712, %v1005, 0
      %v1055 = vsel %vm761, %v258, 0
      %1057 = vmatprep.subr.bf16.mxu0 0
      %1058 = vmatpush1.bf16.msra.mxu0 0
      %1059 = vmatprep.subr.bf16.mxu0 0
      %1060 = vmatpush1.bf16.msra.mxu0 0
      %1061 = vmatprep.subr.bf16.mxu0 0
      %1062 = vmatpush1.bf16.msra.mxu0 0
      %1063 = vmatprep.subr.bf16.mxu0 0
      %1064 = vmatpush1.bf16.msra.mxu0 0
      %1065 = vmatprep.subr.bf16.mxu0 0
      %1066 = vmatpush1.bf16.msra.mxu0 0
      %1067 = vmatprep.subr.bf16.mxu0 0
      %1068 = vmatpush1.bf16.msra.mxu0 0
      %1069 = vmatprep.subr.bf16.mxu0 0
      %1070 = vmatpush1.bf16.msra.mxu0 0
      %1071 = vmatprep.subr.bf16.mxu0 0
      %1072 = vmatpush1.bf16.msra.mxu0 %v1055
      %1073 = vmatprep.subr.bf16.mxu0 0
      %1074 = vmatpush2.bf16.msra.mxu0 0
      %1075 = vmatprep.subr.bf16.mxu0 0
      %1076 = vmatpush2.bf16.msra.mxu0 0
      %1077 = vmatprep.subr.bf16.mxu0 0
      %1078 = vmatpush2.bf16.msra.mxu0 0
      %1079 = vmatprep.subr.bf16.mxu0 0
      %1080 = vmatpush2.bf16.msra.mxu0 0
      %1081 = vmatprep.subr.bf16.mxu0 0
      %1082 = vmatpush2.bf16.msra.mxu0 0
      %1083 = vmatprep.subr.bf16.mxu0 0
      %1084 = vmatpush2.bf16.msra.mxu0 0
      %1085 = vmatprep.subr.bf16.mxu0 0
      %1086 = vmatpush2.bf16.msra.mxu0 0
      %1087 = vmatprep.subr.bf16.mxu0 0
      %1088 = vmatpush2.bf16.msra.mxu0 0
      %1089 = vmatprep.mubr.bf16.mxu0 0
      %1090 = vmatmul.mubr.bf16.gmra.mxu0 %v1007
      %v1091 = vpop.f32.mrf.mxu0
      %v1092 = vadd.f32 %v800, %v1091
      %v1093 = vpop.f32.mrf.mxu0
      %v1094 = vpop.f32.mrf.mxu0
      %v1095 = vadd.f32 %v803, %v1094
      %v1096 = vpop.f32.mrf.mxu0
      %1097 = vmatprep.mubr.bf16.mxu0 0
      %1098 = vmatmul.mubr.bf16.gmra.mxu0 %v1010
      %v1099 = vpop.f32.mrf.mxu0
      %v1100 = vadd.f32 %v808, %v1099
      %v1101 = vpop.f32.mrf.mxu0
      %v1102 = vpop.f32.mrf.mxu0
      %v1103 = vadd.f32 %v811, %v1102
      %v1104 = vpop.f32.mrf.mxu0
      %1105 = vmatprep.mubr.bf16.mxu0 0
      %1106 = vmatmul.mubr.bf16.gmra.mxu0 %v1013
      %v1107 = vpop.f32.mrf.mxu0
      %v1108 = vadd.f32 %v816, %v1107
      %v1109 = vpop.f32.mrf.mxu0
      %v1110 = vpop.f32.mrf.mxu0
      %v1111 = vadd.f32 %v819, %v1110
      %v1112 = vpop.f32.mrf.mxu0
      %1113 = vmatprep.mubr.bf16.mxu0 0
      %1114 = vmatmul.mubr.bf16.gmra.mxu0 %v1016
      %v1115 = vpop.f32.mrf.mxu0
      %v1116 = vadd.f32 %v824, %v1115
      %v1117 = vpop.f32.mrf.mxu0
      %v1118 = vpop.f32.mrf.mxu0
      %v1119 = vadd.f32 %v827, %v1118
      %v1120 = vpop.f32.mrf.mxu0
      %1121 = vmatprep.mubr.bf16.mxu0 0
      %1122 = vmatmul.mubr.bf16.gmra.mxu0 %v1019
      %v1123 = vpop.f32.mrf.mxu0
      %v1124 = vadd.f32 %v832, %v1123
      %v1125 = vpop.f32.mrf.mxu0
      %v1126 = vpop.f32.mrf.mxu0
      %v1127 = vadd.f32 %v835, %v1126
      %v1128 = vpop.f32.mrf.mxu0
      %1129 = vmatprep.mubr.bf16.mxu0 0
      %1130 = vmatmul.mubr.bf16.gmra.mxu0 %v1022
      %v1131 = vpop.f32.mrf.mxu0
      %v1132 = vadd.f32 %v840, %v1131
      %v1133 = vpop.f32.mrf.mxu0
      %v1134 = vpop.f32.mrf.mxu0
      %v1135 = vadd.f32 %v843, %v1134
      %v1136 = vpop.f32.mrf.mxu0
      %1137 = vmatprep.mubr.bf16.mxu0 0
      %1138 = vmatmul.mubr.bf16.gmra.mxu0 %v1025
      %v1139 = vpop.f32.mrf.mxu0
      %v1140 = vadd.f32 %v848, %v1139
      %v1141 = vpop.f32.mrf.mxu0
      %v1142 = vpop.f32.mrf.mxu0
      %v1143 = vadd.f32 %v851, %v1142
      %v1144 = vpop.f32.mrf.mxu0
      %1145 = vmatprep.mubr.bf16.mxu0 0
      %1146 = vmatmul.mubr.bf16.gmra.mxu0 %v1028
      %v1147 = vpop.f32.mrf.mxu0
      %v1148 = vadd.f32 %v856, %v1147
      %v1149 = vpop.f32.mrf.mxu0
      %v1150 = vpop.f32.mrf.mxu0
      %v1151 = vadd.f32 %v859, %v1150
      %v1152 = vpop.f32.mrf.mxu0
      %1153 = vmatprep.mubr.bf16.mxu0 0
      %1154 = vmatmul.mubr.bf16.gmra.mxu0 %v1031
      %v1155 = vpop.f32.mrf.mxu0
      %v1156 = vadd.f32 %v864, %v1155
      %v1157 = vpop.f32.mrf.mxu0
      %v1158 = vpop.f32.mrf.mxu0
      %v1159 = vadd.f32 %v867, %v1158
      %v1160 = vpop.f32.mrf.mxu0
      %1161 = vmatprep.mubr.bf16.mxu0 0
      %1162 = vmatmul.mubr.bf16.gmra.mxu0 %v1034
      %v1163 = vpop.f32.mrf.mxu0
      %v1164 = vadd.f32 %v872, %v1163
      %v1165 = vpop.f32.mrf.mxu0
      %v1166 = vpop.f32.mrf.mxu0
      %v1167 = vadd.f32 %v875, %v1166
      %v1168 = vpop.f32.mrf.mxu0
      %1169 = vmatprep.mubr.bf16.mxu0 0
      %1170 = vmatmul.mubr.bf16.gmra.mxu0 %v1037
      %v1171 = vpop.f32.mrf.mxu0
      %v1172 = vadd.f32 %v880, %v1171
      %v1173 = vpop.f32.mrf.mxu0
      %v1174 = vpop.f32.mrf.mxu0
      %v1175 = vadd.f32 %v883, %v1174
      %v1176 = vpop.f32.mrf.mxu0
      %1177 = vmatprep.mubr.bf16.mxu0 0
      %1178 = vmatmul.mubr.bf16.gmra.mxu0 %v1040
      %v1179 = vpop.f32.mrf.mxu0
      %v1180 = vadd.f32 %v888, %v1179
      %v1181 = vpop.f32.mrf.mxu0
      %v1182 = vpop.f32.mrf.mxu0
      %v1183 = vadd.f32 %v891, %v1182
      %v1184 = vpop.f32.mrf.mxu0
      %1185 = vmatprep.mubr.bf16.mxu0 0
      %1186 = vmatmul.mubr.bf16.gmra.mxu0 %v1043
      %v1187 = vpop.f32.mrf.mxu0
      %v1188 = vadd.f32 %v896, %v1187
      %v1189 = vpop.f32.mrf.mxu0
      %v1190 = vpop.f32.mrf.mxu0
      %v1191 = vadd.f32 %v899, %v1190
      %v1192 = vpop.f32.mrf.mxu0
      %1193 = vmatprep.mubr.bf16.mxu0 0
      %1194 = vmatmul.mubr.bf16.gmra.mxu0 %v1046
      %v1195 = vpop.f32.mrf.mxu0
      %v1196 = vadd.f32 %v904, %v1195
      %v1197 = vpop.f32.mrf.mxu0
      %v1198 = vpop.f32.mrf.mxu0
      %v1199 = vadd.f32 %v907, %v1198
      %v1200 = vpop.f32.mrf.mxu0
      %1201 = vmatprep.mubr.bf16.mxu0 0
      %1202 = vmatmul.mubr.bf16.gmra.mxu0 %v1049
      %v1203 = vpop.f32.mrf.mxu0
      %v1204 = vadd.f32 %v912, %v1203
      %v1205 = vpop.f32.mrf.mxu0
      %v1206 = vpop.f32.mrf.mxu0
      %v1207 = vadd.f32 %v915, %v1206
      %v1208 = vpop.f32.mrf.mxu0
      %1209 = vmatprep.mubr.bf16.mxu0 0
      %1210 = vmatmul.mubr.bf16.gmra.mxu0 %v1052
      %v1211 = vpop.f32.mrf.mxu0
      %v1212 = vadd.f32 %v920, %v1211
      %v1213 = vpop.f32.mrf.mxu0
      %v1214 = vpop.f32.mrf.mxu0
      %v1215 = vadd.f32 %v923, %v1214
      %v1216 = vpop.f32.mrf.mxu0
      %1217 = vdwg.mxu0
      %v1218 = vld [vmem:[%s225] sm:$0xe]
      %v1219 = vld [vmem:[%s225 + $0xc] sm:$0xe]
      %v1220 = vld [vmem:[%s225 + $0x18] sm:$0xe]
      %v1221 = vld [vmem:[%s225 + $0x24] sm:$0xe]
      %v1222 = vld [vmem:[%s225 + $0x30] sm:$0xe]
      %v1223 = vld [vmem:[%s225 + $0x3c] sm:$0xe]
      %v1224 = vld [vmem:[%s225 + $0x48] sm:$0xe]
      %v1225 = vld [vmem:[%s225 + $0x54] sm:$0xe]
      %v1226 = vld [vmem:[%s225 + $0x60] sm:$0xe]
      %v1227 = vld [vmem:[%s225 + $0x6c] sm:$0xe]
      %v1228 = vld [vmem:[%s225 + $0x78] sm:$0xe]
      %v1229 = vld [vmem:[%s225 + $0x84] sm:$0xe]
      %v1230 = vld [vmem:[%s225 + $0x90] sm:$0xe]
      %v1231 = vld [vmem:[%s225 + $0x9c] sm:$0xe]
      %v1232 = vld [vmem:[%s225 + $0xa8] sm:$0xe]
      %v1233 = vld [vmem:[%s225 + $0xb4] sm:$0xe]
      %vm1266 = vcmask 1042432
      %vm1267 = vcmask 1046532
      %vm1268 = vmor %vm1266, %vm1267
      %v1269 = vrot.slane %v1218, 5
      %v1270 = vrot.slane %v1269, 4
      %v1271 = vrot.slane %v227, 5
      %v1272 = vsel %vm1268, %v1270, %v1271
      %v1273 = vrot.slane %v1271, 4
      %v1274 = vrot.slane %v259, 5
      %v1275 = vsel %vm1268, %v1273, %v1274
      %v1276 = vrot.slane %v1219, 5
      %v1277 = vrot.slane %v1276, 4
      %v1278 = vrot.slane %v229, 5
      %v1279 = vsel %vm1268, %v1277, %v1278
      %v1280 = vrot.slane %v1278, 4
      %v1281 = vrot.slane %v260, 5
      %v1282 = vsel %vm1268, %v1280, %v1281
      %v1283 = vrot.slane %v1220, 5
      %v1284 = vrot.slane %v1283, 4
      %v1285 = vrot.slane %v231, 5
      %v1286 = vsel %vm1268, %v1284, %v1285
      %v1287 = vrot.slane %v1285, 4
      %v1288 = vrot.slane %v261, 5
      %v1289 = vsel %vm1268, %v1287, %v1288
      %v1290 = vrot.slane %v1221, 5
      %v1291 = vrot.slane %v1290, 4
      %v1292 = vrot.slane %v233, 5
      %v1293 = vsel %vm1268, %v1291, %v1292
      %v1294 = vrot.slane %v1292, 4
      %v1295 = vrot.slane %v262, 5
      %v1296 = vsel %vm1268, %v1294, %v1295
      %v1297 = vrot.slane %v1222, 5
      %v1298 = vrot.slane %v1297, 4
      %v1299 = vrot.slane %v235, 5
      %v1300 = vsel %vm1268, %v1298, %v1299
      %v1301 = vrot.slane %v1299, 4
      %v1302 = vrot.slane %v263, 5
      %v1303 = vsel %vm1268, %v1301, %v1302
      %v1304 = vrot.slane %v1223, 5
      %v1305 = vrot.slane %v1304, 4
      %v1306 = vrot.slane %v237, 5
      %v1307 = vsel %vm1268, %v1305, %v1306
      %v1308 = vrot.slane %v1306, 4
      %v1309 = vrot.slane %v264, 5
      %v1310 = vsel %vm1268, %v1308, %v1309
      %v1311 = vrot.slane %v1224, 5
      %v1312 = vrot.slane %v1311, 4
      %v1313 = vrot.slane %v239, 5
      %v1314 = vsel %vm1268, %v1312, %v1313
      %v1315 = vrot.slane %v1313, 4
      %v1316 = vrot.slane %v265, 5
      %v1317 = vsel %vm1268, %v1315, %v1316
      %v1318 = vrot.slane %v1225, 5
      %v1319 = vrot.slane %v1318, 4
      %v1320 = vrot.slane %v241, 5
      %v1321 = vsel %vm1268, %v1319, %v1320
      %v1322 = vrot.slane %v1320, 4
      %v1323 = vrot.slane %v266, 5
      %v1324 = vsel %vm1268, %v1322, %v1323
      %v1325 = vrot.slane %v1226, 5
      %v1326 = vrot.slane %v1325, 4
      %v1327 = vrot.slane %v243, 5
      %v1328 = vsel %vm1268, %v1326, %v1327
      %v1329 = vrot.slane %v1327, 4
      %v1330 = vrot.slane %v267, 5
      %v1331 = vsel %vm1268, %v1329, %v1330
      %v1332 = vrot.slane %v1227, 5
      %v1333 = vrot.slane %v1332, 4
      %v1334 = vrot.slane %v245, 5
      %v1335 = vsel %vm1268, %v1333, %v1334
      %v1336 = vrot.slane %v1334, 4
      %v1337 = vrot.slane %v268, 5
      %v1338 = vsel %vm1268, %v1336, %v1337
      %v1339 = vrot.slane %v1228, 5
      %v1340 = vrot.slane %v1339, 4
      %v1341 = vrot.slane %v247, 5
      %v1342 = vsel %vm1268, %v1340, %v1341
      %v1343 = vrot.slane %v1341, 4
      %v1344 = vrot.slane %v269, 5
      %v1345 = vsel %vm1268, %v1343, %v1344
      %v1346 = vrot.slane %v1229, 5
      %v1347 = vrot.slane %v1346, 4
      %v1348 = vrot.slane %v249, 5
      %v1349 = vsel %vm1268, %v1347, %v1348
      %v1350 = vrot.slane %v1348, 4
      %v1351 = vrot.slane %v270, 5
      %v1352 = vsel %vm1268, %v1350, %v1351
      %v1353 = vrot.slane %v1230, 5
      %v1354 = vrot.slane %v1353, 4
      %v1355 = vrot.slane %v251, 5
      %v1356 = vsel %vm1268, %v1354, %v1355
      %v1357 = vrot.slane %v1355, 4
      %v1358 = vrot.slane %v271, 5
      %v1359 = vsel %vm1268, %v1357, %v1358
      %v1360 = vrot.slane %v1231, 5
      %v1361 = vrot.slane %v1360, 4
      %v1362 = vrot.slane %v253, 5
      %v1363 = vsel %vm1268, %v1361, %v1362
      %v1364 = vrot.slane %v1362, 4
      %v1365 = vrot.slane %v272, 5
      %v1366 = vsel %vm1268, %v1364, %v1365
      %v1367 = vrot.slane %v1232, 5
      %v1368 = vrot.slane %v1367, 4
      %v1369 = vrot.slane %v255, 5
      %v1370 = vsel %vm1268, %v1368, %v1369
      %v1371 = vrot.slane %v1369, 4
      %v1372 = vrot.slane %v273, 5
      %v1373 = vsel %vm1268, %v1371, %v1372
      %v1374 = vrot.slane %v1233, 5
      %v1375 = vrot.slane %v1374, 4
      %v1376 = vrot.slane %v257, 5
      %v1377 = vsel %vm1268, %v1375, %v1376
      %v1378 = vrot.slane %v1376, 4
      %v1379 = vrot.slane %v274, 5
      %v1380 = vsel %vm1268, %v1378, %v1379
      %s1381 = scalar_lea.vmem %s1, 4
      %v1382 = vld [vmem:[%s1381] sm:$0x3]
      %v1383 = vunpack.c.l.b16 %v1272
      %v1384 = vunpack.c.l.b16 %v1275
      %v1385 = vunpack.c.l.b16 %v1279
      %v1386 = vunpack.c.l.b16 %v1282
      %v1387 = vunpack.c.l.b16 %v1286
      %v1388 = vunpack.c.l.b16 %v1289
      %v1389 = vunpack.c.l.b16 %v1293
      %v1390 = vunpack.c.l.b16 %v1296
      %v1391 = vunpack.c.l.b16 %v1300
      %v1392 = vunpack.c.l.b16 %v1303
      %v1393 = vunpack.c.l.b16 %v1307
      %v1394 = vunpack.c.l.b16 %v1310
      %v1395 = vunpack.c.l.b16 %v1314
      %v1396 = vunpack.c.l.b16 %v1317
      %v1397 = vunpack.c.l.b16 %v1321
      %v1398 = vunpack.c.l.b16 %v1324
      %v1399 = vunpack.c.l.b16 %v1328
      %v1400 = vunpack.c.l.b16 %v1331
      %v1401 = vunpack.c.l.b16 %v1335
      %v1402 = vunpack.c.l.b16 %v1338
      %v1403 = vunpack.c.l.b16 %v1342
      %v1404 = vunpack.c.l.b16 %v1345
      %v1405 = vunpack.c.l.b16 %v1349
      %v1406 = vunpack.c.l.b16 %v1352
      %v1407 = vunpack.c.l.b16 %v1356
      %v1408 = vunpack.c.l.b16 %v1359
      %v1409 = vunpack.c.l.b16 %v1363
      %v1410 = vunpack.c.l.b16 %v1366
      %v1411 = vunpack.c.l.b16 %v1370
      %v1412 = vunpack.c.l.b16 %v1373
      %v1413 = vunpack.c.l.b16 %v1377
      %v1414 = vunpack.c.l.b16 %v1380
      %v1415 = vpack.c.b16 %v1384, %v1383
      %v1416 = vpack.c.b16 %v1386, %v1385
      %v1417 = vpack.c.b16 %v1388, %v1387
      %v1418 = vpack.c.b16 %v1390, %v1389
      %v1419 = vpack.c.b16 %v1392, %v1391
      %v1420 = vpack.c.b16 %v1394, %v1393
      %v1421 = vpack.c.b16 %v1396, %v1395
      %v1422 = vpack.c.b16 %v1398, %v1397
      %v1423 = vpack.c.b16 %v1400, %v1399
      %v1424 = vpack.c.b16 %v1402, %v1401
      %v1425 = vpack.c.b16 %v1404, %v1403
      %v1426 = vpack.c.b16 %v1406, %v1405
      %v1427 = vpack.c.b16 %v1408, %v1407
      %v1428 = vpack.c.b16 %v1410, %v1409
      %v1429 = vpack.c.b16 %v1412, %v1411
      %v1430 = vpack.c.b16 %v1414, %v1413
      %v1432 = vsel %vm712, %v1415, 0
      %v1435 = vsel %vm712, %v1416, 0
      %v1438 = vsel %vm712, %v1417, 0
      %v1441 = vsel %vm712, %v1418, 0
      %v1444 = vsel %vm712, %v1419, 0
      %v1447 = vsel %vm712, %v1420, 0
      %v1450 = vsel %vm712, %v1421, 0
      %v1453 = vsel %vm712, %v1422, 0
      %v1456 = vsel %vm712, %v1423, 0
      %v1459 = vsel %vm712, %v1424, 0
      %v1462 = vsel %vm712, %v1425, 0
      %v1465 = vsel %vm712, %v1426, 0
      %v1468 = vsel %vm712, %v1427, 0
      %v1471 = vsel %vm712, %v1428, 0
      %v1474 = vsel %vm712, %v1429, 0
      %v1477 = vsel %vm712, %v1430, 0
      %v1480 = vsel %vm761, %v1382, 0
      %1482 = vmatprep.subr.bf16.mxu0 0
      %1483 = vmatpush1.bf16.msra.mxu0 0
      %1484 = vmatprep.subr.bf16.mxu0 0
      %1485 = vmatpush1.bf16.msra.mxu0 0
      %1486 = vmatprep.subr.bf16.mxu0 0
      %1487 = vmatpush1.bf16.msra.mxu0 0
      %1488 = vmatprep.subr.bf16.mxu0 0
      %1489 = vmatpush1.bf16.msra.mxu0 0
      %1490 = vmatprep.subr.bf16.mxu0 0
      %1491 = vmatpush1.bf16.msra.mxu0 0
      %1492 = vmatprep.subr.bf16.mxu0 0
      %1493 = vmatpush1.bf16.msra.mxu0 0
      %1494 = vmatprep.subr.bf16.mxu0 0
      %1495 = vmatpush1.bf16.msra.mxu0 0
      %1496 = vmatprep.subr.bf16.mxu0 0
      %1497 = vmatpush1.bf16.msra.mxu0 %v1480
      %1498 = vmatprep.subr.bf16.mxu0 0
      %1499 = vmatpush2.bf16.msra.mxu0 0
      %1500 = vmatprep.subr.bf16.mxu0 0
      %1501 = vmatpush2.bf16.msra.mxu0 0
      %1502 = vmatprep.subr.bf16.mxu0 0
      %1503 = vmatpush2.bf16.msra.mxu0 0
      %1504 = vmatprep.subr.bf16.mxu0 0
      %1505 = vmatpush2.bf16.msra.mxu0 0
      %1506 = vmatprep.subr.bf16.mxu0 0
      %1507 = vmatpush2.bf16.msra.mxu0 0
      %1508 = vmatprep.subr.bf16.mxu0 0
      %1509 = vmatpush2.bf16.msra.mxu0 0
      %1510 = vmatprep.subr.bf16.mxu0 0
      %1511 = vmatpush2.bf16.msra.mxu0 0
      %1512 = vmatprep.subr.bf16.mxu0 0
      %1513 = vmatpush2.bf16.msra.mxu0 0
      %1514 = vmatprep.mubr.bf16.mxu0 0
      %1515 = vmatmul.mubr.bf16.gmra.mxu0 %v1432
      %v1516 = vpop.f32.mrf.mxu0
      %v1517 = vadd.f32 0.0, %v1516
      %v1518 = vpop.f32.mrf.mxu0
      %v1519 = vpop.f32.mrf.mxu0
      %v1520 = vadd.f32 0.0, %v1519
      %v1521 = vpop.f32.mrf.mxu0
      %1522 = vmatprep.mubr.bf16.mxu0 0
      %1523 = vmatmul.mubr.bf16.gmra.mxu0 %v1435
      %v1524 = vpop.f32.mrf.mxu0
      %v1525 = vadd.f32 0.0, %v1524
      %v1526 = vpop.f32.mrf.mxu0
      %v1527 = vpop.f32.mrf.mxu0
      %v1528 = vadd.f32 0.0, %v1527
      %v1529 = vpop.f32.mrf.mxu0
      %1530 = vmatprep.mubr.bf16.mxu0 0
      %1531 = vmatmul.mubr.bf16.gmra.mxu0 %v1438
      %v1532 = vpop.f32.mrf.mxu0
      %v1533 = vadd.f32 0.0, %v1532
      %v1534 = vpop.f32.mrf.mxu0
      %v1535 = vpop.f32.mrf.mxu0
      %v1536 = vadd.f32 0.0, %v1535
      %v1537 = vpop.f32.mrf.mxu0
      %1538 = vmatprep.mubr.bf16.mxu0 0
      %1539 = vmatmul.mubr.bf16.gmra.mxu0 %v1441
      %v1540 = vpop.f32.mrf.mxu0
      %v1541 = vadd.f32 0.0, %v1540
      %v1542 = vpop.f32.mrf.mxu0
      %v1543 = vpop.f32.mrf.mxu0
      %v1544 = vadd.f32 0.0, %v1543
      %v1545 = vpop.f32.mrf.mxu0
      %1546 = vmatprep.mubr.bf16.mxu0 0
      %1547 = vmatmul.mubr.bf16.gmra.mxu0 %v1444
      %v1548 = vpop.f32.mrf.mxu0
      %v1549 = vadd.f32 0.0, %v1548
      %v1550 = vpop.f32.mrf.mxu0
      %v1551 = vpop.f32.mrf.mxu0
      %v1552 = vadd.f32 0.0, %v1551
      %v1553 = vpop.f32.mrf.mxu0
      %1554 = vmatprep.mubr.bf16.mxu0 0
      %1555 = vmatmul.mubr.bf16.gmra.mxu0 %v1447
      %v1556 = vpop.f32.mrf.mxu0
      %v1557 = vadd.f32 0.0, %v1556
      %v1558 = vpop.f32.mrf.mxu0
      %v1559 = vpop.f32.mrf.mxu0
      %v1560 = vadd.f32 0.0, %v1559
      %v1561 = vpop.f32.mrf.mxu0
      %1562 = vmatprep.mubr.bf16.mxu0 0
      %1563 = vmatmul.mubr.bf16.gmra.mxu0 %v1450
      %v1564 = vpop.f32.mrf.mxu0
      %v1565 = vadd.f32 0.0, %v1564
      %v1566 = vpop.f32.mrf.mxu0
      %v1567 = vpop.f32.mrf.mxu0
      %v1568 = vadd.f32 0.0, %v1567
      %v1569 = vpop.f32.mrf.mxu0
      %1570 = vmatprep.mubr.bf16.mxu0 0
      %1571 = vmatmul.mubr.bf16.gmra.mxu0 %v1453
      %v1572 = vpop.f32.mrf.mxu0
      %v1573 = vadd.f32 0.0, %v1572
      %v1574 = vpop.f32.mrf.mxu0
      %v1575 = vpop.f32.mrf.mxu0
      %v1576 = vadd.f32 0.0, %v1575
      %v1577 = vpop.f32.mrf.mxu0
      %1578 = vmatprep.mubr.bf16.mxu0 0
      %1579 = vmatmul.mubr.bf16.gmra.mxu0 %v1456
      %v1580 = vpop.f32.mrf.mxu0
      %v1581 = vadd.f32 0.0, %v1580
      %v1582 = vpop.f32.mrf.mxu0
      %v1583 = vpop.f32.mrf.mxu0
      %v1584 = vadd.f32 0.0, %v1583
      %v1585 = vpop.f32.mrf.mxu0
      %1586 = vmatprep.mubr.bf16.mxu0 0
      %1587 = vmatmul.mubr.bf16.gmra.mxu0 %v1459
      %v1588 = vpop.f32.mrf.mxu0
      %v1589 = vadd.f32 0.0, %v1588
      %v1590 = vpop.f32.mrf.mxu0
      %v1591 = vpop.f32.mrf.mxu0
      %v1592 = vadd.f32 0.0, %v1591
      %v1593 = vpop.f32.mrf.mxu0
      %1594 = vmatprep.mubr.bf16.mxu0 0
      %1595 = vmatmul.mubr.bf16.gmra.mxu0 %v1462
      %v1596 = vpop.f32.mrf.mxu0
      %v1597 = vadd.f32 0.0, %v1596
      %v1598 = vpop.f32.mrf.mxu0
      %v1599 = vpop.f32.mrf.mxu0
      %v1600 = vadd.f32 0.0, %v1599
      %v1601 = vpop.f32.mrf.mxu0
      %1602 = vmatprep.mubr.bf16.mxu0 0
      %1603 = vmatmul.mubr.bf16.gmra.mxu0 %v1465
      %v1604 = vpop.f32.mrf.mxu0
      %v1605 = vadd.f32 0.0, %v1604
      %v1606 = vpop.f32.mrf.mxu0
      %v1607 = vpop.f32.mrf.mxu0
      %v1608 = vadd.f32 0.0, %v1607
      %v1609 = vpop.f32.mrf.mxu0
      %1610 = vmatprep.mubr.bf16.mxu0 0
      %1611 = vmatmul.mubr.bf16.gmra.mxu0 %v1468
      %v1612 = vpop.f32.mrf.mxu0
      %v1613 = vadd.f32 0.0, %v1612
      %v1614 = vpop.f32.mrf.mxu0
      %v1615 = vpop.f32.mrf.mxu0
      %v1616 = vadd.f32 0.0, %v1615
      %v1617 = vpop.f32.mrf.mxu0
      %1618 = vmatprep.mubr.bf16.mxu0 0
      %1619 = vmatmul.mubr.bf16.gmra.mxu0 %v1471
      %v1620 = vpop.f32.mrf.mxu0
      %v1621 = vadd.f32 0.0, %v1620
      %v1622 = vpop.f32.mrf.mxu0
      %v1623 = vpop.f32.mrf.mxu0
      %v1624 = vadd.f32 0.0, %v1623
      %v1625 = vpop.f32.mrf.mxu0
      %1626 = vmatprep.mubr.bf16.mxu0 0
      %1627 = vmatmul.mubr.bf16.gmra.mxu0 %v1474
      %v1628 = vpop.f32.mrf.mxu0
      %v1629 = vadd.f32 0.0, %v1628
      %v1630 = vpop.f32.mrf.mxu0
      %v1631 = vpop.f32.mrf.mxu0
      %v1632 = vadd.f32 0.0, %v1631
      %v1633 = vpop.f32.mrf.mxu0
      %1634 = vmatprep.mubr.bf16.mxu0 0
      %1635 = vmatmul.mubr.bf16.gmra.mxu0 %v1477
      %v1636 = vpop.f32.mrf.mxu0
      %v1637 = vadd.f32 0.0, %v1636
      %v1638 = vpop.f32.mrf.mxu0
      %v1639 = vpop.f32.mrf.mxu0
      %v1640 = vadd.f32 0.0, %v1639
      %v1641 = vpop.f32.mrf.mxu0
      %1642 = vdwg.mxu0
      %v1643 = vadd.f32 %v1092, %v1517
      %v1644 = vadd.f32 %v1095, %v1520
      %v1645 = vadd.f32 %v1100, %v1525
      %v1646 = vadd.f32 %v1103, %v1528
      %v1647 = vadd.f32 %v1108, %v1533
      %v1648 = vadd.f32 %v1111, %v1536
      %v1649 = vadd.f32 %v1116, %v1541
      %v1650 = vadd.f32 %v1119, %v1544
      %v1651 = vadd.f32 %v1124, %v1549
      %v1652 = vadd.f32 %v1127, %v1552
      %v1653 = vadd.f32 %v1132, %v1557
      %v1654 = vadd.f32 %v1135, %v1560
      %v1655 = vadd.f32 %v1140, %v1565
      %v1656 = vadd.f32 %v1143, %v1568
      %v1657 = vadd.f32 %v1148, %v1573
      %v1658 = vadd.f32 %v1151, %v1576
      %v1659 = vadd.f32 %v1156, %v1581
      %v1660 = vadd.f32 %v1159, %v1584
      %v1661 = vadd.f32 %v1164, %v1589
      %v1662 = vadd.f32 %v1167, %v1592
      %v1663 = vadd.f32 %v1172, %v1597
      %v1664 = vadd.f32 %v1175, %v1600
      %v1665 = vadd.f32 %v1180, %v1605
      %v1666 = vadd.f32 %v1183, %v1608
      %v1667 = vadd.f32 %v1188, %v1613
      %v1668 = vadd.f32 %v1191, %v1616
      %v1669 = vadd.f32 %v1196, %v1621
      %v1670 = vadd.f32 %v1199, %v1624
      %v1671 = vadd.f32 %v1204, %v1629
      %v1672 = vadd.f32 %v1207, %v1632
      %v1673 = vadd.f32 %v1212, %v1637
      %v1674 = vadd.f32 %v1215, %v1640
      %s1675 = sadd.s32 %s222, 1
      %s1676 = smul.u32 %s1675, 3
      %s1677 = smul.addr %s1676, 4
      %s1678 = scalar_lea.vmem %s210, %s1677
      %v1679 = vld [vmem:[%s1678] sm:$0xf]
      %v1680 = vld [vmem:[%s1678 + $0x4] sm:$0xf]
      %v1681 = vld [vmem:[%s1678 + $0xc] sm:$0xf]
      %v1682 = vld [vmem:[%s1678 + $0x10] sm:$0xf]
      %v1683 = vld [vmem:[%s1678 + $0x18] sm:$0xf]
      %v1684 = vld [vmem:[%s1678 + $0x1c] sm:$0xf]
      %v1685 = vld [vmem:[%s1678 + $0x24] sm:$0xf]
      %v1686 = vld [vmem:[%s1678 + $0x28] sm:$0xf]
      %v1687 = vld [vmem:[%s1678 + $0x30] sm:$0xf]
      %v1688 = vld [vmem:[%s1678 + $0x34] sm:$0xf]
      %v1689 = vld [vmem:[%s1678 + $0x3c] sm:$0xf]
      %v1690 = vld [vmem:[%s1678 + $0x40] sm:$0xf]
      %v1691 = vld [vmem:[%s1678 + $0x48] sm:$0xf]
      %v1692 = vld [vmem:[%s1678 + $0x4c] sm:$0xf]
      %v1693 = vld [vmem:[%s1678 + $0x54] sm:$0xf]
      %v1694 = vld [vmem:[%s1678 + $0x58] sm:$0xf]
      %v1695 = vld [vmem:[%s1678 + $0x60] sm:$0xf]
      %v1696 = vld [vmem:[%s1678 + $0x64] sm:$0xf]
      %v1697 = vld [vmem:[%s1678 + $0x6c] sm:$0xf]
      %v1698 = vld [vmem:[%s1678 + $0x70] sm:$0xf]
      %v1699 = vld [vmem:[%s1678 + $0x78] sm:$0xf]
      %v1700 = vld [vmem:[%s1678 + $0x7c] sm:$0xf]
      %v1701 = vld [vmem:[%s1678 + $0x84] sm:$0xf]
      %v1702 = vld [vmem:[%s1678 + $0x88] sm:$0xf]
      %v1703 = vld [vmem:[%s1678 + $0x90] sm:$0xf]
      %v1704 = vld [vmem:[%s1678 + $0x94] sm:$0xf]
      %v1705 = vld [vmem:[%s1678 + $0x9c] sm:$0xf]
      %v1706 = vld [vmem:[%s1678 + $0xa0] sm:$0xf]
      %v1707 = vld [vmem:[%s1678 + $0xa8] sm:$0xf]
      %v1708 = vld [vmem:[%s1678 + $0xac] sm:$0xf]
      %v1709 = vld [vmem:[%s1678 + $0xb4] sm:$0xf]
      %v1710 = vld [vmem:[%s1678 + $0xb8] sm:$0xf]
      %s1711 = scalar_lea.vmem %s1, 6
      %v1712 = vld [vmem:[%s1711] sm:$0x3]
      %v1745 = vunpack.c.l.b16 %v1679
      %v1746 = vunpack.c.l.b16 %v1680
      %v1747 = vunpack.c.l.b16 %v1681
      %v1748 = vunpack.c.l.b16 %v1682
      %v1749 = vunpack.c.l.b16 %v1683
      %v1750 = vunpack.c.l.b16 %v1684
      %v1751 = vunpack.c.l.b16 %v1685
      %v1752 = vunpack.c.l.b16 %v1686
      %v1753 = vunpack.c.l.b16 %v1687
      %v1754 = vunpack.c.l.b16 %v1688
      %v1755 = vunpack.c.l.b16 %v1689
      %v1756 = vunpack.c.l.b16 %v1690
      %v1757 = vunpack.c.l.b16 %v1691
      %v1758 = vunpack.c.l.b16 %v1692
      %v1759 = vunpack.c.l.b16 %v1693
      %v1760 = vunpack.c.l.b16 %v1694
      %v1761 = vunpack.c.l.b16 %v1695
      %v1762 = vunpack.c.l.b16 %v1696
      %v1763 = vunpack.c.l.b16 %v1697
      %v1764 = vunpack.c.l.b16 %v1698
      %v1765 = vunpack.c.l.b16 %v1699
      %v1766 = vunpack.c.l.b16 %v1700
      %v1767 = vunpack.c.l.b16 %v1701
      %v1768 = vunpack.c.l.b16 %v1702
      %v1769 = vunpack.c.l.b16 %v1703
      %v1770 = vunpack.c.l.b16 %v1704
      %v1771 = vunpack.c.l.b16 %v1705
      %v1772 = vunpack.c.l.b16 %v1706
      %v1773 = vunpack.c.l.b16 %v1707
      %v1774 = vunpack.c.l.b16 %v1708
      %v1775 = vunpack.c.l.b16 %v1709
      %v1776 = vunpack.c.l.b16 %v1710
      %v1777 = vpack.c.b16 %v1746, %v1745
      %v1778 = vpack.c.b16 %v1748, %v1747
      %v1779 = vpack.c.b16 %v1750, %v1749
      %v1780 = vpack.c.b16 %v1752, %v1751
      %v1781 = vpack.c.b16 %v1754, %v1753
      %v1782 = vpack.c.b16 %v1756, %v1755
      %v1783 = vpack.c.b16 %v1758, %v1757
      %v1784 = vpack.c.b16 %v1760, %v1759
      %v1785 = vpack.c.b16 %v1762, %v1761
      %v1786 = vpack.c.b16 %v1764, %v1763
      %v1787 = vpack.c.b16 %v1766, %v1765
      %v1788 = vpack.c.b16 %v1768, %v1767
      %v1789 = vpack.c.b16 %v1770, %v1769
      %v1790 = vpack.c.b16 %v1772, %v1771
      %v1791 = vpack.c.b16 %v1774, %v1773
      %v1792 = vpack.c.b16 %v1776, %v1775
      %v1794 = vsel %vm712, %v1777, 0
      %v1797 = vsel %vm712, %v1778, 0
      %v1800 = vsel %vm712, %v1779, 0
      %v1803 = vsel %vm712, %v1780, 0
      %v1806 = vsel %vm712, %v1781, 0
      %v1809 = vsel %vm712, %v1782, 0
      %v1812 = vsel %vm712, %v1783, 0
      %v1815 = vsel %vm712, %v1784, 0
      %v1818 = vsel %vm712, %v1785, 0
      %v1821 = vsel %vm712, %v1786, 0
      %v1824 = vsel %vm712, %v1787, 0
      %v1827 = vsel %vm712, %v1788, 0
      %v1830 = vsel %vm712, %v1789, 0
      %v1833 = vsel %vm712, %v1790, 0
      %v1836 = vsel %vm712, %v1791, 0
      %v1839 = vsel %vm712, %v1792, 0
      %v1842 = vsel %vm761, %v1712, 0
      %1844 = vmatprep.subr.bf16.mxu0 0
      %1845 = vmatpush1.bf16.msra.mxu0 0
      %1846 = vmatprep.subr.bf16.mxu0 0
      %1847 = vmatpush1.bf16.msra.mxu0 0
      %1848 = vmatprep.subr.bf16.mxu0 0
      %1849 = vmatpush1.bf16.msra.mxu0 0
      %1850 = vmatprep.subr.bf16.mxu0 0
      %1851 = vmatpush1.bf16.msra.mxu0 0
      %1852 = vmatprep.subr.bf16.mxu0 0
      %1853 = vmatpush1.bf16.msra.mxu0 0
      %1854 = vmatprep.subr.bf16.mxu0 0
      %1855 = vmatpush1.bf16.msra.mxu0 0
      %1856 = vmatprep.subr.bf16.mxu0 0
      %1857 = vmatpush1.bf16.msra.mxu0 0
      %1858 = vmatprep.subr.bf16.mxu0 0
      %1859 = vmatpush1.bf16.msra.mxu0 %v1842
      %1860 = vmatprep.subr.bf16.mxu0 0
      %1861 = vmatpush2.bf16.msra.mxu0 0
      %1862 = vmatprep.subr.bf16.mxu0 0
      %1863 = vmatpush2.bf16.msra.mxu0 0
      %1864 = vmatprep.subr.bf16.mxu0 0
      %1865 = vmatpush2.bf16.msra.mxu0 0
      %1866 = vmatprep.subr.bf16.mxu0 0
      %1867 = vmatpush2.bf16.msra.mxu0 0
      %1868 = vmatprep.subr.bf16.mxu0 0
      %1869 = vmatpush2.bf16.msra.mxu0 0
      %1870 = vmatprep.subr.bf16.mxu0 0
      %1871 = vmatpush2.bf16.msra.mxu0 0
      %1872 = vmatprep.subr.bf16.mxu0 0
      %1873 = vmatpush2.bf16.msra.mxu0 0
      %1874 = vmatprep.subr.bf16.mxu0 0
      %1875 = vmatpush2.bf16.msra.mxu0 0
      %1876 = vmatprep.mubr.bf16.mxu0 0
      %1877 = vmatmul.mubr.bf16.gmra.mxu0 %v1794
      %v1878 = vpop.f32.mrf.mxu0
      %v1879 = vadd.f32 0.0, %v1878
      %v1880 = vpop.f32.mrf.mxu0
      %v1881 = vpop.f32.mrf.mxu0
      %v1882 = vadd.f32 0.0, %v1881
      %v1883 = vpop.f32.mrf.mxu0
      %1884 = vmatprep.mubr.bf16.mxu0 0
      %1885 = vmatmul.mubr.bf16.gmra.mxu0 %v1797
      %v1886 = vpop.f32.mrf.mxu0
      %v1887 = vadd.f32 0.0, %v1886
      %v1888 = vpop.f32.mrf.mxu0
      %v1889 = vpop.f32.mrf.mxu0
      %v1890 = vadd.f32 0.0, %v1889
      %v1891 = vpop.f32.mrf.mxu0
      %1892 = vmatprep.mubr.bf16.mxu0 0
      %1893 = vmatmul.mubr.bf16.gmra.mxu0 %v1800
      %v1894 = vpop.f32.mrf.mxu0
      %v1895 = vadd.f32 0.0, %v1894
      %v1896 = vpop.f32.mrf.mxu0
      %v1897 = vpop.f32.mrf.mxu0
      %v1898 = vadd.f32 0.0, %v1897
      %v1899 = vpop.f32.mrf.mxu0
      %1900 = vmatprep.mubr.bf16.mxu0 0
      %1901 = vmatmul.mubr.bf16.gmra.mxu0 %v1803
      %v1902 = vpop.f32.mrf.mxu0
      %v1903 = vadd.f32 0.0, %v1902
      %v1904 = vpop.f32.mrf.mxu0
      %v1905 = vpop.f32.mrf.mxu0
      %v1906 = vadd.f32 0.0, %v1905
      %v1907 = vpop.f32.mrf.mxu0
      %1908 = vmatprep.mubr.bf16.mxu0 0
      %1909 = vmatmul.mubr.bf16.gmra.mxu0 %v1806
      %v1910 = vpop.f32.mrf.mxu0
      %v1911 = vadd.f32 0.0, %v1910
      %v1912 = vpop.f32.mrf.mxu0
      %v1913 = vpop.f32.mrf.mxu0
      %v1914 = vadd.f32 0.0, %v1913
      %v1915 = vpop.f32.mrf.mxu0
      %1916 = vmatprep.mubr.bf16.mxu0 0
      %1917 = vmatmul.mubr.bf16.gmra.mxu0 %v1809
      %v1918 = vpop.f32.mrf.mxu0
      %v1919 = vadd.f32 0.0, %v1918
      %v1920 = vpop.f32.mrf.mxu0
      %v1921 = vpop.f32.mrf.mxu0
      %v1922 = vadd.f32 0.0, %v1921
      %v1923 = vpop.f32.mrf.mxu0
      %1924 = vmatprep.mubr.bf16.mxu0 0
      %1925 = vmatmul.mubr.bf16.gmra.mxu0 %v1812
      %v1926 = vpop.f32.mrf.mxu0
      %v1927 = vadd.f32 0.0, %v1926
      %v1928 = vpop.f32.mrf.mxu0
      %v1929 = vpop.f32.mrf.mxu0
      %v1930 = vadd.f32 0.0, %v1929
      %v1931 = vpop.f32.mrf.mxu0
      %1932 = vmatprep.mubr.bf16.mxu0 0
      %1933 = vmatmul.mubr.bf16.gmra.mxu0 %v1815
      %v1934 = vpop.f32.mrf.mxu0
      %v1935 = vadd.f32 0.0, %v1934
      %v1936 = vpop.f32.mrf.mxu0
      %v1937 = vpop.f32.mrf.mxu0
      %v1938 = vadd.f32 0.0, %v1937
      %v1939 = vpop.f32.mrf.mxu0
      %1940 = vmatprep.mubr.bf16.mxu0 0
      %1941 = vmatmul.mubr.bf16.gmra.mxu0 %v1818
      %v1942 = vpop.f32.mrf.mxu0
      %v1943 = vadd.f32 0.0, %v1942
      %v1944 = vpop.f32.mrf.mxu0
      %v1945 = vpop.f32.mrf.mxu0
      %v1946 = vadd.f32 0.0, %v1945
      %v1947 = vpop.f32.mrf.mxu0
      %1948 = vmatprep.mubr.bf16.mxu0 0
      %1949 = vmatmul.mubr.bf16.gmra.mxu0 %v1821
      %v1950 = vpop.f32.mrf.mxu0
      %v1951 = vadd.f32 0.0, %v1950
      %v1952 = vpop.f32.mrf.mxu0
      %v1953 = vpop.f32.mrf.mxu0
      %v1954 = vadd.f32 0.0, %v1953
      %v1955 = vpop.f32.mrf.mxu0
      %1956 = vmatprep.mubr.bf16.mxu0 0
      %1957 = vmatmul.mubr.bf16.gmra.mxu0 %v1824
      %v1958 = vpop.f32.mrf.mxu0
      %v1959 = vadd.f32 0.0, %v1958
      %v1960 = vpop.f32.mrf.mxu0
      %v1961 = vpop.f32.mrf.mxu0
      %v1962 = vadd.f32 0.0, %v1961
      %v1963 = vpop.f32.mrf.mxu0
      %1964 = vmatprep.mubr.bf16.mxu0 0
      %1965 = vmatmul.mubr.bf16.gmra.mxu0 %v1827
      %v1966 = vpop.f32.mrf.mxu0
      %v1967 = vadd.f32 0.0, %v1966
      %v1968 = vpop.f32.mrf.mxu0
      %v1969 = vpop.f32.mrf.mxu0
      %v1970 = vadd.f32 0.0, %v1969
      %v1971 = vpop.f32.mrf.mxu0
      %1972 = vmatprep.mubr.bf16.mxu0 0
      %1973 = vmatmul.mubr.bf16.gmra.mxu0 %v1830
      %v1974 = vpop.f32.mrf.mxu0
      %v1975 = vadd.f32 0.0, %v1974
      %v1976 = vpop.f32.mrf.mxu0
      %v1977 = vpop.f32.mrf.mxu0
      %v1978 = vadd.f32 0.0, %v1977
      %v1979 = vpop.f32.mrf.mxu0
      %1980 = vmatprep.mubr.bf16.mxu0 0
      %1981 = vmatmul.mubr.bf16.gmra.mxu0 %v1833
      %v1982 = vpop.f32.mrf.mxu0
      %v1983 = vadd.f32 0.0, %v1982
      %v1984 = vpop.f32.mrf.mxu0
      %v1985 = vpop.f32.mrf.mxu0
      %v1986 = vadd.f32 0.0, %v1985
      %v1987 = vpop.f32.mrf.mxu0
      %1988 = vmatprep.mubr.bf16.mxu0 0
      %1989 = vmatmul.mubr.bf16.gmra.mxu0 %v1836
      %v1990 = vpop.f32.mrf.mxu0
      %v1991 = vadd.f32 0.0, %v1990
      %v1992 = vpop.f32.mrf.mxu0
      %v1993 = vpop.f32.mrf.mxu0
      %v1994 = vadd.f32 0.0, %v1993
      %v1995 = vpop.f32.mrf.mxu0
      %1996 = vmatprep.mubr.bf16.mxu0 0
      %1997 = vmatmul.mubr.bf16.gmra.mxu0 %v1839
      %v1998 = vpop.f32.mrf.mxu0
      %v1999 = vadd.f32 0.0, %v1998
      %v2000 = vpop.f32.mrf.mxu0
      %v2001 = vpop.f32.mrf.mxu0
      %v2002 = vadd.f32 0.0, %v2001
      %v2003 = vpop.f32.mrf.mxu0
      %2004 = vdwg.mxu0
      %v2005 = vadd.f32 %v1643, %v1879
      %v2006 = vadd.f32 %v1644, %v1882
      %v2007 = vadd.f32 %v1645, %v1887
      %v2008 = vadd.f32 %v1646, %v1890
      %v2009 = vadd.f32 %v1647, %v1895
      %v2010 = vadd.f32 %v1648, %v1898
      %v2011 = vadd.f32 %v1649, %v1903
      %v2012 = vadd.f32 %v1650, %v1906
      %v2013 = vadd.f32 %v1651, %v1911
      %v2014 = vadd.f32 %v1652, %v1914
      %v2015 = vadd.f32 %v1653, %v1919
      %v2016 = vadd.f32 %v1654, %v1922
      %v2017 = vadd.f32 %v1655, %v1927
      %v2018 = vadd.f32 %v1656, %v1930
      %v2019 = vadd.f32 %v1657, %v1935
      %v2020 = vadd.f32 %v1658, %v1938
      %v2021 = vadd.f32 %v1659, %v1943
      %v2022 = vadd.f32 %v1660, %v1946
      %v2023 = vadd.f32 %v1661, %v1951
      %v2024 = vadd.f32 %v1662, %v1954
      %v2025 = vadd.f32 %v1663, %v1959
      %v2026 = vadd.f32 %v1664, %v1962
      %v2027 = vadd.f32 %v1665, %v1967
      %v2028 = vadd.f32 %v1666, %v1970
      %v2029 = vadd.f32 %v1667, %v1975
      %v2030 = vadd.f32 %v1668, %v1978
      %v2031 = vadd.f32 %v1669, %v1983
      %v2032 = vadd.f32 %v1670, %v1986
      %v2033 = vadd.f32 %v1671, %v1991
      %v2034 = vadd.f32 %v1672, %v1994
      %v2035 = vadd.f32 %v1673, %v1999
      %v2036 = vadd.f32 %v1674, %v2002
      %v2037 = vld [vmem:[%s1678] sm:$0xf]
      %v2038 = vld [vmem:[%s1678 + $0x4] sm:$0xf]
      %v2039 = vld [vmem:[%s1678 + $0x8] sm:$0x1]
      %v2040 = vld [vmem:[%s1678 + $0xc] sm:$0xf]
      %v2041 = vld [vmem:[%s1678 + $0x10] sm:$0xf]
      %v2042 = vld [vmem:[%s1678 + $0x14] sm:$0x1]
      %v2043 = vld [vmem:[%s1678 + $0x18] sm:$0xf]
      %v2044 = vld [vmem:[%s1678 + $0x1c] sm:$0xf]
      %v2045 = vld [vmem:[%s1678 + $0x20] sm:$0x1]
      %v2046 = vld [vmem:[%s1678 + $0x24] sm:$0xf]
      %v2047 = vld [vmem:[%s1678 + $0x28] sm:$0xf]
      %v2048 = vld [vmem:[%s1678 + $0x2c] sm:$0x1]
      %v2049 = vld [vmem:[%s1678 + $0x30] sm:$0xf]
      %v2050 = vld [vmem:[%s1678 + $0x34] sm:$0xf]
      %v2051 = vld [vmem:[%s1678 + $0x38] sm:$0x1]
      %v2052 = vld [vmem:[%s1678 + $0x3c] sm:$0xf]
      %v2053 = vld [vmem:[%s1678 + $0x40] sm:$0xf]
      %v2054 = vld [vmem:[%s1678 + $0x44] sm:$0x1]
      %v2055 = vld [vmem:[%s1678 + $0x48] sm:$0xf]
      %v2056 = vld [vmem:[%s1678 + $0x4c] sm:$0xf]
      %v2057 = vld [vmem:[%s1678 + $0x50] sm:$0x1]
      %v2058 = vld [vmem:[%s1678 + $0x54] sm:$0xf]
      %v2059 = vld [vmem:[%s1678 + $0x58] sm:$0xf]
      %v2060 = vld [vmem:[%s1678 + $0x5c] sm:$0x1]
      %v2061 = vld [vmem:[%s1678 + $0x60] sm:$0xf]
      %v2062 = vld [vmem:[%s1678 + $0x64] sm:$0xf]
      %v2063 = vld [vmem:[%s1678 + $0x68] sm:$0x1]
      %v2064 = vld [vmem:[%s1678 + $0x6c] sm:$0xf]
      %v2065 = vld [vmem:[%s1678 + $0x70] sm:$0xf]
      %v2066 = vld [vmem:[%s1678 + $0x74] sm:$0x1]
      %v2067 = vld [vmem:[%s1678 + $0x78] sm:$0xf]
      %v2068 = vld [vmem:[%s1678 + $0x7c] sm:$0xf]
      %v2069 = vld [vmem:[%s1678 + $0x80] sm:$0x1]
      %v2070 = vld [vmem:[%s1678 + $0x84] sm:$0xf]
      %v2071 = vld [vmem:[%s1678 + $0x88] sm:$0xf]
      %v2072 = vld [vmem:[%s1678 + $0x8c] sm:$0x1]
      %v2073 = vld [vmem:[%s1678 + $0x90] sm:$0xf]
      %v2074 = vld [vmem:[%s1678 + $0x94] sm:$0xf]
      %v2075 = vld [vmem:[%s1678 + $0x98] sm:$0x1]
      %v2076 = vld [vmem:[%s1678 + $0x9c] sm:$0xf]
      %v2077 = vld [vmem:[%s1678 + $0xa0] sm:$0xf]
      %v2078 = vld [vmem:[%s1678 + $0xa4] sm:$0x1]
      %v2079 = vld [vmem:[%s1678 + $0xa8] sm:$0xf]
      %v2080 = vld [vmem:[%s1678 + $0xac] sm:$0xf]
      %v2081 = vld [vmem:[%s1678 + $0xb0] sm:$0x1]
      %v2082 = vld [vmem:[%s1678 + $0xb4] sm:$0xf]
      %v2083 = vld [vmem:[%s1678 + $0xb8] sm:$0xf]
      %v2084 = vld [vmem:[%s1678 + $0xbc] sm:$0x1]
      %v2086 = vshrl.u32 %v2037, 16
      %v2088 = vrot.slane %v2086, 4
      %v2089 = vshll.u32 %v2037, 16
      %v2091 = vrot.slane %v2089, 5
      %v2092 = vor.u32 %v2088, %v2091
      %v2093 = vrot.slane %v2092, 4
      %v2095 = vshll.u32 %v2038, 16
      %v2097 = vrot.slane %v2095, 5
      %v2098 = vsel %vm277, %v2093, %v2097
      %v2099 = vshrl.u32 %v2038, 16
      %v2101 = vrot.slane %v2099, 4
      %v2102 = vor.u32 %v2101, %v2097
      %v2103 = vrot.slane %v2102, 4
      %v2105 = vshll.u32 %v2039, 16
      %v2107 = vrot.slane %v2105, 5
      %v2108 = vsel %vm277, %v2103, %v2107
      %v2110 = vshrl.u32 %v2040, 16
      %v2112 = vrot.slane %v2110, 4
      %v2113 = vshll.u32 %v2040, 16
      %v2115 = vrot.slane %v2113, 5
      %v2116 = vor.u32 %v2112, %v2115
      %v2117 = vrot.slane %v2116, 4
      %v2119 = vshll.u32 %v2041, 16
      %v2121 = vrot.slane %v2119, 5
      %v2122 = vsel %vm277, %v2117, %v2121
      %v2123 = vshrl.u32 %v2041, 16
      %v2125 = vrot.slane %v2123, 4
      %v2126 = vor.u32 %v2125, %v2121
      %v2127 = vrot.slane %v2126, 4
      %v2129 = vshll.u32 %v2042, 16
      %v2131 = vrot.slane %v2129, 5
      %v2132 = vsel %vm277, %v2127, %v2131
      %v2134 = vshrl.u32 %v2043, 16
      %v2136 = vrot.slane %v2134, 4
      %v2137 = vshll.u32 %v2043, 16
      %v2139 = vrot.slane %v2137, 5
      %v2140 = vor.u32 %v2136, %v2139
      %v2141 = vrot.slane %v2140, 4
      %v2143 = vshll.u32 %v2044, 16
      %v2145 = vrot.slane %v2143, 5
      %v2146 = vsel %vm277, %v2141, %v2145
      %v2147 = vshrl.u32 %v2044, 16
      %v2149 = vrot.slane %v2147, 4
      %v2150 = vor.u32 %v2149, %v2145
      %v2151 = vrot.slane %v2150, 4
      %v2153 = vshll.u32 %v2045, 16
      %v2155 = vrot.slane %v2153, 5
      %v2156 = vsel %vm277, %v2151, %v2155
      %v2158 = vshrl.u32 %v2046, 16
      %v2160 = vrot.slane %v2158, 4
      %v2161 = vshll.u32 %v2046, 16
      %v2163 = vrot.slane %v2161, 5
      %v2164 = vor.u32 %v2160, %v2163
      %v2165 = vrot.slane %v2164, 4
      %v2167 = vshll.u32 %v2047, 16
      %v2169 = vrot.slane %v2167, 5
      %v2170 = vsel %vm277, %v2165, %v2169
      %v2171 = vshrl.u32 %v2047, 16
      %v2173 = vrot.slane %v2171, 4
      %v2174 = vor.u32 %v2173, %v2169
      %v2175 = vrot.slane %v2174, 4
      %v2177 = vshll.u32 %v2048, 16
      %v2179 = vrot.slane %v2177, 5
      %v2180 = vsel %vm277, %v2175, %v2179
      %v2182 = vshrl.u32 %v2049, 16
      %v2184 = vrot.slane %v2182, 4
      %v2185 = vshll.u32 %v2049, 16
      %v2187 = vrot.slane %v2185, 5
      %v2188 = vor.u32 %v2184, %v2187
      %v2189 = vrot.slane %v2188, 4
      %v2191 = vshll.u32 %v2050, 16
      %v2193 = vrot.slane %v2191, 5
      %v2194 = vsel %vm277, %v2189, %v2193
      %v2195 = vshrl.u32 %v2050, 16
      %v2197 = vrot.slane %v2195, 4
      %v2198 = vor.u32 %v2197, %v2193
      %v2199 = vrot.slane %v2198, 4
      %v2201 = vshll.u32 %v2051, 16
      %v2203 = vrot.slane %v2201, 5
      %v2204 = vsel %vm277, %v2199, %v2203
      %v2206 = vshrl.u32 %v2052, 16
      %v2208 = vrot.slane %v2206, 4
      %v2209 = vshll.u32 %v2052, 16
      %v2211 = vrot.slane %v2209, 5
      %v2212 = vor.u32 %v2208, %v2211
      %v2213 = vrot.slane %v2212, 4
      %v2215 = vshll.u32 %v2053, 16
      %v2217 = vrot.slane %v2215, 5
      %v2218 = vsel %vm277, %v2213, %v2217
      %v2219 = vshrl.u32 %v2053, 16
      %v2221 = vrot.slane %v2219, 4
      %v2222 = vor.u32 %v2221, %v2217
      %v2223 = vrot.slane %v2222, 4
      %v2225 = vshll.u32 %v2054, 16
      %v2227 = vrot.slane %v2225, 5
      %v2228 = vsel %vm277, %v2223, %v2227
      %v2230 = vshrl.u32 %v2055, 16
      %v2232 = vrot.slane %v2230, 4
      %v2233 = vshll.u32 %v2055, 16
      %v2235 = vrot.slane %v2233, 5
      %v2236 = vor.u32 %v2232, %v2235
      %v2237 = vrot.slane %v2236, 4
      %v2239 = vshll.u32 %v2056, 16
      %v2241 = vrot.slane %v2239, 5
      %v2242 = vsel %vm277, %v2237, %v2241
      %v2243 = vshrl.u32 %v2056, 16
      %v2245 = vrot.slane %v2243, 4
      %v2246 = vor.u32 %v2245, %v2241
      %v2247 = vrot.slane %v2246, 4
      %v2249 = vshll.u32 %v2057, 16
      %v2251 = vrot.slane %v2249, 5
      %v2252 = vsel %vm277, %v2247, %v2251
      %v2254 = vshrl.u32 %v2058, 16
      %v2256 = vrot.slane %v2254, 4
      %v2257 = vshll.u32 %v2058, 16
      %v2259 = vrot.slane %v2257, 5
      %v2260 = vor.u32 %v2256, %v2259
      %v2261 = vrot.slane %v2260, 4
      %v2263 = vshll.u32 %v2059, 16
      %v2265 = vrot.slane %v2263, 5
      %v2266 = vsel %vm277, %v2261, %v2265
      %v2267 = vshrl.u32 %v2059, 16
      %v2269 = vrot.slane %v2267, 4
      %v2270 = vor.u32 %v2269, %v2265
      %v2271 = vrot.slane %v2270, 4
      %v2273 = vshll.u32 %v2060, 16
      %v2275 = vrot.slane %v2273, 5
      %v2276 = vsel %vm277, %v2271, %v2275
      %v2278 = vshrl.u32 %v2061, 16
      %v2280 = vrot.slane %v2278, 4
      %v2281 = vshll.u32 %v2061, 16
      %v2283 = vrot.slane %v2281, 5
      %v2284 = vor.u32 %v2280, %v2283
      %v2285 = vrot.slane %v2284, 4
      %v2287 = vshll.u32 %v2062, 16
      %v2289 = vrot.slane %v2287, 5
      %v2290 = vsel %vm277, %v2285, %v2289
      %v2291 = vshrl.u32 %v2062, 16
      %v2293 = vrot.slane %v2291, 4
      %v2294 = vor.u32 %v2293, %v2289
      %v2295 = vrot.slane %v2294, 4
      %v2297 = vshll.u32 %v2063, 16
      %v2299 = vrot.slane %v2297, 5
      %v2300 = vsel %vm277, %v2295, %v2299
      %v2302 = vshrl.u32 %v2064, 16
      %v2304 = vrot.slane %v2302, 4
      %v2305 = vshll.u32 %v2064, 16
      %v2307 = vrot.slane %v2305, 5
      %v2308 = vor.u32 %v2304, %v2307
      %v2309 = vrot.slane %v2308, 4
      %v2311 = vshll.u32 %v2065, 16
      %v2313 = vrot.slane %v2311, 5
      %v2314 = vsel %vm277, %v2309, %v2313
      %v2315 = vshrl.u32 %v2065, 16
      %v2317 = vrot.slane %v2315, 4
      %v2318 = vor.u32 %v2317, %v2313
      %v2319 = vrot.slane %v2318, 4
      %v2321 = vshll.u32 %v2066, 16
      %v2323 = vrot.slane %v2321, 5
      %v2324 = vsel %vm277, %v2319, %v2323
      %v2326 = vshrl.u32 %v2067, 16
      %v2328 = vrot.slane %v2326, 4
      %v2329 = vshll.u32 %v2067, 16
      %v2331 = vrot.slane %v2329, 5
      %v2332 = vor.u32 %v2328, %v2331
      %v2333 = vrot.slane %v2332, 4
      %v2335 = vshll.u32 %v2068, 16
      %v2337 = vrot.slane %v2335, 5
      %v2338 = vsel %vm277, %v2333, %v2337
      %v2339 = vshrl.u32 %v2068, 16
      %v2341 = vrot.slane %v2339, 4
      %v2342 = vor.u32 %v2341, %v2337
      %v2343 = vrot.slane %v2342, 4
      %v2345 = vshll.u32 %v2069, 16
      %v2347 = vrot.slane %v2345, 5
      %v2348 = vsel %vm277, %v2343, %v2347
      %v2350 = vshrl.u32 %v2070, 16
      %v2352 = vrot.slane %v2350, 4
      %v2353 = vshll.u32 %v2070, 16
      %v2355 = vrot.slane %v2353, 5
      %v2356 = vor.u32 %v2352, %v2355
      %v2357 = vrot.slane %v2356, 4
      %v2359 = vshll.u32 %v2071, 16
      %v2361 = vrot.slane %v2359, 5
      %v2362 = vsel %vm277, %v2357, %v2361
      %v2363 = vshrl.u32 %v2071, 16
      %v2365 = vrot.slane %v2363, 4
      %v2366 = vor.u32 %v2365, %v2361
      %v2367 = vrot.slane %v2366, 4
      %v2369 = vshll.u32 %v2072, 16
      %v2371 = vrot.slane %v2369, 5
      %v2372 = vsel %vm277, %v2367, %v2371
      %v2374 = vshrl.u32 %v2073, 16
      %v2376 = vrot.slane %v2374, 4
      %v2377 = vshll.u32 %v2073, 16
      %v2379 = vrot.slane %v2377, 5
      %v2380 = vor.u32 %v2376, %v2379
      %v2381 = vrot.slane %v2380, 4
      %v2383 = vshll.u32 %v2074, 16
      %v2385 = vrot.slane %v2383, 5
      %v2386 = vsel %vm277, %v2381, %v2385
      %v2387 = vshrl.u32 %v2074, 16
      %v2389 = vrot.slane %v2387, 4
      %v2390 = vor.u32 %v2389, %v2385
      %v2391 = vrot.slane %v2390, 4
      %v2393 = vshll.u32 %v2075, 16
      %v2395 = vrot.slane %v2393, 5
      %v2396 = vsel %vm277, %v2391, %v2395
      %v2398 = vshrl.u32 %v2076, 16
      %v2400 = vrot.slane %v2398, 4
      %v2401 = vshll.u32 %v2076, 16
      %v2403 = vrot.slane %v2401, 5
      %v2404 = vor.u32 %v2400, %v2403
      %v2405 = vrot.slane %v2404, 4
      %v2407 = vshll.u32 %v2077, 16
      %v2409 = vrot.slane %v2407, 5
      %v2410 = vsel %vm277, %v2405, %v2409
      %v2411 = vshrl.u32 %v2077, 16
      %v2413 = vrot.slane %v2411, 4
      %v2414 = vor.u32 %v2413, %v2409
      %v2415 = vrot.slane %v2414, 4
      %v2417 = vshll.u32 %v2078, 16
      %v2419 = vrot.slane %v2417, 5
      %v2420 = vsel %vm277, %v2415, %v2419
      %v2422 = vshrl.u32 %v2079, 16
      %v2424 = vrot.slane %v2422, 4
      %v2425 = vshll.u32 %v2079, 16
      %v2427 = vrot.slane %v2425, 5
      %v2428 = vor.u32 %v2424, %v2427
      %v2429 = vrot.slane %v2428, 4
      %v2431 = vshll.u32 %v2080, 16
      %v2433 = vrot.slane %v2431, 5
      %v2434 = vsel %vm277, %v2429, %v2433
      %v2435 = vshrl.u32 %v2080, 16
      %v2437 = vrot.slane %v2435, 4
      %v2438 = vor.u32 %v2437, %v2433
      %v2439 = vrot.slane %v2438, 4
      %v2441 = vshll.u32 %v2081, 16
      %v2443 = vrot.slane %v2441, 5
      %v2444 = vsel %vm277, %v2439, %v2443
      %v2446 = vshrl.u32 %v2082, 16
      %v2448 = vrot.slane %v2446, 4
      %v2449 = vshll.u32 %v2082, 16
      %v2451 = vrot.slane %v2449, 5
      %v2452 = vor.u32 %v2448, %v2451
      %v2453 = vrot.slane %v2452, 4
      %v2455 = vshll.u32 %v2083, 16
      %v2457 = vrot.slane %v2455, 5
      %v2458 = vsel %vm277, %v2453, %v2457
      %v2459 = vshrl.u32 %v2083, 16
      %v2461 = vrot.slane %v2459, 4
      %v2462 = vor.u32 %v2461, %v2457
      %v2463 = vrot.slane %v2462, 4
      %v2465 = vshll.u32 %v2084, 16
      %v2467 = vrot.slane %v2465, 5
      %v2468 = vsel %vm277, %v2463, %v2467
      %s2469 = scalar_lea.vmem %s1, 8
      %v2470 = vld [vmem:[%s2469] sm:$0x3]
      %v2471 = vunpack.c.l.b16 %v2098
      %v2472 = vunpack.c.l.b16 %v2108
      %v2473 = vunpack.c.l.b16 %v2122
      %v2474 = vunpack.c.l.b16 %v2132
      %v2475 = vunpack.c.l.b16 %v2146
      %v2476 = vunpack.c.l.b16 %v2156
      %v2477 = vunpack.c.l.b16 %v2170
      %v2478 = vunpack.c.l.b16 %v2180
      %v2479 = vunpack.c.l.b16 %v2194
      %v2480 = vunpack.c.l.b16 %v2204
      %v2481 = vunpack.c.l.b16 %v2218
      %v2482 = vunpack.c.l.b16 %v2228
      %v2483 = vunpack.c.l.b16 %v2242
      %v2484 = vunpack.c.l.b16 %v2252
      %v2485 = vunpack.c.l.b16 %v2266
      %v2486 = vunpack.c.l.b16 %v2276
      %v2487 = vunpack.c.l.b16 %v2290
      %v2488 = vunpack.c.l.b16 %v2300
      %v2489 = vunpack.c.l.b16 %v2314
      %v2490 = vunpack.c.l.b16 %v2324
      %v2491 = vunpack.c.l.b16 %v2338
      %v2492 = vunpack.c.l.b16 %v2348
      %v2493 = vunpack.c.l.b16 %v2362
      %v2494 = vunpack.c.l.b16 %v2372
      %v2495 = vunpack.c.l.b16 %v2386
      %v2496 = vunpack.c.l.b16 %v2396
      %v2497 = vunpack.c.l.b16 %v2410
      %v2498 = vunpack.c.l.b16 %v2420
      %v2499 = vunpack.c.l.b16 %v2434
      %v2500 = vunpack.c.l.b16 %v2444
      %v2501 = vunpack.c.l.b16 %v2458
      %v2502 = vunpack.c.l.b16 %v2468
      %v2503 = vpack.c.b16 %v2472, %v2471
      %v2504 = vpack.c.b16 %v2474, %v2473
      %v2505 = vpack.c.b16 %v2476, %v2475
      %v2506 = vpack.c.b16 %v2478, %v2477
      %v2507 = vpack.c.b16 %v2480, %v2479
      %v2508 = vpack.c.b16 %v2482, %v2481
      %v2509 = vpack.c.b16 %v2484, %v2483
      %v2510 = vpack.c.b16 %v2486, %v2485
      %v2511 = vpack.c.b16 %v2488, %v2487
      %v2512 = vpack.c.b16 %v2490, %v2489
      %v2513 = vpack.c.b16 %v2492, %v2491
      %v2514 = vpack.c.b16 %v2494, %v2493
      %v2515 = vpack.c.b16 %v2496, %v2495
      %v2516 = vpack.c.b16 %v2498, %v2497
      %v2517 = vpack.c.b16 %v2500, %v2499
      %v2518 = vpack.c.b16 %v2502, %v2501
      %v2520 = vsel %vm712, %v2503, 0
      %v2523 = vsel %vm712, %v2504, 0
      %v2526 = vsel %vm712, %v2505, 0
      %v2529 = vsel %vm712, %v2506, 0
      %v2532 = vsel %vm712, %v2507, 0
      %v2535 = vsel %vm712, %v2508, 0
      %v2538 = vsel %vm712, %v2509, 0
      %v2541 = vsel %vm712, %v2510, 0
      %v2544 = vsel %vm712, %v2511, 0
      %v2547 = vsel %vm712, %v2512, 0
      %v2550 = vsel %vm712, %v2513, 0
      %v2553 = vsel %vm712, %v2514, 0
      %v2556 = vsel %vm712, %v2515, 0
      %v2559 = vsel %vm712, %v2516, 0
      %v2562 = vsel %vm712, %v2517, 0
      %v2565 = vsel %vm712, %v2518, 0
      %v2568 = vsel %vm761, %v2470, 0
      %2570 = vmatprep.subr.bf16.mxu0 0
      %2571 = vmatpush1.bf16.msra.mxu0 0
      %2572 = vmatprep.subr.bf16.mxu0 0
      %2573 = vmatpush1.bf16.msra.mxu0 0
      %2574 = vmatprep.subr.bf16.mxu0 0
      %2575 = vmatpush1.bf16.msra.mxu0 0
      %2576 = vmatprep.subr.bf16.mxu0 0
      %2577 = vmatpush1.bf16.msra.mxu0 0
      %2578 = vmatprep.subr.bf16.mxu0 0
      %2579 = vmatpush1.bf16.msra.mxu0 0
      %2580 = vmatprep.subr.bf16.mxu0 0
      %2581 = vmatpush1.bf16.msra.mxu0 0
      %2582 = vmatprep.subr.bf16.mxu0 0
      %2583 = vmatpush1.bf16.msra.mxu0 0
      %2584 = vmatprep.subr.bf16.mxu0 0
      %2585 = vmatpush1.bf16.msra.mxu0 %v2568
      %2586 = vmatprep.subr.bf16.mxu0 0
      %2587 = vmatpush2.bf16.msra.mxu0 0
      %2588 = vmatprep.subr.bf16.mxu0 0
      %2589 = vmatpush2.bf16.msra.mxu0 0
      %2590 = vmatprep.subr.bf16.mxu0 0
      %2591 = vmatpush2.bf16.msra.mxu0 0
      %2592 = vmatprep.subr.bf16.mxu0 0
      %2593 = vmatpush2.bf16.msra.mxu0 0
      %2594 = vmatprep.subr.bf16.mxu0 0
      %2595 = vmatpush2.bf16.msra.mxu0 0
      %2596 = vmatprep.subr.bf16.mxu0 0
      %2597 = vmatpush2.bf16.msra.mxu0 0
      %2598 = vmatprep.subr.bf16.mxu0 0
      %2599 = vmatpush2.bf16.msra.mxu0 0
      %2600 = vmatprep.subr.bf16.mxu0 0
      %2601 = vmatpush2.bf16.msra.mxu0 0
      %2602 = vmatprep.mubr.bf16.mxu0 0
      %2603 = vmatmul.mubr.bf16.gmra.mxu0 %v2520
      %v2604 = vpop.f32.mrf.mxu0
      %v2605 = vadd.f32 0.0, %v2604
      %v2606 = vpop.f32.mrf.mxu0
      %v2607 = vpop.f32.mrf.mxu0
      %v2608 = vadd.f32 0.0, %v2607
      %v2609 = vpop.f32.mrf.mxu0
      %2610 = vmatprep.mubr.bf16.mxu0 0
      %2611 = vmatmul.mubr.bf16.gmra.mxu0 %v2523
      %v2612 = vpop.f32.mrf.mxu0
      %v2613 = vadd.f32 0.0, %v2612
      %v2614 = vpop.f32.mrf.mxu0
      %v2615 = vpop.f32.mrf.mxu0
      %v2616 = vadd.f32 0.0, %v2615
      %v2617 = vpop.f32.mrf.mxu0
      %2618 = vmatprep.mubr.bf16.mxu0 0
      %2619 = vmatmul.mubr.bf16.gmra.mxu0 %v2526
      %v2620 = vpop.f32.mrf.mxu0
      %v2621 = vadd.f32 0.0, %v2620
      %v2622 = vpop.f32.mrf.mxu0
      %v2623 = vpop.f32.mrf.mxu0
      %v2624 = vadd.f32 0.0, %v2623
      %v2625 = vpop.f32.mrf.mxu0
      %2626 = vmatprep.mubr.bf16.mxu0 0
      %2627 = vmatmul.mubr.bf16.gmra.mxu0 %v2529
      %v2628 = vpop.f32.mrf.mxu0
      %v2629 = vadd.f32 0.0, %v2628
      %v2630 = vpop.f32.mrf.mxu0
      %v2631 = vpop.f32.mrf.mxu0
      %v2632 = vadd.f32 0.0, %v2631
      %v2633 = vpop.f32.mrf.mxu0
      %2634 = vmatprep.mubr.bf16.mxu0 0
      %2635 = vmatmul.mubr.bf16.gmra.mxu0 %v2532
      %v2636 = vpop.f32.mrf.mxu0
      %v2637 = vadd.f32 0.0, %v2636
      %v2638 = vpop.f32.mrf.mxu0
      %v2639 = vpop.f32.mrf.mxu0
      %v2640 = vadd.f32 0.0, %v2639
      %v2641 = vpop.f32.mrf.mxu0
      %2642 = vmatprep.mubr.bf16.mxu0 0
      %2643 = vmatmul.mubr.bf16.gmra.mxu0 %v2535
      %v2644 = vpop.f32.mrf.mxu0
      %v2645 = vadd.f32 0.0, %v2644
      %v2646 = vpop.f32.mrf.mxu0
      %v2647 = vpop.f32.mrf.mxu0
      %v2648 = vadd.f32 0.0, %v2647
      %v2649 = vpop.f32.mrf.mxu0
      %2650 = vmatprep.mubr.bf16.mxu0 0
      %2651 = vmatmul.mubr.bf16.gmra.mxu0 %v2538
      %v2652 = vpop.f32.mrf.mxu0
      %v2653 = vadd.f32 0.0, %v2652
      %v2654 = vpop.f32.mrf.mxu0
      %v2655 = vpop.f32.mrf.mxu0
      %v2656 = vadd.f32 0.0, %v2655
      %v2657 = vpop.f32.mrf.mxu0
      %2658 = vmatprep.mubr.bf16.mxu0 0
      %2659 = vmatmul.mubr.bf16.gmra.mxu0 %v2541
      %v2660 = vpop.f32.mrf.mxu0
      %v2661 = vadd.f32 0.0, %v2660
      %v2662 = vpop.f32.mrf.mxu0
      %v2663 = vpop.f32.mrf.mxu0
      %v2664 = vadd.f32 0.0, %v2663
      %v2665 = vpop.f32.mrf.mxu0
      %2666 = vmatprep.mubr.bf16.mxu0 0
      %2667 = vmatmul.mubr.bf16.gmra.mxu0 %v2544
      %v2668 = vpop.f32.mrf.mxu0
      %v2669 = vadd.f32 0.0, %v2668
      %v2670 = vpop.f32.mrf.mxu0
      %v2671 = vpop.f32.mrf.mxu0
      %v2672 = vadd.f32 0.0, %v2671
      %v2673 = vpop.f32.mrf.mxu0
      %2674 = vmatprep.mubr.bf16.mxu0 0
      %2675 = vmatmul.mubr.bf16.gmra.mxu0 %v2547
      %v2676 = vpop.f32.mrf.mxu0
      %v2677 = vadd.f32 0.0, %v2676
      %v2678 = vpop.f32.mrf.mxu0
      %v2679 = vpop.f32.mrf.mxu0
      %v2680 = vadd.f32 0.0, %v2679
      %v2681 = vpop.f32.mrf.mxu0
      %2682 = vmatprep.mubr.bf16.mxu0 0
      %2683 = vmatmul.mubr.bf16.gmra.mxu0 %v2550
      %v2684 = vpop.f32.mrf.mxu0
      %v2685 = vadd.f32 0.0, %v2684
      %v2686 = vpop.f32.mrf.mxu0
      %v2687 = vpop.f32.mrf.mxu0
      %v2688 = vadd.f32 0.0, %v2687
      %v2689 = vpop.f32.mrf.mxu0
      %2690 = vmatprep.mubr.bf16.mxu0 0
      %2691 = vmatmul.mubr.bf16.gmra.mxu0 %v2553
      %v2692 = vpop.f32.mrf.mxu0
      %v2693 = vadd.f32 0.0, %v2692
      %v2694 = vpop.f32.mrf.mxu0
      %v2695 = vpop.f32.mrf.mxu0
      %v2696 = vadd.f32 0.0, %v2695
      %v2697 = vpop.f32.mrf.mxu0
      %2698 = vmatprep.mubr.bf16.mxu0 0
      %2699 = vmatmul.mubr.bf16.gmra.mxu0 %v2556
      %v2700 = vpop.f32.mrf.mxu0
      %v2701 = vadd.f32 0.0, %v2700
      %v2702 = vpop.f32.mrf.mxu0
      %v2703 = vpop.f32.mrf.mxu0
      %v2704 = vadd.f32 0.0, %v2703
      %v2705 = vpop.f32.mrf.mxu0
      %2706 = vmatprep.mubr.bf16.mxu0 0
      %2707 = vmatmul.mubr.bf16.gmra.mxu0 %v2559
      %v2708 = vpop.f32.mrf.mxu0
      %v2709 = vadd.f32 0.0, %v2708
      %v2710 = vpop.f32.mrf.mxu0
      %v2711 = vpop.f32.mrf.mxu0
      %v2712 = vadd.f32 0.0, %v2711
      %v2713 = vpop.f32.mrf.mxu0
      %2714 = vmatprep.mubr.bf16.mxu0 0
      %2715 = vmatmul.mubr.bf16.gmra.mxu0 %v2562
      %v2716 = vpop.f32.mrf.mxu0
      %v2717 = vadd.f32 0.0, %v2716
      %v2718 = vpop.f32.mrf.mxu0
      %v2719 = vpop.f32.mrf.mxu0
      %v2720 = vadd.f32 0.0, %v2719
      %v2721 = vpop.f32.mrf.mxu0
      %2722 = vmatprep.mubr.bf16.mxu0 0
      %2723 = vmatmul.mubr.bf16.gmra.mxu0 %v2565
      %v2724 = vpop.f32.mrf.mxu0
      %v2725 = vadd.f32 0.0, %v2724
      %v2726 = vpop.f32.mrf.mxu0
      %v2727 = vpop.f32.mrf.mxu0
      %v2728 = vadd.f32 0.0, %v2727
      %v2729 = vpop.f32.mrf.mxu0
      %2730 = vdwg.mxu0
      %v2731 = vadd.f32 %v2005, %v2605
      %v2732 = vadd.f32 %v2006, %v2608
      %v2733 = vadd.f32 %v2007, %v2613
      %v2734 = vadd.f32 %v2008, %v2616
      %v2735 = vadd.f32 %v2009, %v2621
      %v2736 = vadd.f32 %v2010, %v2624
      %v2737 = vadd.f32 %v2011, %v2629
      %v2738 = vadd.f32 %v2012, %v2632
      %v2739 = vadd.f32 %v2013, %v2637
      %v2740 = vadd.f32 %v2014, %v2640
      %v2741 = vadd.f32 %v2015, %v2645
      %v2742 = vadd.f32 %v2016, %v2648
      %v2743 = vadd.f32 %v2017, %v2653
      %v2744 = vadd.f32 %v2018, %v2656
      %v2745 = vadd.f32 %v2019, %v2661
      %v2746 = vadd.f32 %v2020, %v2664
      %v2747 = vadd.f32 %v2021, %v2669
      %v2748 = vadd.f32 %v2022, %v2672
      %v2749 = vadd.f32 %v2023, %v2677
      %v2750 = vadd.f32 %v2024, %v2680
      %v2751 = vadd.f32 %v2025, %v2685
      %v2752 = vadd.f32 %v2026, %v2688
      %v2753 = vadd.f32 %v2027, %v2693
      %v2754 = vadd.f32 %v2028, %v2696
      %v2755 = vadd.f32 %v2029, %v2701
      %v2756 = vadd.f32 %v2030, %v2704
      %v2757 = vadd.f32 %v2031, %v2709
      %v2758 = vadd.f32 %v2032, %v2712
      %v2759 = vadd.f32 %v2033, %v2717
      %v2760 = vadd.f32 %v2034, %v2720
      %v2761 = vadd.f32 %v2035, %v2725
      %v2762 = vadd.f32 %v2036, %v2728
      %v2763 = vld [vmem:[%s1678] sm:$0xe]
      %v2764 = vld [vmem:[%s1678 + $0xc] sm:$0xe]
      %v2765 = vld [vmem:[%s1678 + $0x18] sm:$0xe]
      %v2766 = vld [vmem:[%s1678 + $0x24] sm:$0xe]
      %v2767 = vld [vmem:[%s1678 + $0x30] sm:$0xe]
      %v2768 = vld [vmem:[%s1678 + $0x3c] sm:$0xe]
      %v2769 = vld [vmem:[%s1678 + $0x48] sm:$0xe]
      %v2770 = vld [vmem:[%s1678 + $0x54] sm:$0xe]
      %v2771 = vld [vmem:[%s1678 + $0x60] sm:$0xe]
      %v2772 = vld [vmem:[%s1678 + $0x6c] sm:$0xe]
      %v2773 = vld [vmem:[%s1678 + $0x78] sm:$0xe]
      %v2774 = vld [vmem:[%s1678 + $0x84] sm:$0xe]
      %v2775 = vld [vmem:[%s1678 + $0x90] sm:$0xe]
      %v2776 = vld [vmem:[%s1678 + $0x9c] sm:$0xe]
      %v2777 = vld [vmem:[%s1678 + $0xa8] sm:$0xe]
      %v2778 = vld [vmem:[%s1678 + $0xb4] sm:$0xe]
      %v2827 = vrot.slane %v2763, 5
      %v2828 = vrot.slane %v2827, 4
      %v2829 = vrot.slane %v2038, 5
      %v2830 = vsel %vm1268, %v2828, %v2829
      %v2831 = vrot.slane %v2829, 4
      %v2832 = vrot.slane %v2039, 5
      %v2833 = vsel %vm1268, %v2831, %v2832
      %v2834 = vrot.slane %v2764, 5
      %v2835 = vrot.slane %v2834, 4
      %v2836 = vrot.slane %v2041, 5
      %v2837 = vsel %vm1268, %v2835, %v2836
      %v2838 = vrot.slane %v2836, 4
      %v2839 = vrot.slane %v2042, 5
      %v2840 = vsel %vm1268, %v2838, %v2839
      %v2841 = vrot.slane %v2765, 5
      %v2842 = vrot.slane %v2841, 4
      %v2843 = vrot.slane %v2044, 5
      %v2844 = vsel %vm1268, %v2842, %v2843
      %v2845 = vrot.slane %v2843, 4
      %v2846 = vrot.slane %v2045, 5
      %v2847 = vsel %vm1268, %v2845, %v2846
      %v2848 = vrot.slane %v2766, 5
      %v2849 = vrot.slane %v2848, 4
      %v2850 = vrot.slane %v2047, 5
      %v2851 = vsel %vm1268, %v2849, %v2850
      %v2852 = vrot.slane %v2850, 4
      %v2853 = vrot.slane %v2048, 5
      %v2854 = vsel %vm1268, %v2852, %v2853
      %v2855 = vrot.slane %v2767, 5
      %v2856 = vrot.slane %v2855, 4
      %v2857 = vrot.slane %v2050, 5
      %v2858 = vsel %vm1268, %v2856, %v2857
      %v2859 = vrot.slane %v2857, 4
      %v2860 = vrot.slane %v2051, 5
      %v2861 = vsel %vm1268, %v2859, %v2860
      %v2862 = vrot.slane %v2768, 5
      %v2863 = vrot.slane %v2862, 4
      %v2864 = vrot.slane %v2053, 5
      %v2865 = vsel %vm1268, %v2863, %v2864
      %v2866 = vrot.slane %v2864, 4
      %v2867 = vrot.slane %v2054, 5
      %v2868 = vsel %vm1268, %v2866, %v2867
      %v2869 = vrot.slane %v2769, 5
      %v2870 = vrot.slane %v2869, 4
      %v2871 = vrot.slane %v2056, 5
      %v2872 = vsel %vm1268, %v2870, %v2871
      %v2873 = vrot.slane %v2871, 4
      %v2874 = vrot.slane %v2057, 5
      %v2875 = vsel %vm1268, %v2873, %v2874
      %v2876 = vrot.slane %v2770, 5
      %v2877 = vrot.slane %v2876, 4
      %v2878 = vrot.slane %v2059, 5
      %v2879 = vsel %vm1268, %v2877, %v2878
      %v2880 = vrot.slane %v2878, 4
      %v2881 = vrot.slane %v2060, 5
      %v2882 = vsel %vm1268, %v2880, %v2881
      %v2883 = vrot.slane %v2771, 5
      %v2884 = vrot.slane %v2883, 4
      %v2885 = vrot.slane %v2062, 5
      %v2886 = vsel %vm1268, %v2884, %v2885
      %v2887 = vrot.slane %v2885, 4
      %v2888 = vrot.slane %v2063, 5
      %v2889 = vsel %vm1268, %v2887, %v2888
      %v2890 = vrot.slane %v2772, 5
      %v2891 = vrot.slane %v2890, 4
      %v2892 = vrot.slane %v2065, 5
      %v2893 = vsel %vm1268, %v2891, %v2892
      %v2894 = vrot.slane %v2892, 4
      %v2895 = vrot.slane %v2066, 5
      %v2896 = vsel %vm1268, %v2894, %v2895
      %v2897 = vrot.slane %v2773, 5
      %v2898 = vrot.slane %v2897, 4
      %v2899 = vrot.slane %v2068, 5
      %v2900 = vsel %vm1268, %v2898, %v2899
      %v2901 = vrot.slane %v2899, 4
      %v2902 = vrot.slane %v2069, 5
      %v2903 = vsel %vm1268, %v2901, %v2902
      %v2904 = vrot.slane %v2774, 5
      %v2905 = vrot.slane %v2904, 4
      %v2906 = vrot.slane %v2071, 5
      %v2907 = vsel %vm1268, %v2905, %v2906
      %v2908 = vrot.slane %v2906, 4
      %v2909 = vrot.slane %v2072, 5
      %v2910 = vsel %vm1268, %v2908, %v2909
      %v2911 = vrot.slane %v2775, 5
      %v2912 = vrot.slane %v2911, 4
      %v2913 = vrot.slane %v2074, 5
      %v2914 = vsel %vm1268, %v2912, %v2913
      %v2915 = vrot.slane %v2913, 4
      %v2916 = vrot.slane %v2075, 5
      %v2917 = vsel %vm1268, %v2915, %v2916
      %v2918 = vrot.slane %v2776, 5
      %v2919 = vrot.slane %v2918, 4
      %v2920 = vrot.slane %v2077, 5
      %v2921 = vsel %vm1268, %v2919, %v2920
      %v2922 = vrot.slane %v2920, 4
      %v2923 = vrot.slane %v2078, 5
      %v2924 = vsel %vm1268, %v2922, %v2923
      %v2925 = vrot.slane %v2777, 5
      %v2926 = vrot.slane %v2925, 4
      %v2927 = vrot.slane %v2080, 5
      %v2928 = vsel %vm1268, %v2926, %v2927
      %v2929 = vrot.slane %v2927, 4
      %v2930 = vrot.slane %v2081, 5
      %v2931 = vsel %vm1268, %v2929, %v2930
      %v2932 = vrot.slane %v2778, 5
      %v2933 = vrot.slane %v2932, 4
      %v2934 = vrot.slane %v2083, 5
      %v2935 = vsel %vm1268, %v2933, %v2934
      %v2936 = vrot.slane %v2934, 4
      %v2937 = vrot.slane %v2084, 5
      %v2938 = vsel %vm1268, %v2936, %v2937
      %s2939 = scalar_lea.vmem %s1, 10
      %v2940 = vld [vmem:[%s2939] sm:$0x3]
      %v2941 = vunpack.c.l.b16 %v2830
      %v2942 = vunpack.c.l.b16 %v2833
      %v2943 = vunpack.c.l.b16 %v2837
      %v2944 = vunpack.c.l.b16 %v2840
      %v2945 = vunpack.c.l.b16 %v2844
      %v2946 = vunpack.c.l.b16 %v2847
      %v2947 = vunpack.c.l.b16 %v2851
      %v2948 = vunpack.c.l.b16 %v2854
      %v2949 = vunpack.c.l.b16 %v2858
      %v2950 = vunpack.c.l.b16 %v2861
      %v2951 = vunpack.c.l.b16 %v2865
      %v2952 = vunpack.c.l.b16 %v2868
      %v2953 = vunpack.c.l.b16 %v2872
      %v2954 = vunpack.c.l.b16 %v2875
      %v2955 = vunpack.c.l.b16 %v2879
      %v2956 = vunpack.c.l.b16 %v2882
      %v2957 = vunpack.c.l.b16 %v2886
      %v2958 = vunpack.c.l.b16 %v2889
      %v2959 = vunpack.c.l.b16 %v2893
      %v2960 = vunpack.c.l.b16 %v2896
      %v2961 = vunpack.c.l.b16 %v2900
      %v2962 = vunpack.c.l.b16 %v2903
      %v2963 = vunpack.c.l.b16 %v2907
      %v2964 = vunpack.c.l.b16 %v2910
      %v2965 = vunpack.c.l.b16 %v2914
      %v2966 = vunpack.c.l.b16 %v2917
      %v2967 = vunpack.c.l.b16 %v2921
      %v2968 = vunpack.c.l.b16 %v2924
      %v2969 = vunpack.c.l.b16 %v2928
      %v2970 = vunpack.c.l.b16 %v2931
      %v2971 = vunpack.c.l.b16 %v2935
      %v2972 = vunpack.c.l.b16 %v2938
      %v2973 = vpack.c.b16 %v2942, %v2941
      %v2974 = vpack.c.b16 %v2944, %v2943
      %v2975 = vpack.c.b16 %v2946, %v2945
      %v2976 = vpack.c.b16 %v2948, %v2947
      %v2977 = vpack.c.b16 %v2950, %v2949
      %v2978 = vpack.c.b16 %v2952, %v2951
      %v2979 = vpack.c.b16 %v2954, %v2953
      %v2980 = vpack.c.b16 %v2956, %v2955
      %v2981 = vpack.c.b16 %v2958, %v2957
      %v2982 = vpack.c.b16 %v2960, %v2959
      %v2983 = vpack.c.b16 %v2962, %v2961
      %v2984 = vpack.c.b16 %v2964, %v2963
      %v2985 = vpack.c.b16 %v2966, %v2965
      %v2986 = vpack.c.b16 %v2968, %v2967
      %v2987 = vpack.c.b16 %v2970, %v2969
      %v2988 = vpack.c.b16 %v2972, %v2971
      %v2990 = vsel %vm712, %v2973, 0
      %v2993 = vsel %vm712, %v2974, 0
      %v2996 = vsel %vm712, %v2975, 0
      %v2999 = vsel %vm712, %v2976, 0
      %v3002 = vsel %vm712, %v2977, 0
      %v3005 = vsel %vm712, %v2978, 0
      %v3008 = vsel %vm712, %v2979, 0
      %v3011 = vsel %vm712, %v2980, 0
      %v3014 = vsel %vm712, %v2981, 0
      %v3017 = vsel %vm712, %v2982, 0
      %v3020 = vsel %vm712, %v2983, 0
      %v3023 = vsel %vm712, %v2984, 0
      %v3026 = vsel %vm712, %v2985, 0
      %v3029 = vsel %vm712, %v2986, 0
      %v3032 = vsel %vm712, %v2987, 0
      %v3035 = vsel %vm712, %v2988, 0
      %v3038 = vsel %vm761, %v2940, 0
      %3040 = vmatprep.subr.bf16.mxu0 0
      %3041 = vmatpush1.bf16.msra.mxu0 0
      %3042 = vmatprep.subr.bf16.mxu0 0
      %3043 = vmatpush1.bf16.msra.mxu0 0
      %3044 = vmatprep.subr.bf16.mxu0 0
      %3045 = vmatpush1.bf16.msra.mxu0 0
      %3046 = vmatprep.subr.bf16.mxu0 0
      %3047 = vmatpush1.bf16.msra.mxu0 0
      %3048 = vmatprep.subr.bf16.mxu0 0
      %3049 = vmatpush1.bf16.msra.mxu0 0
      %3050 = vmatprep.subr.bf16.mxu0 0
      %3051 = vmatpush1.bf16.msra.mxu0 0
      %3052 = vmatprep.subr.bf16.mxu0 0
      %3053 = vmatpush1.bf16.msra.mxu0 0
      %3054 = vmatprep.subr.bf16.mxu0 0
      %3055 = vmatpush1.bf16.msra.mxu0 %v3038
      %3056 = vmatprep.subr.bf16.mxu0 0
      %3057 = vmatpush2.bf16.msra.mxu0 0
      %3058 = vmatprep.subr.bf16.mxu0 0
      %3059 = vmatpush2.bf16.msra.mxu0 0
      %3060 = vmatprep.subr.bf16.mxu0 0
      %3061 = vmatpush2.bf16.msra.mxu0 0
      %3062 = vmatprep.subr.bf16.mxu0 0
      %3063 = vmatpush2.bf16.msra.mxu0 0
      %3064 = vmatprep.subr.bf16.mxu0 0
      %3065 = vmatpush2.bf16.msra.mxu0 0
      %3066 = vmatprep.subr.bf16.mxu0 0
      %3067 = vmatpush2.bf16.msra.mxu0 0
      %3068 = vmatprep.subr.bf16.mxu0 0
      %3069 = vmatpush2.bf16.msra.mxu0 0
      %3070 = vmatprep.subr.bf16.mxu0 0
      %3071 = vmatpush2.bf16.msra.mxu0 0
      %3072 = vmatprep.mubr.bf16.mxu0 0
      %3073 = vmatmul.mubr.bf16.gmra.mxu0 %v2990
      %v3074 = vpop.f32.mrf.mxu0
      %v3075 = vadd.f32 0.0, %v3074
      %v3076 = vpop.f32.mrf.mxu0
      %v3077 = vpop.f32.mrf.mxu0
      %v3078 = vadd.f32 0.0, %v3077
      %v3079 = vpop.f32.mrf.mxu0
      %3080 = vmatprep.mubr.bf16.mxu0 0
      %3081 = vmatmul.mubr.bf16.gmra.mxu0 %v2993
      %v3082 = vpop.f32.mrf.mxu0
      %v3083 = vadd.f32 0.0, %v3082
      %v3084 = vpop.f32.mrf.mxu0
      %v3085 = vpop.f32.mrf.mxu0
      %v3086 = vadd.f32 0.0, %v3085
      %v3087 = vpop.f32.mrf.mxu0
      %3088 = vmatprep.mubr.bf16.mxu0 0
      %3089 = vmatmul.mubr.bf16.gmra.mxu0 %v2996
      %v3090 = vpop.f32.mrf.mxu0
      %v3091 = vadd.f32 0.0, %v3090
      %v3092 = vpop.f32.mrf.mxu0
      %v3093 = vpop.f32.mrf.mxu0
      %v3094 = vadd.f32 0.0, %v3093
      %v3095 = vpop.f32.mrf.mxu0
      %3096 = vmatprep.mubr.bf16.mxu0 0
      %3097 = vmatmul.mubr.bf16.gmra.mxu0 %v2999
      %v3098 = vpop.f32.mrf.mxu0
      %v3099 = vadd.f32 0.0, %v3098
      %v3100 = vpop.f32.mrf.mxu0
      %v3101 = vpop.f32.mrf.mxu0
      %v3102 = vadd.f32 0.0, %v3101
      %v3103 = vpop.f32.mrf.mxu0
      %3104 = vmatprep.mubr.bf16.mxu0 0
      %3105 = vmatmul.mubr.bf16.gmra.mxu0 %v3002
      %v3106 = vpop.f32.mrf.mxu0
      %v3107 = vadd.f32 0.0, %v3106
      %v3108 = vpop.f32.mrf.mxu0
      %v3109 = vpop.f32.mrf.mxu0
      %v3110 = vadd.f32 0.0, %v3109
      %v3111 = vpop.f32.mrf.mxu0
      %3112 = vmatprep.mubr.bf16.mxu0 0
      %3113 = vmatmul.mubr.bf16.gmra.mxu0 %v3005
      %v3114 = vpop.f32.mrf.mxu0
      %v3115 = vadd.f32 0.0, %v3114
      %v3116 = vpop.f32.mrf.mxu0
      %v3117 = vpop.f32.mrf.mxu0
      %v3118 = vadd.f32 0.0, %v3117
      %v3119 = vpop.f32.mrf.mxu0
      %3120 = vmatprep.mubr.bf16.mxu0 0
      %3121 = vmatmul.mubr.bf16.gmra.mxu0 %v3008
      %v3122 = vpop.f32.mrf.mxu0
      %v3123 = vadd.f32 0.0, %v3122
      %v3124 = vpop.f32.mrf.mxu0
      %v3125 = vpop.f32.mrf.mxu0
      %v3126 = vadd.f32 0.0, %v3125
      %v3127 = vpop.f32.mrf.mxu0
      %3128 = vmatprep.mubr.bf16.mxu0 0
      %3129 = vmatmul.mubr.bf16.gmra.mxu0 %v3011
      %v3130 = vpop.f32.mrf.mxu0
      %v3131 = vadd.f32 0.0, %v3130
      %v3132 = vpop.f32.mrf.mxu0
      %v3133 = vpop.f32.mrf.mxu0
      %v3134 = vadd.f32 0.0, %v3133
      %v3135 = vpop.f32.mrf.mxu0
      %3136 = vmatprep.mubr.bf16.mxu0 0
      %3137 = vmatmul.mubr.bf16.gmra.mxu0 %v3014
      %v3138 = vpop.f32.mrf.mxu0
      %v3139 = vadd.f32 0.0, %v3138
      %v3140 = vpop.f32.mrf.mxu0
      %v3141 = vpop.f32.mrf.mxu0
      %v3142 = vadd.f32 0.0, %v3141
      %v3143 = vpop.f32.mrf.mxu0
      %3144 = vmatprep.mubr.bf16.mxu0 0
      %3145 = vmatmul.mubr.bf16.gmra.mxu0 %v3017
      %v3146 = vpop.f32.mrf.mxu0
      %v3147 = vadd.f32 0.0, %v3146
      %v3148 = vpop.f32.mrf.mxu0
      %v3149 = vpop.f32.mrf.mxu0
      %v3150 = vadd.f32 0.0, %v3149
      %v3151 = vpop.f32.mrf.mxu0
      %3152 = vmatprep.mubr.bf16.mxu0 0
      %3153 = vmatmul.mubr.bf16.gmra.mxu0 %v3020
      %v3154 = vpop.f32.mrf.mxu0
      %v3155 = vadd.f32 0.0, %v3154
      %v3156 = vpop.f32.mrf.mxu0
      %v3157 = vpop.f32.mrf.mxu0
      %v3158 = vadd.f32 0.0, %v3157
      %v3159 = vpop.f32.mrf.mxu0
      %3160 = vmatprep.mubr.bf16.mxu0 0
      %3161 = vmatmul.mubr.bf16.gmra.mxu0 %v3023
      %v3162 = vpop.f32.mrf.mxu0
      %v3163 = vadd.f32 0.0, %v3162
      %v3164 = vpop.f32.mrf.mxu0
      %v3165 = vpop.f32.mrf.mxu0
      %v3166 = vadd.f32 0.0, %v3165
      %v3167 = vpop.f32.mrf.mxu0
      %3168 = vmatprep.mubr.bf16.mxu0 0
      %3169 = vmatmul.mubr.bf16.gmra.mxu0 %v3026
      %v3170 = vpop.f32.mrf.mxu0
      %v3171 = vadd.f32 0.0, %v3170
      %v3172 = vpop.f32.mrf.mxu0
      %v3173 = vpop.f32.mrf.mxu0
      %v3174 = vadd.f32 0.0, %v3173
      %v3175 = vpop.f32.mrf.mxu0
      %3176 = vmatprep.mubr.bf16.mxu0 0
      %3177 = vmatmul.mubr.bf16.gmra.mxu0 %v3029
      %v3178 = vpop.f32.mrf.mxu0
      %v3179 = vadd.f32 0.0, %v3178
      %v3180 = vpop.f32.mrf.mxu0
      %v3181 = vpop.f32.mrf.mxu0
      %v3182 = vadd.f32 0.0, %v3181
      %v3183 = vpop.f32.mrf.mxu0
      %3184 = vmatprep.mubr.bf16.mxu0 0
      %3185 = vmatmul.mubr.bf16.gmra.mxu0 %v3032
      %v3186 = vpop.f32.mrf.mxu0
      %v3187 = vadd.f32 0.0, %v3186
      %v3188 = vpop.f32.mrf.mxu0
      %v3189 = vpop.f32.mrf.mxu0
      %v3190 = vadd.f32 0.0, %v3189
      %v3191 = vpop.f32.mrf.mxu0
      %3192 = vmatprep.mubr.bf16.mxu0 0
      %3193 = vmatmul.mubr.bf16.gmra.mxu0 %v3035
      %v3194 = vpop.f32.mrf.mxu0
      %v3195 = vadd.f32 0.0, %v3194
      %v3196 = vpop.f32.mrf.mxu0
      %v3197 = vpop.f32.mrf.mxu0
      %v3198 = vadd.f32 0.0, %v3197
      %v3199 = vpop.f32.mrf.mxu0
      %3200 = vdwg.mxu0
      %v3201 = vadd.f32 %v2731, %v3075
      %v3202 = vadd.f32 %v2732, %v3078
      %v3203 = vadd.f32 %v2733, %v3083
      %v3204 = vadd.f32 %v2734, %v3086
      %v3205 = vadd.f32 %v2735, %v3091
      %v3206 = vadd.f32 %v2736, %v3094
      %v3207 = vadd.f32 %v2737, %v3099
      %v3208 = vadd.f32 %v2738, %v3102
      %v3209 = vadd.f32 %v2739, %v3107
      %v3210 = vadd.f32 %v2740, %v3110
      %v3211 = vadd.f32 %v2741, %v3115
      %v3212 = vadd.f32 %v2742, %v3118
      %v3213 = vadd.f32 %v2743, %v3123
      %v3214 = vadd.f32 %v2744, %v3126
      %v3215 = vadd.f32 %v2745, %v3131
      %v3216 = vadd.f32 %v2746, %v3134
      %v3217 = vadd.f32 %v2747, %v3139
      %v3218 = vadd.f32 %v2748, %v3142
      %v3219 = vadd.f32 %v2749, %v3147
      %v3220 = vadd.f32 %v2750, %v3150
      %v3221 = vadd.f32 %v2751, %v3155
      %v3222 = vadd.f32 %v2752, %v3158
      %v3223 = vadd.f32 %v2753, %v3163
      %v3224 = vadd.f32 %v2754, %v3166
      %v3225 = vadd.f32 %v2755, %v3171
      %v3226 = vadd.f32 %v2756, %v3174
      %v3227 = vadd.f32 %v2757, %v3179
      %v3228 = vadd.f32 %v2758, %v3182
      %v3229 = vadd.f32 %v2759, %v3187
      %v3230 = vadd.f32 %v2760, %v3190
      %v3231 = vadd.f32 %v2761, %v3195
      %v3232 = vadd.f32 %v2762, %v3198
      %s3233 = sadd.s32 %s222, 2
      %s3234 = smul.u32 %s3233, 3
      %s3235 = smul.addr %s3234, 4
      %s3236 = scalar_lea.vmem %s210, %s3235
      %v3237 = vld [vmem:[%s3236] sm:$0xf]
      %v3238 = vld [vmem:[%s3236 + $0x4] sm:$0xf]
      %v3239 = vld [vmem:[%s3236 + $0xc] sm:$0xf]
      %v3240 = vld [vmem:[%s3236 + $0x10] sm:$0xf]
      %v3241 = vld [vmem:[%s3236 + $0x18] sm:$0xf]
      %v3242 = vld [vmem:[%s3236 + $0x1c] sm:$0xf]
      %v3243 = vld [vmem:[%s3236 + $0x24] sm:$0xf]
      %v3244 = vld [vmem:[%s3236 + $0x28] sm:$0xf]
      %v3245 = vld [vmem:[%s3236 + $0x30] sm:$0xf]
      %v3246 = vld [vmem:[%s3236 + $0x34] sm:$0xf]
      %v3247 = vld [vmem:[%s3236 + $0x3c] sm:$0xf]
      %v3248 = vld [vmem:[%s3236 + $0x40] sm:$0xf]
      %v3249 = vld [vmem:[%s3236 + $0x48] sm:$0xf]
      %v3250 = vld [vmem:[%s3236 + $0x4c] sm:$0xf]
      %v3251 = vld [vmem:[%s3236 + $0x54] sm:$0xf]
      %v3252 = vld [vmem:[%s3236 + $0x58] sm:$0xf]
      %v3253 = vld [vmem:[%s3236 + $0x60] sm:$0xf]
      %v3254 = vld [vmem:[%s3236 + $0x64] sm:$0xf]
      %v3255 = vld [vmem:[%s3236 + $0x6c] sm:$0xf]
      %v3256 = vld [vmem:[%s3236 + $0x70] sm:$0xf]
      %v3257 = vld [vmem:[%s3236 + $0x78] sm:$0xf]
      %v3258 = vld [vmem:[%s3236 + $0x7c] sm:$0xf]
      %v3259 = vld [vmem:[%s3236 + $0x84] sm:$0xf]
      %v3260 = vld [vmem:[%s3236 + $0x88] sm:$0xf]
      %v3261 = vld [vmem:[%s3236 + $0x90] sm:$0xf]
      %v3262 = vld [vmem:[%s3236 + $0x94] sm:$0xf]
      %v3263 = vld [vmem:[%s3236 + $0x9c] sm:$0xf]
      %v3264 = vld [vmem:[%s3236 + $0xa0] sm:$0xf]
      %v3265 = vld [vmem:[%s3236 + $0xa8] sm:$0xf]
      %v3266 = vld [vmem:[%s3236 + $0xac] sm:$0xf]
      %v3267 = vld [vmem:[%s3236 + $0xb4] sm:$0xf]
      %v3268 = vld [vmem:[%s3236 + $0xb8] sm:$0xf]
      %s3269 = scalar_lea.vmem %s1, 12
      %v3270 = vld [vmem:[%s3269] sm:$0x3]
      %v3303 = vunpack.c.l.b16 %v3237
      %v3304 = vunpack.c.l.b16 %v3238
      %v3305 = vunpack.c.l.b16 %v3239
      %v3306 = vunpack.c.l.b16 %v3240
      %v3307 = vunpack.c.l.b16 %v3241
      %v3308 = vunpack.c.l.b16 %v3242
      %v3309 = vunpack.c.l.b16 %v3243
      %v3310 = vunpack.c.l.b16 %v3244
      %v3311 = vunpack.c.l.b16 %v3245
      %v3312 = vunpack.c.l.b16 %v3246
      %v3313 = vunpack.c.l.b16 %v3247
      %v3314 = vunpack.c.l.b16 %v3248
      %v3315 = vunpack.c.l.b16 %v3249
      %v3316 = vunpack.c.l.b16 %v3250
      %v3317 = vunpack.c.l.b16 %v3251
      %v3318 = vunpack.c.l.b16 %v3252
      %v3319 = vunpack.c.l.b16 %v3253
      %v3320 = vunpack.c.l.b16 %v3254
      %v3321 = vunpack.c.l.b16 %v3255
      %v3322 = vunpack.c.l.b16 %v3256
      %v3323 = vunpack.c.l.b16 %v3257
      %v3324 = vunpack.c.l.b16 %v3258
      %v3325 = vunpack.c.l.b16 %v3259
      %v3326 = vunpack.c.l.b16 %v3260
      %v3327 = vunpack.c.l.b16 %v3261
      %v3328 = vunpack.c.l.b16 %v3262
      %v3329 = vunpack.c.l.b16 %v3263
      %v3330 = vunpack.c.l.b16 %v3264
      %v3331 = vunpack.c.l.b16 %v3265
      %v3332 = vunpack.c.l.b16 %v3266
      %v3333 = vunpack.c.l.b16 %v3267
      %v3334 = vunpack.c.l.b16 %v3268
      %v3335 = vpack.c.b16 %v3304, %v3303
      %v3336 = vpack.c.b16 %v3306, %v3305
      %v3337 = vpack.c.b16 %v3308, %v3307
      %v3338 = vpack.c.b16 %v3310, %v3309
      %v3339 = vpack.c.b16 %v3312, %v3311
      %v3340 = vpack.c.b16 %v3314, %v3313
      %v3341 = vpack.c.b16 %v3316, %v3315
      %v3342 = vpack.c.b16 %v3318, %v3317
      %v3343 = vpack.c.b16 %v3320, %v3319
      %v3344 = vpack.c.b16 %v3322, %v3321
      %v3345 = vpack.c.b16 %v3324, %v3323
      %v3346 = vpack.c.b16 %v3326, %v3325
      %v3347 = vpack.c.b16 %v3328, %v3327
      %v3348 = vpack.c.b16 %v3330, %v3329
      %v3349 = vpack.c.b16 %v3332, %v3331
      %v3350 = vpack.c.b16 %v3334, %v3333
      %v3352 = vsel %vm712, %v3335, 0
      %v3355 = vsel %vm712, %v3336, 0
      %v3358 = vsel %vm712, %v3337, 0
      %v3361 = vsel %vm712, %v3338, 0
      %v3364 = vsel %vm712, %v3339, 0
      %v3367 = vsel %vm712, %v3340, 0
      %v3370 = vsel %vm712, %v3341, 0
      %v3373 = vsel %vm712, %v3342, 0
      %v3376 = vsel %vm712, %v3343, 0
      %v3379 = vsel %vm712, %v3344, 0
      %v3382 = vsel %vm712, %v3345, 0
      %v3385 = vsel %vm712, %v3346, 0
      %v3388 = vsel %vm712, %v3347, 0
      %v3391 = vsel %vm712, %v3348, 0
      %v3394 = vsel %vm712, %v3349, 0
      %v3397 = vsel %vm712, %v3350, 0
      %v3400 = vsel %vm761, %v3270, 0
      %3402 = vmatprep.subr.bf16.mxu0 0
      %3403 = vmatpush1.bf16.msra.mxu0 0
      %3404 = vmatprep.subr.bf16.mxu0 0
      %3405 = vmatpush1.bf16.msra.mxu0 0
      %3406 = vmatprep.subr.bf16.mxu0 0
      %3407 = vmatpush1.bf16.msra.mxu0 0
      %3408 = vmatprep.subr.bf16.mxu0 0
      %3409 = vmatpush1.bf16.msra.mxu0 0
      %3410 = vmatprep.subr.bf16.mxu0 0
      %3411 = vmatpush1.bf16.msra.mxu0 0
      %3412 = vmatprep.subr.bf16.mxu0 0
      %3413 = vmatpush1.bf16.msra.mxu0 0
      %3414 = vmatprep.subr.bf16.mxu0 0
      %3415 = vmatpush1.bf16.msra.mxu0 0
      %3416 = vmatprep.subr.bf16.mxu0 0
      %3417 = vmatpush1.bf16.msra.mxu0 %v3400
      %3418 = vmatprep.subr.bf16.mxu0 0
      %3419 = vmatpush2.bf16.msra.mxu0 0
      %3420 = vmatprep.subr.bf16.mxu0 0
      %3421 = vmatpush2.bf16.msra.mxu0 0
      %3422 = vmatprep.subr.bf16.mxu0 0
      %3423 = vmatpush2.bf16.msra.mxu0 0
      %3424 = vmatprep.subr.bf16.mxu0 0
      %3425 = vmatpush2.bf16.msra.mxu0 0
      %3426 = vmatprep.subr.bf16.mxu0 0
      %3427 = vmatpush2.bf16.msra.mxu0 0
      %3428 = vmatprep.subr.bf16.mxu0 0
      %3429 = vmatpush2.bf16.msra.mxu0 0
      %3430 = vmatprep.subr.bf16.mxu0 0
      %3431 = vmatpush2.bf16.msra.mxu0 0
      %3432 = vmatprep.subr.bf16.mxu0 0
      %3433 = vmatpush2.bf16.msra.mxu0 0
      %3434 = vmatprep.mubr.bf16.mxu0 0
      %3435 = vmatmul.mubr.bf16.gmra.mxu0 %v3352
      %v3436 = vpop.f32.mrf.mxu0
      %v3437 = vadd.f32 0.0, %v3436
      %v3438 = vpop.f32.mrf.mxu0
      %v3439 = vpop.f32.mrf.mxu0
      %v3440 = vadd.f32 0.0, %v3439
      %v3441 = vpop.f32.mrf.mxu0
      %3442 = vmatprep.mubr.bf16.mxu0 0
      %3443 = vmatmul.mubr.bf16.gmra.mxu0 %v3355
      %v3444 = vpop.f32.mrf.mxu0
      %v3445 = vadd.f32 0.0, %v3444
      %v3446 = vpop.f32.mrf.mxu0
      %v3447 = vpop.f32.mrf.mxu0
      %v3448 = vadd.f32 0.0, %v3447
      %v3449 = vpop.f32.mrf.mxu0
      %3450 = vmatprep.mubr.bf16.mxu0 0
      %3451 = vmatmul.mubr.bf16.gmra.mxu0 %v3358
      %v3452 = vpop.f32.mrf.mxu0
      %v3453 = vadd.f32 0.0, %v3452
      %v3454 = vpop.f32.mrf.mxu0
      %v3455 = vpop.f32.mrf.mxu0
      %v3456 = vadd.f32 0.0, %v3455
      %v3457 = vpop.f32.mrf.mxu0
      %3458 = vmatprep.mubr.bf16.mxu0 0
      %3459 = vmatmul.mubr.bf16.gmra.mxu0 %v3361
      %v3460 = vpop.f32.mrf.mxu0
      %v3461 = vadd.f32 0.0, %v3460
      %v3462 = vpop.f32.mrf.mxu0
      %v3463 = vpop.f32.mrf.mxu0
      %v3464 = vadd.f32 0.0, %v3463
      %v3465 = vpop.f32.mrf.mxu0
      %3466 = vmatprep.mubr.bf16.mxu0 0
      %3467 = vmatmul.mubr.bf16.gmra.mxu0 %v3364
      %v3468 = vpop.f32.mrf.mxu0
      %v3469 = vadd.f32 0.0, %v3468
      %v3470 = vpop.f32.mrf.mxu0
      %v3471 = vpop.f32.mrf.mxu0
      %v3472 = vadd.f32 0.0, %v3471
      %v3473 = vpop.f32.mrf.mxu0
      %3474 = vmatprep.mubr.bf16.mxu0 0
      %3475 = vmatmul.mubr.bf16.gmra.mxu0 %v3367
      %v3476 = vpop.f32.mrf.mxu0
      %v3477 = vadd.f32 0.0, %v3476
      %v3478 = vpop.f32.mrf.mxu0
      %v3479 = vpop.f32.mrf.mxu0
      %v3480 = vadd.f32 0.0, %v3479
      %v3481 = vpop.f32.mrf.mxu0
      %3482 = vmatprep.mubr.bf16.mxu0 0
      %3483 = vmatmul.mubr.bf16.gmra.mxu0 %v3370
      %v3484 = vpop.f32.mrf.mxu0
      %v3485 = vadd.f32 0.0, %v3484
      %v3486 = vpop.f32.mrf.mxu0
      %v3487 = vpop.f32.mrf.mxu0
      %v3488 = vadd.f32 0.0, %v3487
      %v3489 = vpop.f32.mrf.mxu0
      %3490 = vmatprep.mubr.bf16.mxu0 0
      %3491 = vmatmul.mubr.bf16.gmra.mxu0 %v3373
      %v3492 = vpop.f32.mrf.mxu0
      %v3493 = vadd.f32 0.0, %v3492
      %v3494 = vpop.f32.mrf.mxu0
      %v3495 = vpop.f32.mrf.mxu0
      %v3496 = vadd.f32 0.0, %v3495
      %v3497 = vpop.f32.mrf.mxu0
      %3498 = vmatprep.mubr.bf16.mxu0 0
      %3499 = vmatmul.mubr.bf16.gmra.mxu0 %v3376
      %v3500 = vpop.f32.mrf.mxu0
      %v3501 = vadd.f32 0.0, %v3500
      %v3502 = vpop.f32.mrf.mxu0
      %v3503 = vpop.f32.mrf.mxu0
      %v3504 = vadd.f32 0.0, %v3503
      %v3505 = vpop.f32.mrf.mxu0
      %3506 = vmatprep.mubr.bf16.mxu0 0
      %3507 = vmatmul.mubr.bf16.gmra.mxu0 %v3379
      %v3508 = vpop.f32.mrf.mxu0
      %v3509 = vadd.f32 0.0, %v3508
      %v3510 = vpop.f32.mrf.mxu0
      %v3511 = vpop.f32.mrf.mxu0
      %v3512 = vadd.f32 0.0, %v3511
      %v3513 = vpop.f32.mrf.mxu0
      %3514 = vmatprep.mubr.bf16.mxu0 0
      %3515 = vmatmul.mubr.bf16.gmra.mxu0 %v3382
      %v3516 = vpop.f32.mrf.mxu0
      %v3517 = vadd.f32 0.0, %v3516
      %v3518 = vpop.f32.mrf.mxu0
      %v3519 = vpop.f32.mrf.mxu0
      %v3520 = vadd.f32 0.0, %v3519
      %v3521 = vpop.f32.mrf.mxu0
      %3522 = vmatprep.mubr.bf16.mxu0 0
      %3523 = vmatmul.mubr.bf16.gmra.mxu0 %v3385
      %v3524 = vpop.f32.mrf.mxu0
      %v3525 = vadd.f32 0.0, %v3524
      %v3526 = vpop.f32.mrf.mxu0
      %v3527 = vpop.f32.mrf.mxu0
      %v3528 = vadd.f32 0.0, %v3527
      %v3529 = vpop.f32.mrf.mxu0
      %3530 = vmatprep.mubr.bf16.mxu0 0
      %3531 = vmatmul.mubr.bf16.gmra.mxu0 %v3388
      %v3532 = vpop.f32.mrf.mxu0
      %v3533 = vadd.f32 0.0, %v3532
      %v3534 = vpop.f32.mrf.mxu0
      %v3535 = vpop.f32.mrf.mxu0
      %v3536 = vadd.f32 0.0, %v3535
      %v3537 = vpop.f32.mrf.mxu0
      %3538 = vmatprep.mubr.bf16.mxu0 0
      %3539 = vmatmul.mubr.bf16.gmra.mxu0 %v3391
      %v3540 = vpop.f32.mrf.mxu0
      %v3541 = vadd.f32 0.0, %v3540
      %v3542 = vpop.f32.mrf.mxu0
      %v3543 = vpop.f32.mrf.mxu0
      %v3544 = vadd.f32 0.0, %v3543
      %v3545 = vpop.f32.mrf.mxu0
      %3546 = vmatprep.mubr.bf16.mxu0 0
      %3547 = vmatmul.mubr.bf16.gmra.mxu0 %v3394
      %v3548 = vpop.f32.mrf.mxu0
      %v3549 = vadd.f32 0.0, %v3548
      %v3550 = vpop.f32.mrf.mxu0
      %v3551 = vpop.f32.mrf.mxu0
      %v3552 = vadd.f32 0.0, %v3551
      %v3553 = vpop.f32.mrf.mxu0
      %3554 = vmatprep.mubr.bf16.mxu0 0
      %3555 = vmatmul.mubr.bf16.gmra.mxu0 %v3397
      %v3556 = vpop.f32.mrf.mxu0
      %v3557 = vadd.f32 0.0, %v3556
      %v3558 = vpop.f32.mrf.mxu0
      %v3559 = vpop.f32.mrf.mxu0
      %v3560 = vadd.f32 0.0, %v3559
      %v3561 = vpop.f32.mrf.mxu0
      %3562 = vdwg.mxu0
      %v3563 = vadd.f32 %v3201, %v3437
      %v3564 = vadd.f32 %v3202, %v3440
      %v3565 = vadd.f32 %v3203, %v3445
      %v3566 = vadd.f32 %v3204, %v3448
      %v3567 = vadd.f32 %v3205, %v3453
      %v3568 = vadd.f32 %v3206, %v3456
      %v3569 = vadd.f32 %v3207, %v3461
      %v3570 = vadd.f32 %v3208, %v3464
      %v3571 = vadd.f32 %v3209, %v3469
      %v3572 = vadd.f32 %v3210, %v3472
      %v3573 = vadd.f32 %v3211, %v3477
      %v3574 = vadd.f32 %v3212, %v3480
      %v3575 = vadd.f32 %v3213, %v3485
      %v3576 = vadd.f32 %v3214, %v3488
      %v3577 = vadd.f32 %v3215, %v3493
      %v3578 = vadd.f32 %v3216, %v3496
      %v3579 = vadd.f32 %v3217, %v3501
      %v3580 = vadd.f32 %v3218, %v3504
      %v3581 = vadd.f32 %v3219, %v3509
      %v3582 = vadd.f32 %v3220, %v3512
      %v3583 = vadd.f32 %v3221, %v3517
      %v3584 = vadd.f32 %v3222, %v3520
      %v3585 = vadd.f32 %v3223, %v3525
      %v3586 = vadd.f32 %v3224, %v3528
      %v3587 = vadd.f32 %v3225, %v3533
      %v3588 = vadd.f32 %v3226, %v3536
      %v3589 = vadd.f32 %v3227, %v3541
      %v3590 = vadd.f32 %v3228, %v3544
      %v3591 = vadd.f32 %v3229, %v3549
      %v3592 = vadd.f32 %v3230, %v3552
      %v3593 = vadd.f32 %v3231, %v3557
      %v3594 = vadd.f32 %v3232, %v3560
      %v3595 = vld [vmem:[%s3236] sm:$0xf]
      %v3596 = vld [vmem:[%s3236 + $0x4] sm:$0xf]
      %v3597 = vld [vmem:[%s3236 + $0x8] sm:$0x1]
      %v3598 = vld [vmem:[%s3236 + $0xc] sm:$0xf]
      %v3599 = vld [vmem:[%s3236 + $0x10] sm:$0xf]
      %v3600 = vld [vmem:[%s3236 + $0x14] sm:$0x1]
      %v3601 = vld [vmem:[%s3236 + $0x18] sm:$0xf]
      %v3602 = vld [vmem:[%s3236 + $0x1c] sm:$0xf]
      %v3603 = vld [vmem:[%s3236 + $0x20] sm:$0x1]
      %v3604 = vld [vmem:[%s3236 + $0x24] sm:$0xf]
      %v3605 = vld [vmem:[%s3236 + $0x28] sm:$0xf]
      %v3606 = vld [vmem:[%s3236 + $0x2c] sm:$0x1]
      %v3607 = vld [vmem:[%s3236 + $0x30] sm:$0xf]
      %v3608 = vld [vmem:[%s3236 + $0x34] sm:$0xf]
      %v3609 = vld [vmem:[%s3236 + $0x38] sm:$0x1]
      %v3610 = vld [vmem:[%s3236 + $0x3c] sm:$0xf]
      %v3611 = vld [vmem:[%s3236 + $0x40] sm:$0xf]
      %v3612 = vld [vmem:[%s3236 + $0x44] sm:$0x1]
      %v3613 = vld [vmem:[%s3236 + $0x48] sm:$0xf]
      %v3614 = vld [vmem:[%s3236 + $0x4c] sm:$0xf]
      %v3615 = vld [vmem:[%s3236 + $0x50] sm:$0x1]
      %v3616 = vld [vmem:[%s3236 + $0x54] sm:$0xf]
      %v3617 = vld [vmem:[%s3236 + $0x58] sm:$0xf]
      %v3618 = vld [vmem:[%s3236 + $0x5c] sm:$0x1]
      %v3619 = vld [vmem:[%s3236 + $0x60] sm:$0xf]
      %v3620 = vld [vmem:[%s3236 + $0x64] sm:$0xf]
      %v3621 = vld [vmem:[%s3236 + $0x68] sm:$0x1]
      %v3622 = vld [vmem:[%s3236 + $0x6c] sm:$0xf]
      %v3623 = vld [vmem:[%s3236 + $0x70] sm:$0xf]
      %v3624 = vld [vmem:[%s3236 + $0x74] sm:$0x1]
      %v3625 = vld [vmem:[%s3236 + $0x78] sm:$0xf]
      %v3626 = vld [vmem:[%s3236 + $0x7c] sm:$0xf]
      %v3627 = vld [vmem:[%s3236 + $0x80] sm:$0x1]
      %v3628 = vld [vmem:[%s3236 + $0x84] sm:$0xf]
      %v3629 = vld [vmem:[%s3236 + $0x88] sm:$0xf]
      %v3630 = vld [vmem:[%s3236 + $0x8c] sm:$0x1]
      %v3631 = vld [vmem:[%s3236 + $0x90] sm:$0xf]
      %v3632 = vld [vmem:[%s3236 + $0x94] sm:$0xf]
      %v3633 = vld [vmem:[%s3236 + $0x98] sm:$0x1]
      %v3634 = vld [vmem:[%s3236 + $0x9c] sm:$0xf]
      %v3635 = vld [vmem:[%s3236 + $0xa0] sm:$0xf]
      %v3636 = vld [vmem:[%s3236 + $0xa4] sm:$0x1]
      %v3637 = vld [vmem:[%s3236 + $0xa8] sm:$0xf]
      %v3638 = vld [vmem:[%s3236 + $0xac] sm:$0xf]
      %v3639 = vld [vmem:[%s3236 + $0xb0] sm:$0x1]
      %v3640 = vld [vmem:[%s3236 + $0xb4] sm:$0xf]
      %v3641 = vld [vmem:[%s3236 + $0xb8] sm:$0xf]
      %v3642 = vld [vmem:[%s3236 + $0xbc] sm:$0x1]
      %v3644 = vshrl.u32 %v3595, 16
      %v3646 = vrot.slane %v3644, 4
      %v3647 = vshll.u32 %v3595, 16
      %v3649 = vrot.slane %v3647, 5
      %v3650 = vor.u32 %v3646, %v3649
      %v3651 = vrot.slane %v3650, 4
      %v3653 = vshll.u32 %v3596, 16
      %v3655 = vrot.slane %v3653, 5
      %v3656 = vsel %vm277, %v3651, %v3655
      %v3657 = vshrl.u32 %v3596, 16
      %v3659 = vrot.slane %v3657, 4
      %v3660 = vor.u32 %v3659, %v3655
      %v3661 = vrot.slane %v3660, 4
      %v3663 = vshll.u32 %v3597, 16
      %v3665 = vrot.slane %v3663, 5
      %v3666 = vsel %vm277, %v3661, %v3665
      %v3668 = vshrl.u32 %v3598, 16
      %v3670 = vrot.slane %v3668, 4
      %v3671 = vshll.u32 %v3598, 16
      %v3673 = vrot.slane %v3671, 5
      %v3674 = vor.u32 %v3670, %v3673
      %v3675 = vrot.slane %v3674, 4
      %v3677 = vshll.u32 %v3599, 16
      %v3679 = vrot.slane %v3677, 5
      %v3680 = vsel %vm277, %v3675, %v3679
      %v3681 = vshrl.u32 %v3599, 16
      %v3683 = vrot.slane %v3681, 4
      %v3684 = vor.u32 %v3683, %v3679
      %v3685 = vrot.slane %v3684, 4
      %v3687 = vshll.u32 %v3600, 16
      %v3689 = vrot.slane %v3687, 5
      %v3690 = vsel %vm277, %v3685, %v3689
      %v3692 = vshrl.u32 %v3601, 16
      %v3694 = vrot.slane %v3692, 4
      %v3695 = vshll.u32 %v3601, 16
      %v3697 = vrot.slane %v3695, 5
      %v3698 = vor.u32 %v3694, %v3697
      %v3699 = vrot.slane %v3698, 4
      %v3701 = vshll.u32 %v3602, 16
      %v3703 = vrot.slane %v3701, 5
      %v3704 = vsel %vm277, %v3699, %v3703
      %v3705 = vshrl.u32 %v3602, 16
      %v3707 = vrot.slane %v3705, 4
      %v3708 = vor.u32 %v3707, %v3703
      %v3709 = vrot.slane %v3708, 4
      %v3711 = vshll.u32 %v3603, 16
      %v3713 = vrot.slane %v3711, 5
      %v3714 = vsel %vm277, %v3709, %v3713
      %v3716 = vshrl.u32 %v3604, 16
      %v3718 = vrot.slane %v3716, 4
      %v3719 = vshll.u32 %v3604, 16
      %v3721 = vrot.slane %v3719, 5
      %v3722 = vor.u32 %v3718, %v3721
      %v3723 = vrot.slane %v3722, 4
      %v3725 = vshll.u32 %v3605, 16
      %v3727 = vrot.slane %v3725, 5
      %v3728 = vsel %vm277, %v3723, %v3727
      %v3729 = vshrl.u32 %v3605, 16
      %v3731 = vrot.slane %v3729, 4
      %v3732 = vor.u32 %v3731, %v3727
      %v3733 = vrot.slane %v3732, 4
      %v3735 = vshll.u32 %v3606, 16
      %v3737 = vrot.slane %v3735, 5
      %v3738 = vsel %vm277, %v3733, %v3737
      %v3740 = vshrl.u32 %v3607, 16
      %v3742 = vrot.slane %v3740, 4
      %v3743 = vshll.u32 %v3607, 16
      %v3745 = vrot.slane %v3743, 5
      %v3746 = vor.u32 %v3742, %v3745
      %v3747 = vrot.slane %v3746, 4
      %v3749 = vshll.u32 %v3608, 16
      %v3751 = vrot.slane %v3749, 5
      %v3752 = vsel %vm277, %v3747, %v3751
      %v3753 = vshrl.u32 %v3608, 16
      %v3755 = vrot.slane %v3753, 4
      %v3756 = vor.u32 %v3755, %v3751
      %v3757 = vrot.slane %v3756, 4
      %v3759 = vshll.u32 %v3609, 16
      %v3761 = vrot.slane %v3759, 5
      %v3762 = vsel %vm277, %v3757, %v3761
      %v3764 = vshrl.u32 %v3610, 16
      %v3766 = vrot.slane %v3764, 4
      %v3767 = vshll.u32 %v3610, 16
      %v3769 = vrot.slane %v3767, 5
      %v3770 = vor.u32 %v3766, %v3769
      %v3771 = vrot.slane %v3770, 4
      %v3773 = vshll.u32 %v3611, 16
      %v3775 = vrot.slane %v3773, 5
      %v3776 = vsel %vm277, %v3771, %v3775
      %v3777 = vshrl.u32 %v3611, 16
      %v3779 = vrot.slane %v3777, 4
      %v3780 = vor.u32 %v3779, %v3775
      %v3781 = vrot.slane %v3780, 4
      %v3783 = vshll.u32 %v3612, 16
      %v3785 = vrot.slane %v3783, 5
      %v3786 = vsel %vm277, %v3781, %v3785
      %v3788 = vshrl.u32 %v3613, 16
      %v3790 = vrot.slane %v3788, 4
      %v3791 = vshll.u32 %v3613, 16
      %v3793 = vrot.slane %v3791, 5
      %v3794 = vor.u32 %v3790, %v3793
      %v3795 = vrot.slane %v3794, 4
      %v3797 = vshll.u32 %v3614, 16
      %v3799 = vrot.slane %v3797, 5
      %v3800 = vsel %vm277, %v3795, %v3799
      %v3801 = vshrl.u32 %v3614, 16
      %v3803 = vrot.slane %v3801, 4
      %v3804 = vor.u32 %v3803, %v3799
      %v3805 = vrot.slane %v3804, 4
      %v3807 = vshll.u32 %v3615, 16
      %v3809 = vrot.slane %v3807, 5
      %v3810 = vsel %vm277, %v3805, %v3809
      %v3812 = vshrl.u32 %v3616, 16
      %v3814 = vrot.slane %v3812, 4
      %v3815 = vshll.u32 %v3616, 16
      %v3817 = vrot.slane %v3815, 5
      %v3818 = vor.u32 %v3814, %v3817
      %v3819 = vrot.slane %v3818, 4
      %v3821 = vshll.u32 %v3617, 16
      %v3823 = vrot.slane %v3821, 5
      %v3824 = vsel %vm277, %v3819, %v3823
      %v3825 = vshrl.u32 %v3617, 16
      %v3827 = vrot.slane %v3825, 4
      %v3828 = vor.u32 %v3827, %v3823
      %v3829 = vrot.slane %v3828, 4
      %v3831 = vshll.u32 %v3618, 16
      %v3833 = vrot.slane %v3831, 5
      %v3834 = vsel %vm277, %v3829, %v3833
      %v3836 = vshrl.u32 %v3619, 16
      %v3838 = vrot.slane %v3836, 4
      %v3839 = vshll.u32 %v3619, 16
      %v3841 = vrot.slane %v3839, 5
      %v3842 = vor.u32 %v3838, %v3841
      %v3843 = vrot.slane %v3842, 4
      %v3845 = vshll.u32 %v3620, 16
      %v3847 = vrot.slane %v3845, 5
      %v3848 = vsel %vm277, %v3843, %v3847
      %v3849 = vshrl.u32 %v3620, 16
      %v3851 = vrot.slane %v3849, 4
      %v3852 = vor.u32 %v3851, %v3847
      %v3853 = vrot.slane %v3852, 4
      %v3855 = vshll.u32 %v3621, 16
      %v3857 = vrot.slane %v3855, 5
      %v3858 = vsel %vm277, %v3853, %v3857
      %v3860 = vshrl.u32 %v3622, 16
      %v3862 = vrot.slane %v3860, 4
      %v3863 = vshll.u32 %v3622, 16
      %v3865 = vrot.slane %v3863, 5
      %v3866 = vor.u32 %v3862, %v3865
      %v3867 = vrot.slane %v3866, 4
      %v3869 = vshll.u32 %v3623, 16
      %v3871 = vrot.slane %v3869, 5
      %v3872 = vsel %vm277, %v3867, %v3871
      %v3873 = vshrl.u32 %v3623, 16
      %v3875 = vrot.slane %v3873, 4
      %v3876 = vor.u32 %v3875, %v3871
      %v3877 = vrot.slane %v3876, 4
      %v3879 = vshll.u32 %v3624, 16
      %v3881 = vrot.slane %v3879, 5
      %v3882 = vsel %vm277, %v3877, %v3881
      %v3884 = vshrl.u32 %v3625, 16
      %v3886 = vrot.slane %v3884, 4
      %v3887 = vshll.u32 %v3625, 16
      %v3889 = vrot.slane %v3887, 5
      %v3890 = vor.u32 %v3886, %v3889
      %v3891 = vrot.slane %v3890, 4
      %v3893 = vshll.u32 %v3626, 16
      %v3895 = vrot.slane %v3893, 5
      %v3896 = vsel %vm277, %v3891, %v3895
      %v3897 = vshrl.u32 %v3626, 16
      %v3899 = vrot.slane %v3897, 4
      %v3900 = vor.u32 %v3899, %v3895
      %v3901 = vrot.slane %v3900, 4
      %v3903 = vshll.u32 %v3627, 16
      %v3905 = vrot.slane %v3903, 5
      %v3906 = vsel %vm277, %v3901, %v3905
      %v3908 = vshrl.u32 %v3628, 16
      %v3910 = vrot.slane %v3908, 4
      %v3911 = vshll.u32 %v3628, 16
      %v3913 = vrot.slane %v3911, 5
      %v3914 = vor.u32 %v3910, %v3913
      %v3915 = vrot.slane %v3914, 4
      %v3917 = vshll.u32 %v3629, 16
      %v3919 = vrot.slane %v3917, 5
      %v3920 = vsel %vm277, %v3915, %v3919
      %v3921 = vshrl.u32 %v3629, 16
      %v3923 = vrot.slane %v3921, 4
      %v3924 = vor.u32 %v3923, %v3919
      %v3925 = vrot.slane %v3924, 4
      %v3927 = vshll.u32 %v3630, 16
      %v3929 = vrot.slane %v3927, 5
      %v3930 = vsel %vm277, %v3925, %v3929
      %v3932 = vshrl.u32 %v3631, 16
      %v3934 = vrot.slane %v3932, 4
      %v3935 = vshll.u32 %v3631, 16
      %v3937 = vrot.slane %v3935, 5
      %v3938 = vor.u32 %v3934, %v3937
      %v3939 = vrot.slane %v3938, 4
      %v3941 = vshll.u32 %v3632, 16
      %v3943 = vrot.slane %v3941, 5
      %v3944 = vsel %vm277, %v3939, %v3943
      %v3945 = vshrl.u32 %v3632, 16
      %v3947 = vrot.slane %v3945, 4
      %v3948 = vor.u32 %v3947, %v3943
      %v3949 = vrot.slane %v3948, 4
      %v3951 = vshll.u32 %v3633, 16
      %v3953 = vrot.slane %v3951, 5
      %v3954 = vsel %vm277, %v3949, %v3953
      %v3956 = vshrl.u32 %v3634, 16
      %v3958 = vrot.slane %v3956, 4
      %v3959 = vshll.u32 %v3634, 16
      %v3961 = vrot.slane %v3959, 5
      %v3962 = vor.u32 %v3958, %v3961
      %v3963 = vrot.slane %v3962, 4
      %v3965 = vshll.u32 %v3635, 16
      %v3967 = vrot.slane %v3965, 5
      %v3968 = vsel %vm277, %v3963, %v3967
      %v3969 = vshrl.u32 %v3635, 16
      %v3971 = vrot.slane %v3969, 4
      %v3972 = vor.u32 %v3971, %v3967
      %v3973 = vrot.slane %v3972, 4
      %v3975 = vshll.u32 %v3636, 16
      %v3977 = vrot.slane %v3975, 5
      %v3978 = vsel %vm277, %v3973, %v3977
      %v3980 = vshrl.u32 %v3637, 16
      %v3982 = vrot.slane %v3980, 4
      %v3983 = vshll.u32 %v3637, 16
      %v3985 = vrot.slane %v3983, 5
      %v3986 = vor.u32 %v3982, %v3985
      %v3987 = vrot.slane %v3986, 4
      %v3989 = vshll.u32 %v3638, 16
      %v3991 = vrot.slane %v3989, 5
      %v3992 = vsel %vm277, %v3987, %v3991
      %v3993 = vshrl.u32 %v3638, 16
      %v3995 = vrot.slane %v3993, 4
      %v3996 = vor.u32 %v3995, %v3991
      %v3997 = vrot.slane %v3996, 4
      %v3999 = vshll.u32 %v3639, 16
      %v4001 = vrot.slane %v3999, 5
      %v4002 = vsel %vm277, %v3997, %v4001
      %v4004 = vshrl.u32 %v3640, 16
      %v4006 = vrot.slane %v4004, 4
      %v4007 = vshll.u32 %v3640, 16
      %v4009 = vrot.slane %v4007, 5
      %v4010 = vor.u32 %v4006, %v4009
      %v4011 = vrot.slane %v4010, 4
      %v4013 = vshll.u32 %v3641, 16
      %v4015 = vrot.slane %v4013, 5
      %v4016 = vsel %vm277, %v4011, %v4015
      %v4017 = vshrl.u32 %v3641, 16
      %v4019 = vrot.slane %v4017, 4
      %v4020 = vor.u32 %v4019, %v4015
      %v4021 = vrot.slane %v4020, 4
      %v4023 = vshll.u32 %v3642, 16
      %v4025 = vrot.slane %v4023, 5
      %v4026 = vsel %vm277, %v4021, %v4025
      %s4027 = scalar_lea.vmem %s1, 14
      %v4028 = vld [vmem:[%s4027] sm:$0x3]
      %v4029 = vunpack.c.l.b16 %v3656
      %v4030 = vunpack.c.l.b16 %v3666
      %v4031 = vunpack.c.l.b16 %v3680
      %v4032 = vunpack.c.l.b16 %v3690
      %v4033 = vunpack.c.l.b16 %v3704
      %v4034 = vunpack.c.l.b16 %v3714
      %v4035 = vunpack.c.l.b16 %v3728
      %v4036 = vunpack.c.l.b16 %v3738
      %v4037 = vunpack.c.l.b16 %v3752
      %v4038 = vunpack.c.l.b16 %v3762
      %v4039 = vunpack.c.l.b16 %v3776
      %v4040 = vunpack.c.l.b16 %v3786
      %v4041 = vunpack.c.l.b16 %v3800
      %v4042 = vunpack.c.l.b16 %v3810
      %v4043 = vunpack.c.l.b16 %v3824
      %v4044 = vunpack.c.l.b16 %v3834
      %v4045 = vunpack.c.l.b16 %v3848
      %v4046 = vunpack.c.l.b16 %v3858
      %v4047 = vunpack.c.l.b16 %v3872
      %v4048 = vunpack.c.l.b16 %v3882
      %v4049 = vunpack.c.l.b16 %v3896
      %v4050 = vunpack.c.l.b16 %v3906
      %v4051 = vunpack.c.l.b16 %v3920
      %v4052 = vunpack.c.l.b16 %v3930
      %v4053 = vunpack.c.l.b16 %v3944
      %v4054 = vunpack.c.l.b16 %v3954
      %v4055 = vunpack.c.l.b16 %v3968
      %v4056 = vunpack.c.l.b16 %v3978
      %v4057 = vunpack.c.l.b16 %v3992
      %v4058 = vunpack.c.l.b16 %v4002
      %v4059 = vunpack.c.l.b16 %v4016
      %v4060 = vunpack.c.l.b16 %v4026
      %v4061 = vpack.c.b16 %v4030, %v4029
      %v4062 = vpack.c.b16 %v4032, %v4031
      %v4063 = vpack.c.b16 %v4034, %v4033
      %v4064 = vpack.c.b16 %v4036, %v4035
      %v4065 = vpack.c.b16 %v4038, %v4037
      %v4066 = vpack.c.b16 %v4040, %v4039
      %v4067 = vpack.c.b16 %v4042, %v4041
      %v4068 = vpack.c.b16 %v4044, %v4043
      %v4069 = vpack.c.b16 %v4046, %v4045
      %v4070 = vpack.c.b16 %v4048, %v4047
      %v4071 = vpack.c.b16 %v4050, %v4049
      %v4072 = vpack.c.b16 %v4052, %v4051
      %v4073 = vpack.c.b16 %v4054, %v4053
      %v4074 = vpack.c.b16 %v4056, %v4055
      %v4075 = vpack.c.b16 %v4058, %v4057
      %v4076 = vpack.c.b16 %v4060, %v4059
      %v4078 = vsel %vm712, %v4061, 0
      %v4081 = vsel %vm712, %v4062, 0
      %v4084 = vsel %vm712, %v4063, 0
      %v4087 = vsel %vm712, %v4064, 0
      %v4090 = vsel %vm712, %v4065, 0
      %v4093 = vsel %vm712, %v4066, 0
      %v4096 = vsel %vm712, %v4067, 0
      %v4099 = vsel %vm712, %v4068, 0
      %v4102 = vsel %vm712, %v4069, 0
      %v4105 = vsel %vm712, %v4070, 0
      %v4108 = vsel %vm712, %v4071, 0
      %v4111 = vsel %vm712, %v4072, 0
      %v4114 = vsel %vm712, %v4073, 0
      %v4117 = vsel %vm712, %v4074, 0
      %v4120 = vsel %vm712, %v4075, 0
      %v4123 = vsel %vm712, %v4076, 0
      %v4126 = vsel %vm761, %v4028, 0
      %4128 = vmatprep.subr.bf16.mxu0 0
      %4129 = vmatpush1.bf16.msra.mxu0 0
      %4130 = vmatprep.subr.bf16.mxu0 0
      %4131 = vmatpush1.bf16.msra.mxu0 0
      %4132 = vmatprep.subr.bf16.mxu0 0
      %4133 = vmatpush1.bf16.msra.mxu0 0
      %4134 = vmatprep.subr.bf16.mxu0 0
      %4135 = vmatpush1.bf16.msra.mxu0 0
      %4136 = vmatprep.subr.bf16.mxu0 0
      %4137 = vmatpush1.bf16.msra.mxu0 0
      %4138 = vmatprep.subr.bf16.mxu0 0
      %4139 = vmatpush1.bf16.msra.mxu0 0
      %4140 = vmatprep.subr.bf16.mxu0 0
      %4141 = vmatpush1.bf16.msra.mxu0 0
      %4142 = vmatprep.subr.bf16.mxu0 0
      %4143 = vmatpush1.bf16.msra.mxu0 %v4126
      %4144 = vmatprep.subr.bf16.mxu0 0
      %4145 = vmatpush2.bf16.msra.mxu0 0
      %4146 = vmatprep.subr.bf16.mxu0 0
      %4147 = vmatpush2.bf16.msra.mxu0 0
      %4148 = vmatprep.subr.bf16.mxu0 0
      %4149 = vmatpush2.bf16.msra.mxu0 0
      %4150 = vmatprep.subr.bf16.mxu0 0
      %4151 = vmatpush2.bf16.msra.mxu0 0
      %4152 = vmatprep.subr.bf16.mxu0 0
      %4153 = vmatpush2.bf16.msra.mxu0 0
      %4154 = vmatprep.subr.bf16.mxu0 0
      %4155 = vmatpush2.bf16.msra.mxu0 0
      %4156 = vmatprep.subr.bf16.mxu0 0
      %4157 = vmatpush2.bf16.msra.mxu0 0
      %4158 = vmatprep.subr.bf16.mxu0 0
      %4159 = vmatpush2.bf16.msra.mxu0 0
      %4160 = vmatprep.mubr.bf16.mxu0 0
      %4161 = vmatmul.mubr.bf16.gmra.mxu0 %v4078
      %v4162 = vpop.f32.mrf.mxu0
      %v4163 = vadd.f32 0.0, %v4162
      %v4164 = vpop.f32.mrf.mxu0
      %v4165 = vpop.f32.mrf.mxu0
      %v4166 = vadd.f32 0.0, %v4165
      %v4167 = vpop.f32.mrf.mxu0
      %4168 = vmatprep.mubr.bf16.mxu0 0
      %4169 = vmatmul.mubr.bf16.gmra.mxu0 %v4081
      %v4170 = vpop.f32.mrf.mxu0
      %v4171 = vadd.f32 0.0, %v4170
      %v4172 = vpop.f32.mrf.mxu0
      %v4173 = vpop.f32.mrf.mxu0
      %v4174 = vadd.f32 0.0, %v4173
      %v4175 = vpop.f32.mrf.mxu0
      %4176 = vmatprep.mubr.bf16.mxu0 0
      %4177 = vmatmul.mubr.bf16.gmra.mxu0 %v4084
      %v4178 = vpop.f32.mrf.mxu0
      %v4179 = vadd.f32 0.0, %v4178
      %v4180 = vpop.f32.mrf.mxu0
      %v4181 = vpop.f32.mrf.mxu0
      %v4182 = vadd.f32 0.0, %v4181
      %v4183 = vpop.f32.mrf.mxu0
      %4184 = vmatprep.mubr.bf16.mxu0 0
      %4185 = vmatmul.mubr.bf16.gmra.mxu0 %v4087
      %v4186 = vpop.f32.mrf.mxu0
      %v4187 = vadd.f32 0.0, %v4186
      %v4188 = vpop.f32.mrf.mxu0
      %v4189 = vpop.f32.mrf.mxu0
      %v4190 = vadd.f32 0.0, %v4189
      %v4191 = vpop.f32.mrf.mxu0
      %4192 = vmatprep.mubr.bf16.mxu0 0
      %4193 = vmatmul.mubr.bf16.gmra.mxu0 %v4090
      %v4194 = vpop.f32.mrf.mxu0
      %v4195 = vadd.f32 0.0, %v4194
      %v4196 = vpop.f32.mrf.mxu0
      %v4197 = vpop.f32.mrf.mxu0
      %v4198 = vadd.f32 0.0, %v4197
      %v4199 = vpop.f32.mrf.mxu0
      %4200 = vmatprep.mubr.bf16.mxu0 0
      %4201 = vmatmul.mubr.bf16.gmra.mxu0 %v4093
      %v4202 = vpop.f32.mrf.mxu0
      %v4203 = vadd.f32 0.0, %v4202
      %v4204 = vpop.f32.mrf.mxu0
      %v4205 = vpop.f32.mrf.mxu0
      %v4206 = vadd.f32 0.0, %v4205
      %v4207 = vpop.f32.mrf.mxu0
      %4208 = vmatprep.mubr.bf16.mxu0 0
      %4209 = vmatmul.mubr.bf16.gmra.mxu0 %v4096
      %v4210 = vpop.f32.mrf.mxu0
      %v4211 = vadd.f32 0.0, %v4210
      %v4212 = vpop.f32.mrf.mxu0
      %v4213 = vpop.f32.mrf.mxu0
      %v4214 = vadd.f32 0.0, %v4213
      %v4215 = vpop.f32.mrf.mxu0
      %4216 = vmatprep.mubr.bf16.mxu0 0
      %4217 = vmatmul.mubr.bf16.gmra.mxu0 %v4099
      %v4218 = vpop.f32.mrf.mxu0
      %v4219 = vadd.f32 0.0, %v4218
      %v4220 = vpop.f32.mrf.mxu0
      %v4221 = vpop.f32.mrf.mxu0
      %v4222 = vadd.f32 0.0, %v4221
      %v4223 = vpop.f32.mrf.mxu0
      %4224 = vmatprep.mubr.bf16.mxu0 0
      %4225 = vmatmul.mubr.bf16.gmra.mxu0 %v4102
      %v4226 = vpop.f32.mrf.mxu0
      %v4227 = vadd.f32 0.0, %v4226
      %v4228 = vpop.f32.mrf.mxu0
      %v4229 = vpop.f32.mrf.mxu0
      %v4230 = vadd.f32 0.0, %v4229
      %v4231 = vpop.f32.mrf.mxu0
      %4232 = vmatprep.mubr.bf16.mxu0 0
      %4233 = vmatmul.mubr.bf16.gmra.mxu0 %v4105
      %v4234 = vpop.f32.mrf.mxu0
      %v4235 = vadd.f32 0.0, %v4234
      %v4236 = vpop.f32.mrf.mxu0
      %v4237 = vpop.f32.mrf.mxu0
      %v4238 = vadd.f32 0.0, %v4237
      %v4239 = vpop.f32.mrf.mxu0
      %4240 = vmatprep.mubr.bf16.mxu0 0
      %4241 = vmatmul.mubr.bf16.gmra.mxu0 %v4108
      %v4242 = vpop.f32.mrf.mxu0
      %v4243 = vadd.f32 0.0, %v4242
      %v4244 = vpop.f32.mrf.mxu0
      %v4245 = vpop.f32.mrf.mxu0
      %v4246 = vadd.f32 0.0, %v4245
      %v4247 = vpop.f32.mrf.mxu0
      %4248 = vmatprep.mubr.bf16.mxu0 0
      %4249 = vmatmul.mubr.bf16.gmra.mxu0 %v4111
      %v4250 = vpop.f32.mrf.mxu0
      %v4251 = vadd.f32 0.0, %v4250
      %v4252 = vpop.f32.mrf.mxu0
      %v4253 = vpop.f32.mrf.mxu0
      %v4254 = vadd.f32 0.0, %v4253
      %v4255 = vpop.f32.mrf.mxu0
      %4256 = vmatprep.mubr.bf16.mxu0 0
      %4257 = vmatmul.mubr.bf16.gmra.mxu0 %v4114
      %v4258 = vpop.f32.mrf.mxu0
      %v4259 = vadd.f32 0.0, %v4258
      %v4260 = vpop.f32.mrf.mxu0
      %v4261 = vpop.f32.mrf.mxu0
      %v4262 = vadd.f32 0.0, %v4261
      %v4263 = vpop.f32.mrf.mxu0
      %4264 = vmatprep.mubr.bf16.mxu0 0
      %4265 = vmatmul.mubr.bf16.gmra.mxu0 %v4117
      %v4266 = vpop.f32.mrf.mxu0
      %v4267 = vadd.f32 0.0, %v4266
      %v4268 = vpop.f32.mrf.mxu0
      %v4269 = vpop.f32.mrf.mxu0
      %v4270 = vadd.f32 0.0, %v4269
      %v4271 = vpop.f32.mrf.mxu0
      %4272 = vmatprep.mubr.bf16.mxu0 0
      %4273 = vmatmul.mubr.bf16.gmra.mxu0 %v4120
      %v4274 = vpop.f32.mrf.mxu0
      %v4275 = vadd.f32 0.0, %v4274
      %v4276 = vpop.f32.mrf.mxu0
      %v4277 = vpop.f32.mrf.mxu0
      %v4278 = vadd.f32 0.0, %v4277
      %v4279 = vpop.f32.mrf.mxu0
      %4280 = vmatprep.mubr.bf16.mxu0 0
      %4281 = vmatmul.mubr.bf16.gmra.mxu0 %v4123
      %v4282 = vpop.f32.mrf.mxu0
      %v4283 = vadd.f32 0.0, %v4282
      %v4284 = vpop.f32.mrf.mxu0
      %v4285 = vpop.f32.mrf.mxu0
      %v4286 = vadd.f32 0.0, %v4285
      %v4287 = vpop.f32.mrf.mxu0
      %4288 = vdwg.mxu0
      %v4289 = vadd.f32 %v3563, %v4163
      %v4290 = vadd.f32 %v3564, %v4166
      %v4291 = vadd.f32 %v3565, %v4171
      %v4292 = vadd.f32 %v3566, %v4174
      %v4293 = vadd.f32 %v3567, %v4179
      %v4294 = vadd.f32 %v3568, %v4182
      %v4295 = vadd.f32 %v3569, %v4187
      %v4296 = vadd.f32 %v3570, %v4190
      %v4297 = vadd.f32 %v3571, %v4195
      %v4298 = vadd.f32 %v3572, %v4198
      %v4299 = vadd.f32 %v3573, %v4203
      %v4300 = vadd.f32 %v3574, %v4206
      %v4301 = vadd.f32 %v3575, %v4211
      %v4302 = vadd.f32 %v3576, %v4214
      %v4303 = vadd.f32 %v3577, %v4219
      %v4304 = vadd.f32 %v3578, %v4222
      %v4305 = vadd.f32 %v3579, %v4227
      %v4306 = vadd.f32 %v3580, %v4230
      %v4307 = vadd.f32 %v3581, %v4235
      %v4308 = vadd.f32 %v3582, %v4238
      %v4309 = vadd.f32 %v3583, %v4243
      %v4310 = vadd.f32 %v3584, %v4246
      %v4311 = vadd.f32 %v3585, %v4251
      %v4312 = vadd.f32 %v3586, %v4254
      %v4313 = vadd.f32 %v3587, %v4259
      %v4314 = vadd.f32 %v3588, %v4262
      %v4315 = vadd.f32 %v3589, %v4267
      %v4316 = vadd.f32 %v3590, %v4270
      %v4317 = vadd.f32 %v3591, %v4275
      %v4318 = vadd.f32 %v3592, %v4278
      %v4319 = vadd.f32 %v3593, %v4283
      %v4320 = vadd.f32 %v3594, %v4286
      %v4321 = vld [vmem:[%s3236] sm:$0xe]
      %v4322 = vld [vmem:[%s3236 + $0xc] sm:$0xe]
      %v4323 = vld [vmem:[%s3236 + $0x18] sm:$0xe]
      %v4324 = vld [vmem:[%s3236 + $0x24] sm:$0xe]
      %v4325 = vld [vmem:[%s3236 + $0x30] sm:$0xe]
      %v4326 = vld [vmem:[%s3236 + $0x3c] sm:$0xe]
      %v4327 = vld [vmem:[%s3236 + $0x48] sm:$0xe]
      %v4328 = vld [vmem:[%s3236 + $0x54] sm:$0xe]
      %v4329 = vld [vmem:[%s3236 + $0x60] sm:$0xe]
      %v4330 = vld [vmem:[%s3236 + $0x6c] sm:$0xe]
      %v4331 = vld [vmem:[%s3236 + $0x78] sm:$0xe]
      %v4332 = vld [vmem:[%s3236 + $0x84] sm:$0xe]
      %v4333 = vld [vmem:[%s3236 + $0x90] sm:$0xe]
      %v4334 = vld [vmem:[%s3236 + $0x9c] sm:$0xe]
      %v4335 = vld [vmem:[%s3236 + $0xa8] sm:$0xe]
      %v4336 = vld [vmem:[%s3236 + $0xb4] sm:$0xe]
      %v4385 = vrot.slane %v4321, 5
      %v4386 = vrot.slane %v4385, 4
      %v4387 = vrot.slane %v3596, 5
      %v4388 = vsel %vm1268, %v4386, %v4387
      %v4389 = vrot.slane %v4387, 4
      %v4390 = vrot.slane %v3597, 5
      %v4391 = vsel %vm1268, %v4389, %v4390
      %v4392 = vrot.slane %v4322, 5
      %v4393 = vrot.slane %v4392, 4
      %v4394 = vrot.slane %v3599, 5
      %v4395 = vsel %vm1268, %v4393, %v4394
      %v4396 = vrot.slane %v4394, 4
      %v4397 = vrot.slane %v3600, 5
      %v4398 = vsel %vm1268, %v4396, %v4397
      %v4399 = vrot.slane %v4323, 5
      %v4400 = vrot.slane %v4399, 4
      %v4401 = vrot.slane %v3602, 5
      %v4402 = vsel %vm1268, %v4400, %v4401
      %v4403 = vrot.slane %v4401, 4
      %v4404 = vrot.slane %v3603, 5
      %v4405 = vsel %vm1268, %v4403, %v4404
      %v4406 = vrot.slane %v4324, 5
      %v4407 = vrot.slane %v4406, 4
      %v4408 = vrot.slane %v3605, 5
      %v4409 = vsel %vm1268, %v4407, %v4408
      %v4410 = vrot.slane %v4408, 4
      %v4411 = vrot.slane %v3606, 5
      %v4412 = vsel %vm1268, %v4410, %v4411
      %v4413 = vrot.slane %v4325, 5
      %v4414 = vrot.slane %v4413, 4
      %v4415 = vrot.slane %v3608, 5
      %v4416 = vsel %vm1268, %v4414, %v4415
      %v4417 = vrot.slane %v4415, 4
      %v4418 = vrot.slane %v3609, 5
      %v4419 = vsel %vm1268, %v4417, %v4418
      %v4420 = vrot.slane %v4326, 5
      %v4421 = vrot.slane %v4420, 4
      %v4422 = vrot.slane %v3611, 5
      %v4423 = vsel %vm1268, %v4421, %v4422
      %v4424 = vrot.slane %v4422, 4
      %v4425 = vrot.slane %v3612, 5
      %v4426 = vsel %vm1268, %v4424, %v4425
      %v4427 = vrot.slane %v4327, 5
      %v4428 = vrot.slane %v4427, 4
      %v4429 = vrot.slane %v3614, 5
      %v4430 = vsel %vm1268, %v4428, %v4429
      %v4431 = vrot.slane %v4429, 4
      %v4432 = vrot.slane %v3615, 5
      %v4433 = vsel %vm1268, %v4431, %v4432
      %v4434 = vrot.slane %v4328, 5
      %v4435 = vrot.slane %v4434, 4
      %v4436 = vrot.slane %v3617, 5
      %v4437 = vsel %vm1268, %v4435, %v4436
      %v4438 = vrot.slane %v4436, 4
      %v4439 = vrot.slane %v3618, 5
      %v4440 = vsel %vm1268, %v4438, %v4439
      %v4441 = vrot.slane %v4329, 5
      %v4442 = vrot.slane %v4441, 4
      %v4443 = vrot.slane %v3620, 5
      %v4444 = vsel %vm1268, %v4442, %v4443
      %v4445 = vrot.slane %v4443, 4
      %v4446 = vrot.slane %v3621, 5
      %v4447 = vsel %vm1268, %v4445, %v4446
      %v4448 = vrot.slane %v4330, 5
      %v4449 = vrot.slane %v4448, 4
      %v4450 = vrot.slane %v3623, 5
      %v4451 = vsel %vm1268, %v4449, %v4450
      %v4452 = vrot.slane %v4450, 4
      %v4453 = vrot.slane %v3624, 5
      %v4454 = vsel %vm1268, %v4452, %v4453
      %v4455 = vrot.slane %v4331, 5
      %v4456 = vrot.slane %v4455, 4
      %v4457 = vrot.slane %v3626, 5
      %v4458 = vsel %vm1268, %v4456, %v4457
      %v4459 = vrot.slane %v4457, 4
      %v4460 = vrot.slane %v3627, 5
      %v4461 = vsel %vm1268, %v4459, %v4460
      %v4462 = vrot.slane %v4332, 5
      %v4463 = vrot.slane %v4462, 4
      %v4464 = vrot.slane %v3629, 5
      %v4465 = vsel %vm1268, %v4463, %v4464
      %v4466 = vrot.slane %v4464, 4
      %v4467 = vrot.slane %v3630, 5
      %v4468 = vsel %vm1268, %v4466, %v4467
      %v4469 = vrot.slane %v4333, 5
      %v4470 = vrot.slane %v4469, 4
      %v4471 = vrot.slane %v3632, 5
      %v4472 = vsel %vm1268, %v4470, %v4471
      %v4473 = vrot.slane %v4471, 4
      %v4474 = vrot.slane %v3633, 5
      %v4475 = vsel %vm1268, %v4473, %v4474
      %v4476 = vrot.slane %v4334, 5
      %v4477 = vrot.slane %v4476, 4
      %v4478 = vrot.slane %v3635, 5
      %v4479 = vsel %vm1268, %v4477, %v4478
      %v4480 = vrot.slane %v4478, 4
      %v4481 = vrot.slane %v3636, 5
      %v4482 = vsel %vm1268, %v4480, %v4481
      %v4483 = vrot.slane %v4335, 5
      %v4484 = vrot.slane %v4483, 4
      %v4485 = vrot.slane %v3638, 5
      %v4486 = vsel %vm1268, %v4484, %v4485
      %v4487 = vrot.slane %v4485, 4
      %v4488 = vrot.slane %v3639, 5
      %v4489 = vsel %vm1268, %v4487, %v4488
      %v4490 = vrot.slane %v4336, 5
      %v4491 = vrot.slane %v4490, 4
      %v4492 = vrot.slane %v3641, 5
      %v4493 = vsel %vm1268, %v4491, %v4492
      %v4494 = vrot.slane %v4492, 4
      %v4495 = vrot.slane %v3642, 5
      %v4496 = vsel %vm1268, %v4494, %v4495
      %s4497 = scalar_lea.vmem %s1, 16
      %v4498 = vld [vmem:[%s4497] sm:$0x3]
      %v4499 = vunpack.c.l.b16 %v4388
      %v4500 = vunpack.c.l.b16 %v4391
      %v4501 = vunpack.c.l.b16 %v4395
      %v4502 = vunpack.c.l.b16 %v4398
      %v4503 = vunpack.c.l.b16 %v4402
      %v4504 = vunpack.c.l.b16 %v4405
      %v4505 = vunpack.c.l.b16 %v4409
      %v4506 = vunpack.c.l.b16 %v4412
      %v4507 = vunpack.c.l.b16 %v4416
      %v4508 = vunpack.c.l.b16 %v4419
      %v4509 = vunpack.c.l.b16 %v4423
      %v4510 = vunpack.c.l.b16 %v4426
      %v4511 = vunpack.c.l.b16 %v4430
      %v4512 = vunpack.c.l.b16 %v4433
      %v4513 = vunpack.c.l.b16 %v4437
      %v4514 = vunpack.c.l.b16 %v4440
      %v4515 = vunpack.c.l.b16 %v4444
      %v4516 = vunpack.c.l.b16 %v4447
      %v4517 = vunpack.c.l.b16 %v4451
      %v4518 = vunpack.c.l.b16 %v4454
      %v4519 = vunpack.c.l.b16 %v4458
      %v4520 = vunpack.c.l.b16 %v4461
      %v4521 = vunpack.c.l.b16 %v4465
      %v4522 = vunpack.c.l.b16 %v4468
      %v4523 = vunpack.c.l.b16 %v4472
      %v4524 = vunpack.c.l.b16 %v4475
      %v4525 = vunpack.c.l.b16 %v4479
      %v4526 = vunpack.c.l.b16 %v4482
      %v4527 = vunpack.c.l.b16 %v4486
      %v4528 = vunpack.c.l.b16 %v4489
      %v4529 = vunpack.c.l.b16 %v4493
      %v4530 = vunpack.c.l.b16 %v4496
      %v4531 = vpack.c.b16 %v4500, %v4499
      %v4532 = vpack.c.b16 %v4502, %v4501
      %v4533 = vpack.c.b16 %v4504, %v4503
      %v4534 = vpack.c.b16 %v4506, %v4505
      %v4535 = vpack.c.b16 %v4508, %v4507
      %v4536 = vpack.c.b16 %v4510, %v4509
      %v4537 = vpack.c.b16 %v4512, %v4511
      %v4538 = vpack.c.b16 %v4514, %v4513
      %v4539 = vpack.c.b16 %v4516, %v4515
      %v4540 = vpack.c.b16 %v4518, %v4517
      %v4541 = vpack.c.b16 %v4520, %v4519
      %v4542 = vpack.c.b16 %v4522, %v4521
      %v4543 = vpack.c.b16 %v4524, %v4523
      %v4544 = vpack.c.b16 %v4526, %v4525
      %v4545 = vpack.c.b16 %v4528, %v4527
      %v4546 = vpack.c.b16 %v4530, %v4529
      %v4548 = vsel %vm712, %v4531, 0
      %v4551 = vsel %vm712, %v4532, 0
      %v4554 = vsel %vm712, %v4533, 0
      %v4557 = vsel %vm712, %v4534, 0
      %v4560 = vsel %vm712, %v4535, 0
      %v4563 = vsel %vm712, %v4536, 0
      %v4566 = vsel %vm712, %v4537, 0
      %v4569 = vsel %vm712, %v4538, 0
      %v4572 = vsel %vm712, %v4539, 0
      %v4575 = vsel %vm712, %v4540, 0
      %v4578 = vsel %vm712, %v4541, 0
      %v4581 = vsel %vm712, %v4542, 0
      %v4584 = vsel %vm712, %v4543, 0
      %v4587 = vsel %vm712, %v4544, 0
      %v4590 = vsel %vm712, %v4545, 0
      %v4593 = vsel %vm712, %v4546, 0
      %v4596 = vsel %vm761, %v4498, 0
      %4598 = vmatprep.subr.bf16.mxu0 0
      %4599 = vmatpush1.bf16.msra.mxu0 0
      %4600 = vmatprep.subr.bf16.mxu0 0
      %4601 = vmatpush1.bf16.msra.mxu0 0
      %4602 = vmatprep.subr.bf16.mxu0 0
      %4603 = vmatpush1.bf16.msra.mxu0 0
      %4604 = vmatprep.subr.bf16.mxu0 0
      %4605 = vmatpush1.bf16.msra.mxu0 0
      %4606 = vmatprep.subr.bf16.mxu0 0
      %4607 = vmatpush1.bf16.msra.mxu0 0
      %4608 = vmatprep.subr.bf16.mxu0 0
      %4609 = vmatpush1.bf16.msra.mxu0 0
      %4610 = vmatprep.subr.bf16.mxu0 0
      %4611 = vmatpush1.bf16.msra.mxu0 0
      %4612 = vmatprep.subr.bf16.mxu0 0
      %4613 = vmatpush1.bf16.msra.mxu0 %v4596
      %4614 = vmatprep.subr.bf16.mxu0 0
      %4615 = vmatpush2.bf16.msra.mxu0 0
      %4616 = vmatprep.subr.bf16.mxu0 0
      %4617 = vmatpush2.bf16.msra.mxu0 0
      %4618 = vmatprep.subr.bf16.mxu0 0
      %4619 = vmatpush2.bf16.msra.mxu0 0
      %4620 = vmatprep.subr.bf16.mxu0 0
      %4621 = vmatpush2.bf16.msra.mxu0 0
      %4622 = vmatprep.subr.bf16.mxu0 0
      %4623 = vmatpush2.bf16.msra.mxu0 0
      %4624 = vmatprep.subr.bf16.mxu0 0
      %4625 = vmatpush2.bf16.msra.mxu0 0
      %4626 = vmatprep.subr.bf16.mxu0 0
      %4627 = vmatpush2.bf16.msra.mxu0 0
      %4628 = vmatprep.subr.bf16.mxu0 0
      %4629 = vmatpush2.bf16.msra.mxu0 0
      %4630 = vmatprep.mubr.bf16.mxu0 0
      %4631 = vmatmul.mubr.bf16.gmra.mxu0 %v4548
      %v4632 = vpop.f32.mrf.mxu0
      %v4633 = vadd.f32 0.0, %v4632
      %v4634 = vpop.f32.mrf.mxu0
      %v4635 = vpop.f32.mrf.mxu0
      %v4636 = vadd.f32 0.0, %v4635
      %v4637 = vpop.f32.mrf.mxu0
      %4638 = vmatprep.mubr.bf16.mxu0 0
      %4639 = vmatmul.mubr.bf16.gmra.mxu0 %v4551
      %v4640 = vpop.f32.mrf.mxu0
      %v4641 = vadd.f32 0.0, %v4640
      %v4642 = vpop.f32.mrf.mxu0
      %v4643 = vpop.f32.mrf.mxu0
      %v4644 = vadd.f32 0.0, %v4643
      %v4645 = vpop.f32.mrf.mxu0
      %4646 = vmatprep.mubr.bf16.mxu0 0
      %4647 = vmatmul.mubr.bf16.gmra.mxu0 %v4554
      %v4648 = vpop.f32.mrf.mxu0
      %v4649 = vadd.f32 0.0, %v4648
      %v4650 = vpop.f32.mrf.mxu0
      %v4651 = vpop.f32.mrf.mxu0
      %v4652 = vadd.f32 0.0, %v4651
      %v4653 = vpop.f32.mrf.mxu0
      %4654 = vmatprep.mubr.bf16.mxu0 0
      %4655 = vmatmul.mubr.bf16.gmra.mxu0 %v4557
      %v4656 = vpop.f32.mrf.mxu0
      %v4657 = vadd.f32 0.0, %v4656
      %v4658 = vpop.f32.mrf.mxu0
      %v4659 = vpop.f32.mrf.mxu0
      %v4660 = vadd.f32 0.0, %v4659
      %v4661 = vpop.f32.mrf.mxu0
      %4662 = vmatprep.mubr.bf16.mxu0 0
      %4663 = vmatmul.mubr.bf16.gmra.mxu0 %v4560
      %v4664 = vpop.f32.mrf.mxu0
      %v4665 = vadd.f32 0.0, %v4664
      %v4666 = vpop.f32.mrf.mxu0
      %v4667 = vpop.f32.mrf.mxu0
      %v4668 = vadd.f32 0.0, %v4667
      %v4669 = vpop.f32.mrf.mxu0
      %4670 = vmatprep.mubr.bf16.mxu0 0
      %4671 = vmatmul.mubr.bf16.gmra.mxu0 %v4563
      %v4672 = vpop.f32.mrf.mxu0
      %v4673 = vadd.f32 0.0, %v4672
      %v4674 = vpop.f32.mrf.mxu0
      %v4675 = vpop.f32.mrf.mxu0
      %v4676 = vadd.f32 0.0, %v4675
      %v4677 = vpop.f32.mrf.mxu0
      %4678 = vmatprep.mubr.bf16.mxu0 0
      %4679 = vmatmul.mubr.bf16.gmra.mxu0 %v4566
      %v4680 = vpop.f32.mrf.mxu0
      %v4681 = vadd.f32 0.0, %v4680
      %v4682 = vpop.f32.mrf.mxu0
      %v4683 = vpop.f32.mrf.mxu0
      %v4684 = vadd.f32 0.0, %v4683
      %v4685 = vpop.f32.mrf.mxu0
      %4686 = vmatprep.mubr.bf16.mxu0 0
      %4687 = vmatmul.mubr.bf16.gmra.mxu0 %v4569
      %v4688 = vpop.f32.mrf.mxu0
      %v4689 = vadd.f32 0.0, %v4688
      %v4690 = vpop.f32.mrf.mxu0
      %v4691 = vpop.f32.mrf.mxu0
      %v4692 = vadd.f32 0.0, %v4691
      %v4693 = vpop.f32.mrf.mxu0
      %4694 = vmatprep.mubr.bf16.mxu0 0
      %4695 = vmatmul.mubr.bf16.gmra.mxu0 %v4572
      %v4696 = vpop.f32.mrf.mxu0
      %v4697 = vadd.f32 0.0, %v4696
      %v4698 = vpop.f32.mrf.mxu0
      %v4699 = vpop.f32.mrf.mxu0
      %v4700 = vadd.f32 0.0, %v4699
      %v4701 = vpop.f32.mrf.mxu0
      %4702 = vmatprep.mubr.bf16.mxu0 0
      %4703 = vmatmul.mubr.bf16.gmra.mxu0 %v4575
      %v4704 = vpop.f32.mrf.mxu0
      %v4705 = vadd.f32 0.0, %v4704
      %v4706 = vpop.f32.mrf.mxu0
      %v4707 = vpop.f32.mrf.mxu0
      %v4708 = vadd.f32 0.0, %v4707
      %v4709 = vpop.f32.mrf.mxu0
      %4710 = vmatprep.mubr.bf16.mxu0 0
      %4711 = vmatmul.mubr.bf16.gmra.mxu0 %v4578
      %v4712 = vpop.f32.mrf.mxu0
      %v4713 = vadd.f32 0.0, %v4712
      %v4714 = vpop.f32.mrf.mxu0
      %v4715 = vpop.f32.mrf.mxu0
      %v4716 = vadd.f32 0.0, %v4715
      %v4717 = vpop.f32.mrf.mxu0
      %4718 = vmatprep.mubr.bf16.mxu0 0
      %4719 = vmatmul.mubr.bf16.gmra.mxu0 %v4581
      %v4720 = vpop.f32.mrf.mxu0
      %v4721 = vadd.f32 0.0, %v4720
      %v4722 = vpop.f32.mrf.mxu0
      %v4723 = vpop.f32.mrf.mxu0
      %v4724 = vadd.f32 0.0, %v4723
      %v4725 = vpop.f32.mrf.mxu0
      %4726 = vmatprep.mubr.bf16.mxu0 0
      %4727 = vmatmul.mubr.bf16.gmra.mxu0 %v4584
      %v4728 = vpop.f32.mrf.mxu0
      %v4729 = vadd.f32 0.0, %v4728
      %v4730 = vpop.f32.mrf.mxu0
      %v4731 = vpop.f32.mrf.mxu0
      %v4732 = vadd.f32 0.0, %v4731
      %v4733 = vpop.f32.mrf.mxu0
      %4734 = vmatprep.mubr.bf16.mxu0 0
      %4735 = vmatmul.mubr.bf16.gmra.mxu0 %v4587
      %v4736 = vpop.f32.mrf.mxu0
      %v4737 = vadd.f32 0.0, %v4736
      %v4738 = vpop.f32.mrf.mxu0
      %v4739 = vpop.f32.mrf.mxu0
      %v4740 = vadd.f32 0.0, %v4739
      %v4741 = vpop.f32.mrf.mxu0
      %4742 = vmatprep.mubr.bf16.mxu0 0
      %4743 = vmatmul.mubr.bf16.gmra.mxu0 %v4590
      %v4744 = vpop.f32.mrf.mxu0
      %v4745 = vadd.f32 0.0, %v4744
      %v4746 = vpop.f32.mrf.mxu0
      %v4747 = vpop.f32.mrf.mxu0
      %v4748 = vadd.f32 0.0, %v4747
      %v4749 = vpop.f32.mrf.mxu0
      %4750 = vmatprep.mubr.bf16.mxu0 0
      %4751 = vmatmul.mubr.bf16.gmra.mxu0 %v4593
      %v4752 = vpop.f32.mrf.mxu0
      %v4753 = vadd.f32 0.0, %v4752
      %v4754 = vpop.f32.mrf.mxu0
      %v4755 = vpop.f32.mrf.mxu0
      %v4756 = vadd.f32 0.0, %v4755
      %v4757 = vpop.f32.mrf.mxu0
      %4758 = vdwg.mxu0
      %v4759 = vadd.f32 %v4289, %v4633
      %v4760 = vadd.f32 %v4290, %v4636
      %v4761 = vadd.f32 %v4291, %v4641
      %v4762 = vadd.f32 %v4292, %v4644
      %v4763 = vadd.f32 %v4293, %v4649
      %v4764 = vadd.f32 %v4294, %v4652
      %v4765 = vadd.f32 %v4295, %v4657
      %v4766 = vadd.f32 %v4296, %v4660
      %v4767 = vadd.f32 %v4297, %v4665
      %v4768 = vadd.f32 %v4298, %v4668
      %v4769 = vadd.f32 %v4299, %v4673
      %v4770 = vadd.f32 %v4300, %v4676
      %v4771 = vadd.f32 %v4301, %v4681
      %v4772 = vadd.f32 %v4302, %v4684
      %v4773 = vadd.f32 %v4303, %v4689
      %v4774 = vadd.f32 %v4304, %v4692
      %v4775 = vadd.f32 %v4305, %v4697
      %v4776 = vadd.f32 %v4306, %v4700
      %v4777 = vadd.f32 %v4307, %v4705
      %v4778 = vadd.f32 %v4308, %v4708
      %v4779 = vadd.f32 %v4309, %v4713
      %v4780 = vadd.f32 %v4310, %v4716
      %v4781 = vadd.f32 %v4311, %v4721
      %v4782 = vadd.f32 %v4312, %v4724
      %v4783 = vadd.f32 %v4313, %v4729
      %v4784 = vadd.f32 %v4314, %v4732
      %v4785 = vadd.f32 %v4315, %v4737
      %v4786 = vadd.f32 %v4316, %v4740
      %v4787 = vadd.f32 %v4317, %v4745
      %v4788 = vadd.f32 %v4318, %v4748
      %v4789 = vadd.f32 %v4319, %v4753
      %v4790 = vadd.f32 %v4320, %v4756
      %v4791 = vld [vmem:[%s2] sm:$0x1]
      %v4793 = vlaneseq
      %v4794 = vshrl.u32 %v4793, 7
      %v4795 = vsub.s32 0, %v4794
      %v4796 = vrot.slane %v4791, %v4795
      %v4798 = vmul.f32 %v4759, %v4796
      %v4799 = vmul.f32 %v4760, %v4796
      %v4800 = vmul.f32 %v4761, %v4796
      %v4801 = vmul.f32 %v4762, %v4796
      %v4802 = vmul.f32 %v4763, %v4796
      %v4803 = vmul.f32 %v4764, %v4796
      %v4804 = vmul.f32 %v4765, %v4796
      %v4805 = vmul.f32 %v4766, %v4796
      %v4806 = vmul.f32 %v4767, %v4796
      %v4807 = vmul.f32 %v4768, %v4796
      %v4808 = vmul.f32 %v4769, %v4796
      %v4809 = vmul.f32 %v4770, %v4796
      %v4810 = vmul.f32 %v4771, %v4796
      %v4811 = vmul.f32 %v4772, %v4796
      %v4812 = vmul.f32 %v4773, %v4796
      %v4813 = vmul.f32 %v4774, %v4796
      %v4814 = vmul.f32 %v4775, %v4796
      %v4815 = vmul.f32 %v4776, %v4796
      %v4816 = vmul.f32 %v4777, %v4796
      %v4817 = vmul.f32 %v4778, %v4796
      %v4818 = vmul.f32 %v4779, %v4796
      %v4819 = vmul.f32 %v4780, %v4796
      %v4820 = vmul.f32 %v4781, %v4796
      %v4821 = vmul.f32 %v4782, %v4796
      %v4822 = vmul.f32 %v4783, %v4796
      %v4823 = vmul.f32 %v4784, %v4796
      %v4824 = vmul.f32 %v4785, %v4796
      %v4825 = vmul.f32 %v4786, %v4796
      %v4826 = vmul.f32 %v4787, %v4796
      %v4827 = vmul.f32 %v4788, %v4796
      %v4828 = vmul.f32 %v4789, %v4796
      %v4829 = vmul.f32 %v4790, %v4796
      %v4830 = vld [vmem:[%s3] sm:$0x1]
      %v4832 = vlaneseq
      %v4833 = vshrl.u32 %v4832, 7
      %v4834 = vsub.s32 0, %v4833
      %v4835 = vrot.slane %v4830, %v4834
      %v4837 = vadd.f32 %v4798, %v4835
      %v4838 = vadd.f32 %v4799, %v4835
      %v4839 = vadd.f32 %v4800, %v4835
      %v4840 = vadd.f32 %v4801, %v4835
      %v4841 = vadd.f32 %v4802, %v4835
      %v4842 = vadd.f32 %v4803, %v4835
      %v4843 = vadd.f32 %v4804, %v4835
      %v4844 = vadd.f32 %v4805, %v4835
      %v4845 = vadd.f32 %v4806, %v4835
      %v4846 = vadd.f32 %v4807, %v4835
      %v4847 = vadd.f32 %v4808, %v4835
      %v4848 = vadd.f32 %v4809, %v4835
      %v4849 = vadd.f32 %v4810, %v4835
      %v4850 = vadd.f32 %v4811, %v4835
      %v4851 = vadd.f32 %v4812, %v4835
      %v4852 = vadd.f32 %v4813, %v4835
      %v4853 = vadd.f32 %v4814, %v4835
      %v4854 = vadd.f32 %v4815, %v4835
      %v4855 = vadd.f32 %v4816, %v4835
      %v4856 = vadd.f32 %v4817, %v4835
      %v4857 = vadd.f32 %v4818, %v4835
      %v4858 = vadd.f32 %v4819, %v4835
      %v4859 = vadd.f32 %v4820, %v4835
      %v4860 = vadd.f32 %v4821, %v4835
      %v4861 = vadd.f32 %v4822, %v4835
      %v4862 = vadd.f32 %v4823, %v4835
      %v4863 = vadd.f32 %v4824, %v4835
      %v4864 = vadd.f32 %v4825, %v4835
      %v4865 = vadd.f32 %v4826, %v4835
      %v4866 = vadd.f32 %v4827, %v4835
      %v4867 = vadd.f32 %v4828, %v4835
      %v4868 = vadd.f32 %v4829, %v4835
      %v4869 = vmax.f32 %v4837, 0.0
      %v4870 = vmax.f32 %v4838, 0.0
      %v4871 = vmax.f32 %v4839, 0.0
      %v4872 = vmax.f32 %v4840, 0.0
      %v4873 = vmax.f32 %v4841, 0.0
      %v4874 = vmax.f32 %v4842, 0.0
      %v4875 = vmax.f32 %v4843, 0.0
      %v4876 = vmax.f32 %v4844, 0.0
      %v4877 = vmax.f32 %v4845, 0.0
      %v4878 = vmax.f32 %v4846, 0.0
      %v4879 = vmax.f32 %v4847, 0.0
      %v4880 = vmax.f32 %v4848, 0.0
      %v4881 = vmax.f32 %v4849, 0.0
      %v4882 = vmax.f32 %v4850, 0.0
      %v4883 = vmax.f32 %v4851, 0.0
      %v4884 = vmax.f32 %v4852, 0.0
      %v4885 = vmax.f32 %v4853, 0.0
      %v4886 = vmax.f32 %v4854, 0.0
      %v4887 = vmax.f32 %v4855, 0.0
      %v4888 = vmax.f32 %v4856, 0.0
      %v4889 = vmax.f32 %v4857, 0.0
      %v4890 = vmax.f32 %v4858, 0.0
      %v4891 = vmax.f32 %v4859, 0.0
      %v4892 = vmax.f32 %v4860, 0.0
      %v4893 = vmax.f32 %v4861, 0.0
      %v4894 = vmax.f32 %v4862, 0.0
      %v4895 = vmax.f32 %v4863, 0.0
      %v4896 = vmax.f32 %v4864, 0.0
      %v4897 = vmax.f32 %v4865, 0.0
      %v4898 = vmax.f32 %v4866, 0.0
      %v4899 = vmax.f32 %v4867, 0.0
      %v4900 = vmax.f32 %v4868, 0.0
      %4901 = vst [vmem:[%s219] sm:$0xff] %v4869
      %4902 = vst [vmem:[%s219 + $0x8] sm:$0xff] %v4870
      %4903 = vst [vmem:[%s219 + $0x10] sm:$0xff] %v4871
      %4904 = vst [vmem:[%s219 + $0x18] sm:$0xff] %v4872
      %4905 = vst [vmem:[%s219 + $0x20] sm:$0xff] %v4873
      %4906 = vst [vmem:[%s219 + $0x28] sm:$0xff] %v4874
      %4907 = vst [vmem:[%s219 + $0x30] sm:$0xff] %v4875
      %4908 = vst [vmem:[%s219 + $0x38] sm:$0xff] %v4876
      %4909 = vst [vmem:[%s219 + $0x40] sm:$0xff] %v4877
      %4910 = vst [vmem:[%s219 + $0x48] sm:$0xff] %v4878
      %4911 = vst [vmem:[%s219 + $0x50] sm:$0xff] %v4879
      %4912 = vst [vmem:[%s219 + $0x58] sm:$0xff] %v4880
      %4913 = vst [vmem:[%s219 + $0x60] sm:$0xff] %v4881
      %4914 = vst [vmem:[%s219 + $0x68] sm:$0xff] %v4882
      %4915 = vst [vmem:[%s219 + $0x70] sm:$0xff] %v4883
      %4916 = vst [vmem:[%s219 + $0x78] sm:$0xff] %v4884
      %4917 = vst [vmem:[%s219 + $0x80] sm:$0xff] %v4885
      %4918 = vst [vmem:[%s219 + $0x88] sm:$0xff] %v4886
      %4919 = vst [vmem:[%s219 + $0x90] sm:$0xff] %v4887
      %4920 = vst [vmem:[%s219 + $0x98] sm:$0xff] %v4888
      %4921 = vst [vmem:[%s219 + $0xa0] sm:$0xff] %v4889
      %4922 = vst [vmem:[%s219 + $0xa8] sm:$0xff] %v4890
      %4923 = vst [vmem:[%s219 + $0xb0] sm:$0xff] %v4891
      %4924 = vst [vmem:[%s219 + $0xb8] sm:$0xff] %v4892
      %4925 = vst [vmem:[%s219 + $0xc0] sm:$0xff] %v4893
      %4926 = vst [vmem:[%s219 + $0xc8] sm:$0xff] %v4894
      %4927 = vst [vmem:[%s219 + $0xd0] sm:$0xff] %v4895
      %4928 = vst [vmem:[%s219 + $0xd8] sm:$0xff] %v4896
      %4929 = vst [vmem:[%s219 + $0xe0] sm:$0xff] %v4897
      %4930 = vst [vmem:[%s219 + $0xe8] sm:$0xff] %v4898
      %4931 = vst [vmem:[%s219 + $0xf0] sm:$0xff] %v4899
      %4932 = vst [vmem:[%s219 + $0xf8] sm:$0xff] %v4900
      %s4933 = smul.u32 32, %s20
      %p4934 = scmp.lt.s32.totalorder %s19, 1
      %s4935 = scalar_select %p4934, %s19, 1
      %p4936 = scmp.lt.s32.totalorder %s4933, 31
      %s4937 = scalar_select %p4936, %s4933, 31
      %s4938 = smul.addr %s4935, 32
      %s4939 = sadd.s32 %s4937, %s4938
      %s4940 = smul.addr %s4939, 8
      %s4941 = scalar_lea.vmem %s4, %s4940
      // Predicated region
      $region37: #{basic_conv2d.1} parent=35 // pred_check
        %p4942 = pneg %p136
      $region38: #{basic_conv2d.1} parent=35 // pred_check_branch
        %4944 = sbr.rel (%p4942) target = $region40
      $region39: #{basic_conv2d.1} parent=35 // pred_region
        %s4945 = smul.u32 32, %s20
      $region40: #{basic_conv2d.1} parent=35 // pred_fallthru
        _
    $region36: #{basic_conv2d.1} parent=5 // pred_fallthru
      _
    %p4946 = scmp.le.s32.totalorder 2, %s10
    // Predicated region
    $region41: #{basic_conv2d.1} parent=5 // pred_check
      %p4947 = pneg %p4946
    $region42: #{basic_conv2d.1} parent=5 // pred_check_branch
      %4949 = sbr.rel (%p4947) target = $region44
    $region43: #{basic_conv2d.1} parent=5 // pred_region
      %s4950 = ssub.s32 %s10, 2
      // Predicated region
      $region45: #{basic_conv2d.1} parent=43 // pred_check
        %p4951 = pneg %p142
      $region46: #{basic_conv2d.1} parent=43 // pred_check_branch
        %4953 = sbr.rel (%p4951) target = $region48
      $region47: #{basic_conv2d.1} parent=43 // pred_region
        %s4954 = smul.u32 32, %s22
        %p4955 = scmp.lt.s32.totalorder %s21, 1
        %s4956 = scalar_select %p4955, %s21, 1
        %p4957 = scmp.lt.s32.totalorder %s4954, 31
        %s4958 = scalar_select %p4957, %s4954, 31
        %s4959 = smul.addr %s4956, 32
        %s4960 = sadd.s32 %s4958, %s4959
        %s4961 = smul.addr %s4960, 8
        %s4962 = scalar_lea.vmem %s4, %s4961
      $region48: #{basic_conv2d.1} parent=43 // pred_fallthru
        _
    $region44: #{basic_conv2d.1} parent=5 // pred_fallthru
      _
  $region6: #{basic_conv2d.1} parent=0 // loop_footer
    %s14 = sadd.s32 1, %s10
  $region7: #{basic_conv2d.1} parent=0 // loop_footer_branch
    %9 = sbr.rel target = $region3
  $region8: #{basic_conv2d.1} parent=0 // loop_exit
    _

</llo_original>
